<compile_context>
chip_gen: v5e
topology: v5e:2x2
jax: 0.10.0
libtpu: 0.0.40
codegen_flags: <defaults>
</compile_context>

<pallas_src>
import numpy as np
import jax
import jax.numpy as jnp
from jax import lax
from jax.experimental import pallas as pl
from jax.experimental.pallas import tpu as pltpu

IN_EPS = 1e-5
LRELU_SLOPE = 0.2
KSIZE = 4   # Conv2dBlock kernel size
STRIDE = 2  # Conv2dBlock stride


# ----------------------------- fused kernel -----------------------------

def _conv_in_lrelu(act, sel_ref, bw_ref, ms_ref, mst_ref):
    """One Conv2dBlock (conv -> InstanceNorm -> LeakyReLU) for one image.

    act     : (H, W*Cin)   lane-dense channel-minor rows.
    sel_ref : (4, Ho, H)   row selection (reflection pad + stride-2, per ky).
    bw_ref  : (4, W*Cin, Wo*Cout) banded conv weights (col pad + kx + stride-2
              folded in).
    ms_ref  : (Wo*Cout, Cout)  channel-group summation matrix.
    mst_ref : (Cout, Wo*Cout)  its transpose (channel -> lane-pattern bcast).
    returns : (Ho, Wo*Cout)
    """
    ho = sel_ref.shape[1]
    wo_cout = bw_ref.shape[2]
    cout = ms_ref.shape[1]
    n_spatial = ho * (wo_cout // cout)
    inv_n = 1.0 / n_spatial

    acc = jnp.zeros((ho, wo_cout), jnp.float32)
    for ky in range(KSIZE):  # 4 "sandwich" matmuls, all K >= 16, N = Wo*Cout
        rows = jnp.dot(sel_ref[ky], act, preferred_element_type=jnp.float32)
        acc = acc + jnp.dot(rows, bw_ref[ky], preferred_element_type=jnp.float32)
    # conv bias intentionally omitted: cancelled by the non-affine InstanceNorm.

    # InstanceNorm2d (no affine), biased variance over spatial, per channel.
    colsum = jnp.sum(acc, axis=0, keepdims=True)                      # (1, Wo*Cout)
    mean = jnp.dot(colsum, ms_ref[...],
                   preferred_element_type=jnp.float32) * inv_n        # (1, Cout)
    d = acc - jnp.dot(mean, mst_ref[...], preferred_element_type=jnp.float32)
    ssq = jnp.dot(jnp.sum(d * d, axis=0, keepdims=True), ms_ref[...],
                  preferred_element_type=jnp.float32) * inv_n         # (1, Cout)
    inv_std = lax.rsqrt(ssq + IN_EPS)
    y = d * jnp.dot(inv_std, mst_ref[...], preferred_element_type=jnp.float32)

    # LeakyReLU(0.2)
    return jnp.where(y >= 0, y, LRELU_SLOPE * y)


def _make_fused_kernel(num_layers):
    def kernel(*refs):
        # refs = (x, [sel, bw, msum, msumT] * num_layers, w3, out)
        x_ref = refs[0]
        w3_ref = refs[-2]
        o_ref = refs[-1]

        act = x_ref[...]                                   # (H0, W0*Cin0)
        for layer in range(num_layers):
            sel, bw, ms, mst = refs[1 + 4 * layer: 5 + 4 * layer]
            act = _conv_in_lrelu(act, sel, bw, ms, mst)    # -> (Ho, Wo*Cout)

        # Emotion head: (ks, ks*Cfin) . (ks, ks*Cfin, E), per-row dots so no
        # sublane->lane reshape/relayout is needed.
        ks, n_emotion = w3_ref.shape[0], w3_ref.shape[2]
        out = jnp.zeros((1, n_emotion), jnp.float32)
        for ky in range(ks):
            out = out + jnp.dot(act[ky:ky + 1, :], w3_ref[ky],
                                preferred_element_type=jnp.float32)
        o_ref[...] = out
    return kernel


def _bcast_spec(arr):
    """Full-array block with a constant index map (stays resident in VMEM)."""
    if arr.ndim == 2:
        return pl.BlockSpec(arr.shape, lambda n: (0, 0))
    return pl.BlockSpec(arr.shape, lambda n: (0, 0, 0))


def discriminator_for_label_forward(x_nchw, kparams):
    """Fused Pallas forward pass. Returns (B, num_emotion)."""
    B, cin0, H0, W0 = x_nchw.shape
    # Single boundary transform: NCHW -> per-image (H, W*C) channel-minor rows.
    x = jnp.transpose(x_nchw, (0, 2, 3, 1)).reshape(B, H0, W0 * cin0)
    x = x.astype(jnp.float32)

    flat_ws = []
    for sel, bw, ms, mst in kparams["layers"]:
        flat_ws += [sel, bw, ms, mst]
    flat_ws.append(kparams["w3k"])
    n_emotion = kparams["w3k"].shape[-1]

    in_specs = [pl.BlockSpec((None, H0, W0 * cin0), lambda n: (n, 0, 0))]
    in_specs += [_bcast_spec(w) for w in flat_ws]

    out = pl.pallas_call(
        _make_fused_kernel(len(kparams["layers"])),
        out_shape=jax.ShapeDtypeStruct((B, 1, n_emotion), jnp.float32),
        grid_spec=pltpu.PrefetchScalarGridSpec(
            num_scalar_prefetch=0,
            grid=(B,),
            in_specs=in_specs,
            out_specs=pl.BlockSpec((None, 1, n_emotion), lambda n: (n, 0, 0)),
        ),
        compiler_params=pltpu.CompilerParams(
            dimension_semantics=("parallel",)),  # v7x: the 2 TCs split the batch
    )(x, *flat_ws)
    return out.reshape(B, n_emotion)


# ------------------- host-side operand construction -------------------

def _reflect(t, n):
    if t < 0:
        return -t
    if t >= n:
        return 2 * n - 2 - t
    return t


def _build_layer_operands(w_t, H, W):
    """Fold ReflectionPad2d(1) + 4x4 stride-2 conv into matmul operands."""
    w = np.asarray(w_t, dtype=np.float32)          # (Cout, Cin, 4, 4), torch OIHW
    cout, cin = w.shape[0], w.shape[1]
    ho, wo = H // STRIDE, W // STRIDE

    sel = np.zeros((KSIZE, ho, H), np.float32)
    for ky in range(KSIZE):
        for i in range(ho):
            sel[ky, i, _reflect(STRIDE * i + ky - 1, H)] = 1.0

    bw = np.zeros((KSIZE, W * cin, wo * cout), np.float32)
    for ky in range(KSIZE):
        for j in range(wo):
            for kx in range(KSIZE):
                wc = _reflect(STRIDE * j + kx - 1, W)
                bw[ky, wc * cin:(wc + 1) * cin,
                   j * cout:(j + 1) * cout] += w[:, :, ky, kx].T

    msum = np.zeros((wo * cout, cout), np.float32)
    for jw in range(wo):
        msum[jw * cout:(jw + 1) * cout, :] = np.eye(cout, dtype=np.float32)

    return (jnp.asarray(sel), jnp.asarray(bw), jnp.asarray(msum),
            jnp.asarray(np.ascontiguousarray(msum.T)))


def prepare_kernel_params(torch_params, img_size):
    layers = []
    h = img_size
    for (w_t, _b) in torch_params["blocks"]:   # bias is dead under InstanceNorm
        layers.append(_build_layer_operands(w_t, h, h))
        h //= STRIDE
    w3 = np.asarray(torch_params["w3"], np.float32)      # (E, Cfin, ks, ks)
    n_emotion, cfin, ks, _ = w3.shape
    w3k = np.transpose(w3, (2, 3, 1, 0)).reshape(ks, ks * cfin, n_emotion)
    return {"layers": layers, "w3k": jnp.asarray(w3k)}


def init_torch_params(key, in_ch, conv_dim, repeat_num, img_size, num_emotion):
    dims = [in_ch] + [conv_dim * (2 ** i) for i in range(repeat_num)]
    blocks = []
    for i in range(repeat_num):
        cin, cout = dims[i], dims[i + 1]
        key, kw, kb = jax.random.split(key, 3)
        fan_in = cin * KSIZE * KSIZE
        w_t = jax.random.normal(kw, (cout, cin, KSIZE, KSIZE), jnp.float32) / jnp.sqrt(fan_in)
        b = jax.random.normal(kb, (cout,), jnp.float32) * 0.05
        blocks.append((w_t, b))
    ks = img_size // (2 ** repeat_num)
    cfin = dims[-1]
    key, k3 = jax.random.split(key)
    w3_t = jax.random.normal(k3, (num_emotion, cfin, ks, ks), jnp.float32) / jnp.sqrt(cfin * ks * ks)
    return {"blocks": blocks, "w3": w3_t}


# ------------------------------ reference ------------------------------

def reference_forward(x_nchw, torch_params):
    """Pure-JAX (XLA conv) reference matching the PyTorch forward semantics."""
    x = x_nchw.astype(jnp.float32)
    for w_t, b in torch_params["blocks"]:
        xp = jnp.pad(x, ((0, 0), (0, 0), (1, 1), (1, 1)), mode="reflect")
        y = lax.conv_general_dilated(
            xp, w_t, window_strides=(STRIDE, STRIDE), padding="VALID",
            dimension_numbers=("NCHW", "OIHW", "NCHW"),
            precision=lax.Precision.HIGHEST,
        ) + b[None, :, None, None]
        mean = y.mean(axis=(2, 3), keepdims=True)
        var = jnp.square(y - mean).mean(axis=(2, 3), keepdims=True)
        y = (y - mean) / jnp.sqrt(var + IN_EPS)
        x = jnp.where(y >= 0, y, LRELU_SLOPE * y)
    out = lax.conv_general_dilated(
        x, torch_params["w3"], (1, 1), "VALID",
        dimension_numbers=("NCHW", "OIHW", "NCHW"),
        precision=lax.Precision.HIGHEST,
    )
    return out.reshape(out.shape[0], out.shape[1])


if __name__ == "__main__":
    # Module-consistent small hyperparameters:
    #   img_size=64, conv_dim=8, repeat_num=3, num_emotion=8 -> k_s = 64 / 2**3 = 8
    B, IMG, CONV_DIM, REPEAT, NUM_EMOTION = 2, 64, 8, 3, 8

    key = jax.random.PRNGKey(0)
    key, kx = jax.random.split(key)
    x = jax.random.normal(kx, (B, 3, IMG, IMG), jnp.float32)  # NCHW, like PyTorch

    torch_params = init_torch_params(key, 3, CONV_DIM, REPEAT, IMG, NUM_EMOTION)
    kparams = prepare_kernel_params(torch_params, IMG)

    # TODO(synk): self.conv1 ("judge" head) is computed but discarded in the
    # PyTorch forward(); it is dead code and therefore omitted here.
    out = jax.block_until_ready(discriminator_for_label_forward(x, kparams))
    assert out.shape == (B, NUM_EMOTION), out.shape

    ref = jax.block_until_ready(reference_forward(x, torch_params))
    max_err = float(jnp.max(jnp.abs(out - ref)))
    assert jnp.allclose(out, ref, atol=5e-2, rtol=5e-2), max_err

    print("KERNEL_OK")
</pallas_src>

<mosaic_0001>
module attributes {stable_mosaic.version = 11 : i64} {
  func.func @kernel(%arg0: i32, %arg1: memref<1x64x192xf32, #tpu.memory_space<vmem>>, %arg2: memref<4x32x64xf32, #tpu.memory_space<vmem>>, %arg3: memref<4x192x256xf32, #tpu.memory_space<vmem>>, %arg4: memref<256x8xf32, #tpu.memory_space<vmem>>, %arg5: memref<8x256xf32, #tpu.memory_space<vmem>>, %arg6: memref<4x16x32xf32, #tpu.memory_space<vmem>>, %arg7: memref<4x256x256xf32, #tpu.memory_space<vmem>>, %arg8: memref<256x16xf32, #tpu.memory_space<vmem>>, %arg9: memref<16x256xf32, #tpu.memory_space<vmem>>, %arg10: memref<4x8x16xf32, #tpu.memory_space<vmem>>, %arg11: memref<4x256x256xf32, #tpu.memory_space<vmem>>, %arg12: memref<256x32xf32, #tpu.memory_space<vmem>>, %arg13: memref<32x256xf32, #tpu.memory_space<vmem>>, %arg14: memref<8x256x8xf32, #tpu.memory_space<vmem>>, %arg15: memref<1x1x8xf32, #tpu.memory_space<vmem>>) attributes {dimension_semantics = [#tpu.dimension_semantics<parallel>], iteration_bounds = array<i64: 2>, scalar_prefetch = 0 : i64, scratch_operands = 0 : i64, tpu.core_type = #tpu.core_type<tc>, window_params = [{transform_indices = @transform_0, window_bounds = array<i64: 1, 64, 192>}, {pipeline_mode = #tpu.pipeline_mode<synchronous>, transform_indices = @transform_1, window_bounds = array<i64: 4, 32, 64>}, {pipeline_mode = #tpu.pipeline_mode<synchronous>, transform_indices = @transform_2, window_bounds = array<i64: 4, 192, 256>}, {pipeline_mode = #tpu.pipeline_mode<synchronous>, transform_indices = @transform_3, window_bounds = array<i64: 256, 8>}, {pipeline_mode = #tpu.pipeline_mode<synchronous>, transform_indices = @transform_4, window_bounds = array<i64: 8, 256>}, {pipeline_mode = #tpu.pipeline_mode<synchronous>, transform_indices = @transform_5, window_bounds = array<i64: 4, 16, 32>}, {pipeline_mode = #tpu.pipeline_mode<synchronous>, transform_indices = @transform_6, window_bounds = array<i64: 4, 256, 256>}, {pipeline_mode = #tpu.pipeline_mode<synchronous>, transform_indices = @transform_7, window_bounds = array<i64: 256, 16>}, {pipeline_mode = #tpu.pipeline_mode<synchronous>, transform_indices = @transform_8, window_bounds = array<i64: 16, 256>}, {pipeline_mode = #tpu.pipeline_mode<synchronous>, transform_indices = @transform_9, window_bounds = array<i64: 4, 8, 16>}, {pipeline_mode = #tpu.pipeline_mode<synchronous>, transform_indices = @transform_10, window_bounds = array<i64: 4, 256, 256>}, {pipeline_mode = #tpu.pipeline_mode<synchronous>, transform_indices = @transform_11, window_bounds = array<i64: 256, 32>}, {pipeline_mode = #tpu.pipeline_mode<synchronous>, transform_indices = @transform_12, window_bounds = array<i64: 32, 256>}, {pipeline_mode = #tpu.pipeline_mode<synchronous>, transform_indices = @transform_13, window_bounds = array<i64: 8, 256, 8>}, {transform_indices = @transform_14, window_bounds = array<i64: 1, 1, 8>}]} {
    %c0 = arith.constant 0 : index
    %c0_0 = arith.constant 0 : index
    %c0_1 = arith.constant 0 : index
    %0 = vector.load %arg1[%c0, %c0_0, %c0_1] : memref<1x64x192xf32, #tpu.memory_space<vmem>>, vector<1x64x192xf32>
    %1 = vector.shape_cast %0 : vector<1x64x192xf32> to vector<64x192xf32>
    %cst = arith.constant 0.000000e+00 : f32
    %2 = vector.broadcast %cst : f32 to vector<32x256xf32>
    %c0_2 = arith.constant 0 : index
    %c0_3 = arith.constant 0 : index
    %c0_4 = arith.constant 0 : index
    %3 = vector.load %arg2[%c0_2, %c0_3, %c0_4] : memref<4x32x64xf32, #tpu.memory_space<vmem>>, vector<1x32x64xf32>
    %4 = vector.shape_cast %3 : vector<1x32x64xf32> to vector<32x64xf32>
    %cst_5 = arith.constant dense<0.000000e+00> : vector<32x192xf32>
    %5 = tpu.matmul %4, %1, %cst_5 {dimension_numbers = #tpu.dot_dimension_numbers<[1], [0], [0], [1], [0, 0, 1, 1], [], []>} : vector<32x64xf32>, vector<64x192xf32>, vector<32x192xf32> -> vector<32x192xf32>
    %c0_6 = arith.constant 0 : index
    %c0_7 = arith.constant 0 : index
    %c0_8 = arith.constant 0 : index
    %6 = vector.load %arg3[%c0_6, %c0_7, %c0_8] : memref<4x192x256xf32, #tpu.memory_space<vmem>>, vector<1x192x256xf32>
    %7 = vector.shape_cast %6 : vector<1x192x256xf32> to vector<192x256xf32>
    %cst_9 = arith.constant dense<0.000000e+00> : vector<32x256xf32>
    %8 = tpu.matmul %5, %7, %cst_9 {dimension_numbers = #tpu.dot_dimension_numbers<[1], [0], [0], [1], [0, 0, 1, 1], [], []>} : vector<32x192xf32>, vector<192x256xf32>, vector<32x256xf32> -> vector<32x256xf32>
    %9 = arith.addf %2, %8 : vector<32x256xf32>
    %c1 = arith.constant 1 : index
    %c0_10 = arith.constant 0 : index
    %c0_11 = arith.constant 0 : index
    %10 = vector.load %arg2[%c1, %c0_10, %c0_11] : memref<4x32x64xf32, #tpu.memory_space<vmem>>, vector<1x32x64xf32>
    %11 = vector.shape_cast %10 : vector<1x32x64xf32> to vector<32x64xf32>
    %cst_12 = arith.constant dense<0.000000e+00> : vector<32x192xf32>
    %12 = tpu.matmul %11, %1, %cst_12 {dimension_numbers = #tpu.dot_dimension_numbers<[1], [0], [0], [1], [0, 0, 1, 1], [], []>} : vector<32x64xf32>, vector<64x192xf32>, vector<32x192xf32> -> vector<32x192xf32>
    %c1_13 = arith.constant 1 : index
    %c0_14 = arith.constant 0 : index
    %c0_15 = arith.constant 0 : index
    %13 = vector.load %arg3[%c1_13, %c0_14, %c0_15] : memref<4x192x256xf32, #tpu.memory_space<vmem>>, vector<1x192x256xf32>
    %14 = vector.shape_cast %13 : vector<1x192x256xf32> to vector<192x256xf32>
    %cst_16 = arith.constant dense<0.000000e+00> : vector<32x256xf32>
    %15 = tpu.matmul %12, %14, %cst_16 {dimension_numbers = #tpu.dot_dimension_numbers<[1], [0], [0], [1], [0, 0, 1, 1], [], []>} : vector<32x192xf32>, vector<192x256xf32>, vector<32x256xf32> -> vector<32x256xf32>
    %16 = arith.addf %9, %15 : vector<32x256xf32>
    %c2 = arith.constant 2 : index
    %c0_17 = arith.constant 0 : index
    %c0_18 = arith.constant 0 : index
    %17 = vector.load %arg2[%c2, %c0_17, %c0_18] : memref<4x32x64xf32, #tpu.memory_space<vmem>>, vector<1x32x64xf32>
    %18 = vector.shape_cast %17 : vector<1x32x64xf32> to vector<32x64xf32>
    %cst_19 = arith.constant dense<0.000000e+00> : vector<32x192xf32>
    %19 = tpu.matmul %18, %1, %cst_19 {dimension_numbers = #tpu.dot_dimension_numbers<[1], [0], [0], [1], [0, 0, 1, 1], [], []>} : vector<32x64xf32>, vector<64x192xf32>, vector<32x192xf32> -> vector<32x192xf32>
    %c2_20 = arith.constant 2 : index
    %c0_21 = arith.constant 0 : index
    %c0_22 = arith.constant 0 : index
    %20 = vector.load %arg3[%c2_20, %c0_21, %c0_22] : memref<4x192x256xf32, #tpu.memory_space<vmem>>, vector<1x192x256xf32>
    %21 = vector.shape_cast %20 : vector<1x192x256xf32> to vector<192x256xf32>
    %cst_23 = arith.constant dense<0.000000e+00> : vector<32x256xf32>
    %22 = tpu.matmul %19, %21, %cst_23 {dimension_numbers = #tpu.dot_dimension_numbers<[1], [0], [0], [1], [0, 0, 1, 1], [], []>} : vector<32x192xf32>, vector<192x256xf32>, vector<32x256xf32> -> vector<32x256xf32>
    %23 = arith.addf %16, %22 : vector<32x256xf32>
    %c3 = arith.constant 3 : index
    %c0_24 = arith.constant 0 : index
    %c0_25 = arith.constant 0 : index
    %24 = vector.load %arg2[%c3, %c0_24, %c0_25] : memref<4x32x64xf32, #tpu.memory_space<vmem>>, vector<1x32x64xf32>
    %25 = vector.shape_cast %24 : vector<1x32x64xf32> to vector<32x64xf32>
    %cst_26 = arith.constant dense<0.000000e+00> : vector<32x192xf32>
    %26 = tpu.matmul %25, %1, %cst_26 {dimension_numbers = #tpu.dot_dimension_numbers<[1], [0], [0], [1], [0, 0, 1, 1], [], []>} : vector<32x64xf32>, vector<64x192xf32>, vector<32x192xf32> -> vector<32x192xf32>
    %c3_27 = arith.constant 3 : index
    %c0_28 = arith.constant 0 : index
    %c0_29 = arith.constant 0 : index
    %27 = vector.load %arg3[%c3_27, %c0_28, %c0_29] : memref<4x192x256xf32, #tpu.memory_space<vmem>>, vector<1x192x256xf32>
    %28 = vector.shape_cast %27 : vector<1x192x256xf32> to vector<192x256xf32>
    %cst_30 = arith.constant dense<0.000000e+00> : vector<32x256xf32>
    %29 = tpu.matmul %26, %28, %cst_30 {dimension_numbers = #tpu.dot_dimension_numbers<[1], [0], [0], [1], [0, 0, 1, 1], [], []>} : vector<32x192xf32>, vector<192x256xf32>, vector<32x256xf32> -> vector<32x256xf32>
    %30 = arith.addf %23, %29 : vector<32x256xf32>
    %cst_31 = arith.constant dense<0.000000e+00> : vector<256xf32>
    %31 = vector.multi_reduction <add>, %30, %cst_31 [0] : vector<32x256xf32> to vector<256xf32>
    %32 = vector.shape_cast %31 : vector<256xf32> to vector<1x256xf32>
    %c0_32 = arith.constant 0 : index
    %c0_33 = arith.constant 0 : index
    %33 = vector.load %arg4[%c0_32, %c0_33] : memref<256x8xf32, #tpu.memory_space<vmem>>, vector<256x8xf32>
    %cst_34 = arith.constant dense<0.000000e+00> : vector<1x8xf32>
    %34 = tpu.matmul %32, %33, %cst_34 {dimension_numbers = #tpu.dot_dimension_numbers<[1], [0], [0], [1], [0, 0, 1, 1], [], []>} : vector<1x256xf32>, vector<256x8xf32>, vector<1x8xf32> -> vector<1x8xf32>
    %cst_35 = arith.constant 9.765625E-4 : f32
    %35 = vector.broadcast %cst_35 : f32 to vector<1x8xf32>
    %36 = arith.mulf %34, %35 : vector<1x8xf32>
    %c0_36 = arith.constant 0 : index
    %c0_37 = arith.constant 0 : index
    %37 = vector.load %arg5[%c0_36, %c0_37] : memref<8x256xf32, #tpu.memory_space<vmem>>, vector<8x256xf32>
    %cst_38 = arith.constant dense<0.000000e+00> : vector<1x256xf32>
    %38 = tpu.matmul %36, %37, %cst_38 {dimension_numbers = #tpu.dot_dimension_numbers<[1], [0], [0], [1], [0, 0, 1, 1], [], []>} : vector<1x8xf32>, vector<8x256xf32>, vector<1x256xf32> -> vector<1x256xf32>
    %39 = vector.broadcast %38 : vector<1x256xf32> to vector<32x256xf32>
    %40 = arith.subf %30, %39 : vector<32x256xf32>
    %41 = arith.mulf %40, %40 : vector<32x256xf32>
    %cst_39 = arith.constant dense<0.000000e+00> : vector<256xf32>
    %42 = vector.multi_reduction <add>, %41, %cst_39 [0] : vector<32x256xf32> to vector<256xf32>
    %43 = vector.shape_cast %42 : vector<256xf32> to vector<1x256xf32>
    %c0_40 = arith.constant 0 : index
    %c0_41 = arith.constant 0 : index
    %44 = vector.load %arg4[%c0_40, %c0_41] : memref<256x8xf32, #tpu.memory_space<vmem>>, vector<256x8xf32>
    %cst_42 = arith.constant dense<0.000000e+00> : vector<1x8xf32>
    %45 = tpu.matmul %43, %44, %cst_42 {dimension_numbers = #tpu.dot_dimension_numbers<[1], [0], [0], [1], [0, 0, 1, 1], [], []>} : vector<1x256xf32>, vector<256x8xf32>, vector<1x8xf32> -> vector<1x8xf32>
    %cst_43 = arith.constant 9.765625E-4 : f32
    %46 = vector.broadcast %cst_43 : f32 to vector<1x8xf32>
    %47 = arith.mulf %45, %46 : vector<1x8xf32>
    %cst_44 = arith.constant 9.99999974E-6 : f32
    %48 = vector.broadcast %cst_44 : f32 to vector<1x8xf32>
    %49 = arith.addf %47, %48 : vector<1x8xf32>
    %50 = math.rsqrt %49 : vector<1x8xf32>
    %c0_45 = arith.constant 0 : index
    %c0_46 = arith.constant 0 : index
    %51 = vector.load %arg5[%c0_45, %c0_46] : memref<8x256xf32, #tpu.memory_space<vmem>>, vector<8x256xf32>
    %cst_47 = arith.constant dense<0.000000e+00> : vector<1x256xf32>
    %52 = tpu.matmul %50, %51, %cst_47 {dimension_numbers = #tpu.dot_dimension_numbers<[1], [0], [0], [1], [0, 0, 1, 1], [], []>} : vector<1x8xf32>, vector<8x256xf32>, vector<1x256xf32> -> vector<1x256xf32>
    %53 = vector.broadcast %52 : vector<1x256xf32> to vector<32x256xf32>
    %54 = arith.mulf %40, %53 : vector<32x256xf32>
    %cst_48 = arith.constant 0.000000e+00 : f32
    %55 = vector.broadcast %cst_48 : f32 to vector<32x256xf32>
    %56 = arith.cmpf oge, %54, %55 : vector<32x256xf32>
    %cst_49 = arith.constant 2.000000e-01 : f32
    %57 = vector.broadcast %cst_49 : f32 to vector<32x256xf32>
    %58 = arith.mulf %57, %54 : vector<32x256xf32>
    %59 = arith.select %56, %54, %58 : vector<32x256xi1>, vector<32x256xf32>
    %cst_50 = arith.constant 0.000000e+00 : f32
    %60 = vector.broadcast %cst_50 : f32 to vector<16x256xf32>
    %c0_51 = arith.constant 0 : index
    %c0_52 = arith.constant 0 : index
    %c0_53 = arith.constant 0 : index
    %61 = vector.load %arg6[%c0_51, %c0_52, %c0_53] : memref<4x16x32xf32, #tpu.memory_space<vmem>>, vector<1x16x32xf32>
    %62 = vector.shape_cast %61 : vector<1x16x32xf32> to vector<16x32xf32>
    %cst_54 = arith.constant dense<0.000000e+00> : vector<16x256xf32>
    %63 = tpu.matmul %62, %59, %cst_54 {dimension_numbers = #tpu.dot_dimension_numbers<[1], [0], [0], [1], [0, 0, 1, 1], [], []>} : vector<16x32xf32>, vector<32x256xf32>, vector<16x256xf32> -> vector<16x256xf32>
    %c0_55 = arith.constant 0 : index
    %c0_56 = arith.constant 0 : index
    %c0_57 = arith.constant 0 : index
    %64 = vector.load %arg7[%c0_55, %c0_56, %c0_57] : memref<4x256x256xf32, #tpu.memory_space<vmem>>, vector<1x256x256xf32>
    %65 = vector.shape_cast %64 : vector<1x256x256xf32> to vector<256x256xf32>
    %cst_58 = arith.constant dense<0.000000e+00> : vector<16x256xf32>
    %66 = tpu.matmul %63, %65, %cst_58 {dimension_numbers = #tpu.dot_dimension_numbers<[1], [0], [0], [1], [0, 0, 1, 1], [], []>} : vector<16x256xf32>, vector<256x256xf32>, vector<16x256xf32> -> vector<16x256xf32>
    %67 = arith.addf %60, %66 : vector<16x256xf32>
    %c1_59 = arith.constant 1 : index
    %c0_60 = arith.constant 0 : index
    %c0_61 = arith.constant 0 : index
    %68 = vector.load %arg6[%c1_59, %c0_60, %c0_61] : memref<4x16x32xf32, #tpu.memory_space<vmem>>, vector<1x16x32xf32>
    %69 = vector.shape_cast %68 : vector<1x16x32xf32> to vector<16x32xf32>
    %cst_62 = arith.constant dense<0.000000e+00> : vector<16x256xf32>
    %70 = tpu.matmul %69, %59, %cst_62 {dimension_numbers = #tpu.dot_dimension_numbers<[1], [0], [0], [1], [0, 0, 1, 1], [], []>} : vector<16x32xf32>, vector<32x256xf32>, vector<16x256xf32> -> vector<16x256xf32>
    %c1_63 = arith.constant 1 : index
    %c0_64 = arith.constant 0 : index
    %c0_65 = arith.constant 0 : index
    %71 = vector.load %arg7[%c1_63, %c0_64, %c0_65] : memref<4x256x256xf32, #tpu.memory_space<vmem>>, vector<1x256x256xf32>
    %72 = vector.shape_cast %71 : vector<1x256x256xf32> to vector<256x256xf32>
    %cst_66 = arith.constant dense<0.000000e+00> : vector<16x256xf32>
    %73 = tpu.matmul %70, %72, %cst_66 {dimension_numbers = #tpu.dot_dimension_numbers<[1], [0], [0], [1], [0, 0, 1, 1], [], []>} : vector<16x256xf32>, vector<256x256xf32>, vector<16x256xf32> -> vector<16x256xf32>
    %74 = arith.addf %67, %73 : vector<16x256xf32>
    %c2_67 = arith.constant 2 : index
    %c0_68 = arith.constant 0 : index
    %c0_69 = arith.constant 0 : index
    %75 = vector.load %arg6[%c2_67, %c0_68, %c0_69] : memref<4x16x32xf32, #tpu.memory_space<vmem>>, vector<1x16x32xf32>
    %76 = vector.shape_cast %75 : vector<1x16x32xf32> to vector<16x32xf32>
    %cst_70 = arith.constant dense<0.000000e+00> : vector<16x256xf32>
    %77 = tpu.matmul %76, %59, %cst_70 {dimension_numbers = #tpu.dot_dimension_numbers<[1], [0], [0], [1], [0, 0, 1, 1], [], []>} : vector<16x32xf32>, vector<32x256xf32>, vector<16x256xf32> -> vector<16x256xf32>
    %c2_71 = arith.constant 2 : index
    %c0_72 = arith.constant 0 : index
    %c0_73 = arith.constant 0 : index
    %78 = vector.load %arg7[%c2_71, %c0_72, %c0_73] : memref<4x256x256xf32, #tpu.memory_space<vmem>>, vector<1x256x256xf32>
    %79 = vector.shape_cast %78 : vector<1x256x256xf32> to vector<256x256xf32>
    %cst_74 = arith.constant dense<0.000000e+00> : vector<16x256xf32>
    %80 = tpu.matmul %77, %79, %cst_74 {dimension_numbers = #tpu.dot_dimension_numbers<[1], [0], [0], [1], [0, 0, 1, 1], [], []>} : vector<16x256xf32>, vector<256x256xf32>, vector<16x256xf32> -> vector<16x256xf32>
    %81 = arith.addf %74, %80 : vector<16x256xf32>
    %c3_75 = arith.constant 3 : index
    %c0_76 = arith.constant 0 : index
    %c0_77 = arith.constant 0 : index
    %82 = vector.load %arg6[%c3_75, %c0_76, %c0_77] : memref<4x16x32xf32, #tpu.memory_space<vmem>>, vector<1x16x32xf32>
    %83 = vector.shape_cast %82 : vector<1x16x32xf32> to vector<16x32xf32>
    %cst_78 = arith.constant dense<0.000000e+00> : vector<16x256xf32>
    %84 = tpu.matmul %83, %59, %cst_78 {dimension_numbers = #tpu.dot_dimension_numbers<[1], [0], [0], [1], [0, 0, 1, 1], [], []>} : vector<16x32xf32>, vector<32x256xf32>, vector<16x256xf32> -> vector<16x256xf32>
    %c3_79 = arith.constant 3 : index
    %c0_80 = arith.constant 0 : index
    %c0_81 = arith.constant 0 : index
    %85 = vector.load %arg7[%c3_79, %c0_80, %c0_81] : memref<4x256x256xf32, #tpu.memory_space<vmem>>, vector<1x256x256xf32>
    %86 = vector.shape_cast %85 : vector<1x256x256xf32> to vector<256x256xf32>
    %cst_82 = arith.constant dense<0.000000e+00> : vector<16x256xf32>
    %87 = tpu.matmul %84, %86, %cst_82 {dimension_numbers = #tpu.dot_dimension_numbers<[1], [0], [0], [1], [0, 0, 1, 1], [], []>} : vector<16x256xf32>, vector<256x256xf32>, vector<16x256xf32> -> vector<16x256xf32>
    %88 = arith.addf %81, %87 : vector<16x256xf32>
    %cst_83 = arith.constant dense<0.000000e+00> : vector<256xf32>
    %89 = vector.multi_reduction <add>, %88, %cst_83 [0] : vector<16x256xf32> to vector<256xf32>
    %90 = vector.shape_cast %89 : vector<256xf32> to vector<1x256xf32>
    %c0_84 = arith.constant 0 : index
    %c0_85 = arith.constant 0 : index
    %91 = vector.load %arg8[%c0_84, %c0_85] : memref<256x16xf32, #tpu.memory_space<vmem>>, vector<256x16xf32>
    %cst_86 = arith.constant dense<0.000000e+00> : vector<1x16xf32>
    %92 = tpu.matmul %90, %91, %cst_86 {dimension_numbers = #tpu.dot_dimension_numbers<[1], [0], [0], [1], [0, 0, 1, 1], [], []>} : vector<1x256xf32>, vector<256x16xf32>, vector<1x16xf32> -> vector<1x16xf32>
    %cst_87 = arith.constant 3.906250e-03 : f32
    %93 = vector.broadcast %cst_87 : f32 to vector<1x16xf32>
    %94 = arith.mulf %92, %93 : vector<1x16xf32>
    %c0_88 = arith.constant 0 : index
    %c0_89 = arith.constant 0 : index
    %95 = vector.load %arg9[%c0_88, %c0_89] : memref<16x256xf32, #tpu.memory_space<vmem>>, vector<16x256xf32>
    %cst_90 = arith.constant dense<0.000000e+00> : vector<1x256xf32>
    %96 = tpu.matmul %94, %95, %cst_90 {dimension_numbers = #tpu.dot_dimension_numbers<[1], [0], [0], [1], [0, 0, 1, 1], [], []>} : vector<1x16xf32>, vector<16x256xf32>, vector<1x256xf32> -> vector<1x256xf32>
    %97 = vector.broadcast %96 : vector<1x256xf32> to vector<16x256xf32>
    %98 = arith.subf %88, %97 : vector<16x256xf32>
    %99 = arith.mulf %98, %98 : vector<16x256xf32>
    %cst_91 = arith.constant dense<0.000000e+00> : vector<256xf32>
    %100 = vector.multi_reduction <add>, %99, %cst_91 [0] : vector<16x256xf32> to vector<256xf32>
    %101 = vector.shape_cast %100 : vector<256xf32> to vector<1x256xf32>
    %c0_92 = arith.constant 0 : index
    %c0_93 = arith.constant 0 : index
    %102 = vector.load %arg8[%c0_92, %c0_93] : memref<256x16xf32, #tpu.memory_space<vmem>>, vector<256x16xf32>
    %cst_94 = arith.constant dense<0.000000e+00> : vector<1x16xf32>
    %103 = tpu.matmul %101, %102, %cst_94 {dimension_numbers = #tpu.dot_dimension_numbers<[1], [0], [0], [1], [0, 0, 1, 1], [], []>} : vector<1x256xf32>, vector<256x16xf32>, vector<1x16xf32> -> vector<1x16xf32>
    %cst_95 = arith.constant 3.906250e-03 : f32
    %104 = vector.broadcast %cst_95 : f32 to vector<1x16xf32>
    %105 = arith.mulf %103, %104 : vector<1x16xf32>
    %cst_96 = arith.constant 9.99999974E-6 : f32
    %106 = vector.broadcast %cst_96 : f32 to vector<1x16xf32>
    %107 = arith.addf %105, %106 : vector<1x16xf32>
    %108 = math.rsqrt %107 : vector<1x16xf32>
    %c0_97 = arith.constant 0 : index
    %c0_98 = arith.constant 0 : index
    %109 = vector.load %arg9[%c0_97, %c0_98] : memref<16x256xf32, #tpu.memory_space<vmem>>, vector<16x256xf32>
    %cst_99 = arith.constant dense<0.000000e+00> : vector<1x256xf32>
    %110 = tpu.matmul %108, %109, %cst_99 {dimension_numbers = #tpu.dot_dimension_numbers<[1], [0], [0], [1], [0, 0, 1, 1], [], []>} : vector<1x16xf32>, vector<16x256xf32>, vector<1x256xf32> -> vector<1x256xf32>
    %111 = vector.broadcast %110 : vector<1x256xf32> to vector<16x256xf32>
    %112 = arith.mulf %98, %111 : vector<16x256xf32>
    %cst_100 = arith.constant 0.000000e+00 : f32
    %113 = vector.broadcast %cst_100 : f32 to vector<16x256xf32>
    %114 = arith.cmpf oge, %112, %113 : vector<16x256xf32>
    %cst_101 = arith.constant 2.000000e-01 : f32
    %115 = vector.broadcast %cst_101 : f32 to vector<16x256xf32>
    %116 = arith.mulf %115, %112 : vector<16x256xf32>
    %117 = arith.select %114, %112, %116 : vector<16x256xi1>, vector<16x256xf32>
    %cst_102 = arith.constant 0.000000e+00 : f32
    %118 = vector.broadcast %cst_102 : f32 to vector<8x256xf32>
    %c0_103 = arith.constant 0 : index
    %c0_104 = arith.constant 0 : index
    %c0_105 = arith.constant 0 : index
    %119 = vector.load %arg10[%c0_103, %c0_104, %c0_105] : memref<4x8x16xf32, #tpu.memory_space<vmem>>, vector<1x8x16xf32>
    %120 = vector.shape_cast %119 : vector<1x8x16xf32> to vector<8x16xf32>
    %cst_106 = arith.constant dense<0.000000e+00> : vector<8x256xf32>
    %121 = tpu.matmul %120, %117, %cst_106 {dimension_numbers = #tpu.dot_dimension_numbers<[1], [0], [0], [1], [0, 0, 1, 1], [], []>} : vector<8x16xf32>, vector<16x256xf32>, vector<8x256xf32> -> vector<8x256xf32>
    %c0_107 = arith.constant 0 : index
    %c0_108 = arith.constant 0 : index
    %c0_109 = arith.constant 0 : index
    %122 = vector.load %arg11[%c0_107, %c0_108, %c0_109] : memref<4x256x256xf32, #tpu.memory_space<vmem>>, vector<1x256x256xf32>
    %123 = vector.shape_cast %122 : vector<1x256x256xf32> to vector<256x256xf32>
    %cst_110 = arith.constant dense<0.000000e+00> : vector<8x256xf32>
    %124 = tpu.matmul %121, %123, %cst_110 {dimension_numbers = #tpu.dot_dimension_numbers<[1], [0], [0], [1], [0, 0, 1, 1], [], []>} : vector<8x256xf32>, vector<256x256xf32>, vector<8x256xf32> -> vector<8x256xf32>
    %125 = arith.addf %118, %124 : vector<8x256xf32>
    %c1_111 = arith.constant 1 : index
    %c0_112 = arith.constant 0 : index
    %c0_113 = arith.constant 0 : index
    %126 = vector.load %arg10[%c1_111, %c0_112, %c0_113] : memref<4x8x16xf32, #tpu.memory_space<vmem>>, vector<1x8x16xf32>
    %127 = vector.shape_cast %126 : vector<1x8x16xf32> to vector<8x16xf32>
    %cst_114 = arith.constant dense<0.000000e+00> : vector<8x256xf32>
    %128 = tpu.matmul %127, %117, %cst_114 {dimension_numbers = #tpu.dot_dimension_numbers<[1], [0], [0], [1], [0, 0, 1, 1], [], []>} : vector<8x16xf32>, vector<16x256xf32>, vector<8x256xf32> -> vector<8x256xf32>
    %c1_115 = arith.constant 1 : index
    %c0_116 = arith.constant 0 : index
    %c0_117 = arith.constant 0 : index
    %129 = vector.load %arg11[%c1_115, %c0_116, %c0_117] : memref<4x256x256xf32, #tpu.memory_space<vmem>>, vector<1x256x256xf32>
    %130 = vector.shape_cast %129 : vector<1x256x256xf32> to vector<256x256xf32>
    %cst_118 = arith.constant dense<0.000000e+00> : vector<8x256xf32>
    %131 = tpu.matmul %128, %130, %cst_118 {dimension_numbers = #tpu.dot_dimension_numbers<[1], [0], [0], [1], [0, 0, 1, 1], [], []>} : vector<8x256xf32>, vector<256x256xf32>, vector<8x256xf32> -> vector<8x256xf32>
    %132 = arith.addf %125, %131 : vector<8x256xf32>
    %c2_119 = arith.constant 2 : index
    %c0_120 = arith.constant 0 : index
    %c0_121 = arith.constant 0 : index
    %133 = vector.load %arg10[%c2_119, %c0_120, %c0_121] : memref<4x8x16xf32, #tpu.memory_space<vmem>>, vector<1x8x16xf32>
    %134 = vector.shape_cast %133 : vector<1x8x16xf32> to vector<8x16xf32>
    %cst_122 = arith.constant dense<0.000000e+00> : vector<8x256xf32>
    %135 = tpu.matmul %134, %117, %cst_122 {dimension_numbers = #tpu.dot_dimension_numbers<[1], [0], [0], [1], [0, 0, 1, 1], [], []>} : vector<8x16xf32>, vector<16x256xf32>, vector<8x256xf32> -> vector<8x256xf32>
    %c2_123 = arith.constant 2 : index
    %c0_124 = arith.constant 0 : index
    %c0_125 = arith.constant 0 : index
    %136 = vector.load %arg11[%c2_123, %c0_124, %c0_125] : memref<4x256x256xf32, #tpu.memory_space<vmem>>, vector<1x256x256xf32>
    %137 = vector.shape_cast %136 : vector<1x256x256xf32> to vector<256x256xf32>
    %cst_126 = arith.constant dense<0.000000e+00> : vector<8x256xf32>
    %138 = tpu.matmul %135, %137, %cst_126 {dimension_numbers = #tpu.dot_dimension_numbers<[1], [0], [0], [1], [0, 0, 1, 1], [], []>} : vector<8x256xf32>, vector<256x256xf32>, vector<8x256xf32> -> vector<8x256xf32>
    %139 = arith.addf %132, %138 : vector<8x256xf32>
    %c3_127 = arith.constant 3 : index
    %c0_128 = arith.constant 0 : index
    %c0_129 = arith.constant 0 : index
    %140 = vector.load %arg10[%c3_127, %c0_128, %c0_129] : memref<4x8x16xf32, #tpu.memory_space<vmem>>, vector<1x8x16xf32>
    %141 = vector.shape_cast %140 : vector<1x8x16xf32> to vector<8x16xf32>
    %cst_130 = arith.constant dense<0.000000e+00> : vector<8x256xf32>
    %142 = tpu.matmul %141, %117, %cst_130 {dimension_numbers = #tpu.dot_dimension_numbers<[1], [0], [0], [1], [0, 0, 1, 1], [], []>} : vector<8x16xf32>, vector<16x256xf32>, vector<8x256xf32> -> vector<8x256xf32>
    %c3_131 = arith.constant 3 : index
    %c0_132 = arith.constant 0 : index
    %c0_133 = arith.constant 0 : index
    %143 = vector.load %arg11[%c3_131, %c0_132, %c0_133] : memref<4x256x256xf32, #tpu.memory_space<vmem>>, vector<1x256x256xf32>
    %144 = vector.shape_cast %143 : vector<1x256x256xf32> to vector<256x256xf32>
    %cst_134 = arith.constant dense<0.000000e+00> : vector<8x256xf32>
    %145 = tpu.matmul %142, %144, %cst_134 {dimension_numbers = #tpu.dot_dimension_numbers<[1], [0], [0], [1], [0, 0, 1, 1], [], []>} : vector<8x256xf32>, vector<256x256xf32>, vector<8x256xf32> -> vector<8x256xf32>
    %146 = arith.addf %139, %145 : vector<8x256xf32>
    %cst_135 = arith.constant dense<0.000000e+00> : vector<256xf32>
    %147 = vector.multi_reduction <add>, %146, %cst_135 [0] : vector<8x256xf32> to vector<256xf32>
    %148 = vector.shape_cast %147 : vector<256xf32> to vector<1x256xf32>
    %c0_136 = arith.constant 0 : index
    %c0_137 = arith.constant 0 : index
    %149 = vector.load %arg12[%c0_136, %c0_137] : memref<256x32xf32, #tpu.memory_space<vmem>>, vector<256x32xf32>
    %cst_138 = arith.constant dense<0.000000e+00> : vector<1x32xf32>
    %150 = tpu.matmul %148, %149, %cst_138 {dimension_numbers = #tpu.dot_dimension_numbers<[1], [0], [0], [1], [0, 0, 1, 1], [], []>} : vector<1x256xf32>, vector<256x32xf32>, vector<1x32xf32> -> vector<1x32xf32>
    %cst_139 = arith.constant 1.562500e-02 : f32
    %151 = vector.broadcast %cst_139 : f32 to vector<1x32xf32>
    %152 = arith.mulf %150, %151 : vector<1x32xf32>
    %c0_140 = arith.constant 0 : index
    %c0_141 = arith.constant 0 : index
    %153 = vector.load %arg13[%c0_140, %c0_141] : memref<32x256xf32, #tpu.memory_space<vmem>>, vector<32x256xf32>
    %cst_142 = arith.constant dense<0.000000e+00> : vector<1x256xf32>
    %154 = tpu.matmul %152, %153, %cst_142 {dimension_numbers = #tpu.dot_dimension_numbers<[1], [0], [0], [1], [0, 0, 1, 1], [], []>} : vector<1x32xf32>, vector<32x256xf32>, vector<1x256xf32> -> vector<1x256xf32>
    %155 = vector.broadcast %154 : vector<1x256xf32> to vector<8x256xf32>
    %156 = arith.subf %146, %155 : vector<8x256xf32>
    %157 = arith.mulf %156, %156 : vector<8x256xf32>
    %cst_143 = arith.constant dense<0.000000e+00> : vector<256xf32>
    %158 = vector.multi_reduction <add>, %157, %cst_143 [0] : vector<8x256xf32> to vector<256xf32>
    %159 = vector.shape_cast %158 : vector<256xf32> to vector<1x256xf32>
    %c0_144 = arith.constant 0 : index
    %c0_145 = arith.constant 0 : index
    %160 = vector.load %arg12[%c0_144, %c0_145] : memref<256x32xf32, #tpu.memory_space<vmem>>, vector<256x32xf32>
    %cst_146 = arith.constant dense<0.000000e+00> : vector<1x32xf32>
    %161 = tpu.matmul %159, %160, %cst_146 {dimension_numbers = #tpu.dot_dimension_numbers<[1], [0], [0], [1], [0, 0, 1, 1], [], []>} : vector<1x256xf32>, vector<256x32xf32>, vector<1x32xf32> -> vector<1x32xf32>
    %cst_147 = arith.constant 1.562500e-02 : f32
    %162 = vector.broadcast %cst_147 : f32 to vector<1x32xf32>
    %163 = arith.mulf %161, %162 : vector<1x32xf32>
    %cst_148 = arith.constant 9.99999974E-6 : f32
    %164 = vector.broadcast %cst_148 : f32 to vector<1x32xf32>
    %165 = arith.addf %163, %164 : vector<1x32xf32>
    %166 = math.rsqrt %165 : vector<1x32xf32>
    %c0_149 = arith.constant 0 : index
    %c0_150 = arith.constant 0 : index
    %167 = vector.load %arg13[%c0_149, %c0_150] : memref<32x256xf32, #tpu.memory_space<vmem>>, vector<32x256xf32>
    %cst_151 = arith.constant dense<0.000000e+00> : vector<1x256xf32>
    %168 = tpu.matmul %166, %167, %cst_151 {dimension_numbers = #tpu.dot_dimension_numbers<[1], [0], [0], [1], [0, 0, 1, 1], [], []>} : vector<1x32xf32>, vector<32x256xf32>, vector<1x256xf32> -> vector<1x256xf32>
    %169 = vector.broadcast %168 : vector<1x256xf32> to vector<8x256xf32>
    %170 = arith.mulf %156, %169 : vector<8x256xf32>
    %cst_152 = arith.constant 0.000000e+00 : f32
    %171 = vector.broadcast %cst_152 : f32 to vector<8x256xf32>
    %172 = arith.cmpf oge, %170, %171 : vector<8x256xf32>
    %cst_153 = arith.constant 2.000000e-01 : f32
    %173 = vector.broadcast %cst_153 : f32 to vector<8x256xf32>
    %174 = arith.mulf %173, %170 : vector<8x256xf32>
    %175 = arith.select %172, %170, %174 : vector<8x256xi1>, vector<8x256xf32>
    %cst_154 = arith.constant 0.000000e+00 : f32
    %176 = vector.broadcast %cst_154 : f32 to vector<1x8xf32>
    %177 = vector.extract_strided_slice %175 {offsets = [0, 0], sizes = [1, 256], strides = [1, 1]} : vector<8x256xf32> to vector<1x256xf32>
    %c0_155 = arith.constant 0 : index
    %c0_156 = arith.constant 0 : index
    %c0_157 = arith.constant 0 : index
    %178 = vector.load %arg14[%c0_155, %c0_156, %c0_157] : memref<8x256x8xf32, #tpu.memory_space<vmem>>, vector<1x256x8xf32>
    %179 = vector.shape_cast %178 : vector<1x256x8xf32> to vector<256x8xf32>
    %cst_158 = arith.constant dense<0.000000e+00> : vector<1x8xf32>
    %180 = tpu.matmul %177, %179, %cst_158 {dimension_numbers = #tpu.dot_dimension_numbers<[1], [0], [0], [1], [0, 0, 1, 1], [], []>} : vector<1x256xf32>, vector<256x8xf32>, vector<1x8xf32> -> vector<1x8xf32>
    %181 = arith.addf %176, %180 : vector<1x8xf32>
    %182 = vector.extract_strided_slice %175 {offsets = [1, 0], sizes = [1, 256], strides = [1, 1]} : vector<8x256xf32> to vector<1x256xf32>
    %c1_159 = arith.constant 1 : index
    %c0_160 = arith.constant 0 : index
    %c0_161 = arith.constant 0 : index
    %183 = vector.load %arg14[%c1_159, %c0_160, %c0_161] : memref<8x256x8xf32, #tpu.memory_space<vmem>>, vector<1x256x8xf32>
    %184 = vector.shape_cast %183 : vector<1x256x8xf32> to vector<256x8xf32>
    %cst_162 = arith.constant dense<0.000000e+00> : vector<1x8xf32>
    %185 = tpu.matmul %182, %184, %cst_162 {dimension_numbers = #tpu.dot_dimension_numbers<[1], [0], [0], [1], [0, 0, 1, 1], [], []>} : vector<1x256xf32>, vector<256x8xf32>, vector<1x8xf32> -> vector<1x8xf32>
    %186 = arith.addf %181, %185 : vector<1x8xf32>
    %187 = vector.extract_strided_slice %175 {offsets = [2, 0], sizes = [1, 256], strides = [1, 1]} : vector<8x256xf32> to vector<1x256xf32>
    %c2_163 = arith.constant 2 : index
    %c0_164 = arith.constant 0 : index
    %c0_165 = arith.constant 0 : index
    %188 = vector.load %arg14[%c2_163, %c0_164, %c0_165] : memref<8x256x8xf32, #tpu.memory_space<vmem>>, vector<1x256x8xf32>
    %189 = vector.shape_cast %188 : vector<1x256x8xf32> to vector<256x8xf32>
    %cst_166 = arith.constant dense<0.000000e+00> : vector<1x8xf32>
    %190 = tpu.matmul %187, %189, %cst_166 {dimension_numbers = #tpu.dot_dimension_numbers<[1], [0], [0], [1], [0, 0, 1, 1], [], []>} : vector<1x256xf32>, vector<256x8xf32>, vector<1x8xf32> -> vector<1x8xf32>
    %191 = arith.addf %186, %190 : vector<1x8xf32>
    %192 = vector.extract_strided_slice %175 {offsets = [3, 0], sizes = [1, 256], strides = [1, 1]} : vector<8x256xf32> to vector<1x256xf32>
    %c3_167 = arith.constant 3 : index
    %c0_168 = arith.constant 0 : index
    %c0_169 = arith.constant 0 : index
    %193 = vector.load %arg14[%c3_167, %c0_168, %c0_169] : memref<8x256x8xf32, #tpu.memory_space<vmem>>, vector<1x256x8xf32>
    %194 = vector.shape_cast %193 : vector<1x256x8xf32> to vector<256x8xf32>
    %cst_170 = arith.constant dense<0.000000e+00> : vector<1x8xf32>
    %195 = tpu.matmul %192, %194, %cst_170 {dimension_numbers = #tpu.dot_dimension_numbers<[1], [0], [0], [1], [0, 0, 1, 1], [], []>} : vector<1x256xf32>, vector<256x8xf32>, vector<1x8xf32> -> vector<1x8xf32>
    %196 = arith.addf %191, %195 : vector<1x8xf32>
    %197 = vector.extract_strided_slice %175 {offsets = [4, 0], sizes = [1, 256], strides = [1, 1]} : vector<8x256xf32> to vector<1x256xf32>
    %c4 = arith.constant 4 : index
    %c0_171 = arith.constant 0 : index
    %c0_172 = arith.constant 0 : index
    %198 = vector.load %arg14[%c4, %c0_171, %c0_172] : memref<8x256x8xf32, #tpu.memory_space<vmem>>, vector<1x256x8xf32>
    %199 = vector.shape_cast %198 : vector<1x256x8xf32> to vector<256x8xf32>
    %cst_173 = arith.constant dense<0.000000e+00> : vector<1x8xf32>
    %200 = tpu.matmul %197, %199, %cst_173 {dimension_numbers = #tpu.dot_dimension_numbers<[1], [0], [0], [1], [0, 0, 1, 1], [], []>} : vector<1x256xf32>, vector<256x8xf32>, vector<1x8xf32> -> vector<1x8xf32>
    %201 = arith.addf %196, %200 : vector<1x8xf32>
    %202 = vector.extract_strided_slice %175 {offsets = [5, 0], sizes = [1, 256], strides = [1, 1]} : vector<8x256xf32> to vector<1x256xf32>
    %c5 = arith.constant 5 : index
    %c0_174 = arith.constant 0 : index
    %c0_175 = arith.constant 0 : index
    %203 = vector.load %arg14[%c5, %c0_174, %c0_175] : memref<8x256x8xf32, #tpu.memory_space<vmem>>, vector<1x256x8xf32>
    %204 = vector.shape_cast %203 : vector<1x256x8xf32> to vector<256x8xf32>
    %cst_176 = arith.constant dense<0.000000e+00> : vector<1x8xf32>
    %205 = tpu.matmul %202, %204, %cst_176 {dimension_numbers = #tpu.dot_dimension_numbers<[1], [0], [0], [1], [0, 0, 1, 1], [], []>} : vector<1x256xf32>, vector<256x8xf32>, vector<1x8xf32> -> vector<1x8xf32>
    %206 = arith.addf %201, %205 : vector<1x8xf32>
    %207 = vector.extract_strided_slice %175 {offsets = [6, 0], sizes = [1, 256], strides = [1, 1]} : vector<8x256xf32> to vector<1x256xf32>
    %c6 = arith.constant 6 : index
    %c0_177 = arith.constant 0 : index
    %c0_178 = arith.constant 0 : index
    %208 = vector.load %arg14[%c6, %c0_177, %c0_178] : memref<8x256x8xf32, #tpu.memory_space<vmem>>, vector<1x256x8xf32>
    %209 = vector.shape_cast %208 : vector<1x256x8xf32> to vector<256x8xf32>
    %cst_179 = arith.constant dense<0.000000e+00> : vector<1x8xf32>
    %210 = tpu.matmul %207, %209, %cst_179 {dimension_numbers = #tpu.dot_dimension_numbers<[1], [0], [0], [1], [0, 0, 1, 1], [], []>} : vector<1x256xf32>, vector<256x8xf32>, vector<1x8xf32> -> vector<1x8xf32>
    %211 = arith.addf %206, %210 : vector<1x8xf32>
    %212 = vector.extract_strided_slice %175 {offsets = [7, 0], sizes = [1, 256], strides = [1, 1]} : vector<8x256xf32> to vector<1x256xf32>
    %c7 = arith.constant 7 : index
    %c0_180 = arith.constant 0 : index
    %c0_181 = arith.constant 0 : index
    %213 = vector.load %arg14[%c7, %c0_180, %c0_181] : memref<8x256x8xf32, #tpu.memory_space<vmem>>, vector<1x256x8xf32>
    %214 = vector.shape_cast %213 : vector<1x256x8xf32> to vector<256x8xf32>
    %cst_182 = arith.constant dense<0.000000e+00> : vector<1x8xf32>
    %215 = tpu.matmul %212, %214, %cst_182 {dimension_numbers = #tpu.dot_dimension_numbers<[1], [0], [0], [1], [0, 0, 1, 1], [], []>} : vector<1x256xf32>, vector<256x8xf32>, vector<1x8xf32> -> vector<1x8xf32>
    %216 = arith.addf %211, %215 : vector<1x8xf32>
    %c0_183 = arith.constant 0 : index
    %c0_184 = arith.constant 0 : index
    %c0_185 = arith.constant 0 : index
    %217 = vector.load %arg15[%c0_183, %c0_184, %c0_185] : memref<1x1x8xf32, #tpu.memory_space<vmem>>, vector<1x1x8xf32>
    %218 = vector.shape_cast %217 : vector<1x1x8xf32> to vector<1x8xf32>
    %219 = vector.shape_cast %216 : vector<1x8xf32> to vector<1x1x8xf32>
    tpu.vector_store %arg15[%c0_183, %c0_184, %c0_185], %219 {strides = array<i32>} : memref<1x1x8xf32, #tpu.memory_space<vmem>>, vector<1x1x8xf32>,
    return
  }
  func.func @transform_0(%arg0: i32) -> (i32, i32, i32) {
    %c0_i32 = arith.constant 0 : i32
    %c0_i32_0 = arith.constant 0 : i32
    %c0_i32_1 = arith.constant 0 : i32
    return %arg0, %c0_i32, %c0_i32_0 : i32, i32, i32
  }
  func.func @transform_1(%arg0: i32) -> (i32, i32, i32) {
    %c0_i32 = arith.constant 0 : i32
    %c0_i32_0 = arith.constant 0 : i32
    %c0_i32_1 = arith.constant 0 : i32
    %c0_i32_2 = arith.constant 0 : i32
    return %c0_i32, %c0_i32_0, %c0_i32_1 : i32, i32, i32
  }
  func.func @transform_2(%arg0: i32) -> (i32, i32, i32) {
    %c0_i32 = arith.constant 0 : i32
    %c0_i32_0 = arith.constant 0 : i32
    %c0_i32_1 = arith.constant 0 : i32
    %c0_i32_2 = arith.constant 0 : i32
    return %c0_i32, %c0_i32_0, %c0_i32_1 : i32, i32, i32
  }
  func.func @transform_3(%arg0: i32) -> (i32, i32) {
    %c0_i32 = arith.constant 0 : i32
    %c0_i32_0 = arith.constant 0 : i32
    %c0_i32_1 = arith.constant 0 : i32
    return %c0_i32, %c0_i32_0 : i32, i32
  }
  func.func @transform_4(%arg0: i32) -> (i32, i32) {
    %c0_i32 = arith.constant 0 : i32
    %c0_i32_0 = arith.constant 0 : i32
    %c0_i32_1 = arith.constant 0 : i32
    return %c0_i32, %c0_i32_0 : i32, i32
  }
  func.func @transform_5(%arg0: i32) -> (i32, i32, i32) {
    %c0_i32 = arith.constant 0 : i32
    %c0_i32_0 = arith.constant 0 : i32
    %c0_i32_1 = arith.constant 0 : i32
    %c0_i32_2 = arith.constant 0 : i32
    return %c0_i32, %c0_i32_0, %c0_i32_1 : i32, i32, i32
  }
  func.func @transform_6(%arg0: i32) -> (i32, i32, i32) {
    %c0_i32 = arith.constant 0 : i32
    %c0_i32_0 = arith.constant 0 : i32
    %c0_i32_1 = arith.constant 0 : i32
    %c0_i32_2 = arith.constant 0 : i32
    return %c0_i32, %c0_i32_0, %c0_i32_1 : i32, i32, i32
  }
  func.func @transform_7(%arg0: i32) -> (i32, i32) {
    %c0_i32 = arith.constant 0 : i32
    %c0_i32_0 = arith.constant 0 : i32
    %c0_i32_1 = arith.constant 0 : i32
    return %c0_i32, %c0_i32_0 : i32, i32
  }
  func.func @transform_8(%arg0: i32) -> (i32, i32) {
    %c0_i32 = arith.constant 0 : i32
    %c0_i32_0 = arith.constant 0 : i32
    %c0_i32_1 = arith.constant 0 : i32
    return %c0_i32, %c0_i32_0 : i32, i32
  }
  func.func @transform_9(%arg0: i32) -> (i32, i32, i32) {
    %c0_i32 = arith.constant 0 : i32
    %c0_i32_0 = arith.constant 0 : i32
    %c0_i32_1 = arith.constant 0 : i32
    %c0_i32_2 = arith.constant 0 : i32
    return %c0_i32, %c0_i32_0, %c0_i32_1 : i32, i32, i32
  }
  func.func @transform_10(%arg0: i32) -> (i32, i32, i32) {
    %c0_i32 = arith.constant 0 : i32
    %c0_i32_0 = arith.constant 0 : i32
    %c0_i32_1 = arith.constant 0 : i32
    %c0_i32_2 = arith.constant 0 : i32
    return %c0_i32, %c0_i32_0, %c0_i32_1 : i32, i32, i32
  }
  func.func @transform_11(%arg0: i32) -> (i32, i32) {
    %c0_i32 = arith.constant 0 : i32
    %c0_i32_0 = arith.constant 0 : i32
    %c0_i32_1 = arith.constant 0 : i32
    return %c0_i32, %c0_i32_0 : i32, i32
  }
  func.func @transform_12(%arg0: i32) -> (i32, i32) {
    %c0_i32 = arith.constant 0 : i32
    %c0_i32_0 = arith.constant 0 : i32
    %c0_i32_1 = arith.constant 0 : i32
    return %c0_i32, %c0_i32_0 : i32, i32
  }
  func.func @transform_13(%arg0: i32) -> (i32, i32, i32) {
    %c0_i32 = arith.constant 0 : i32
    %c0_i32_0 = arith.constant 0 : i32
    %c0_i32_1 = arith.constant 0 : i32
    %c0_i32_2 = arith.constant 0 : i32
    return %c0_i32, %c0_i32_0, %c0_i32_1 : i32, i32, i32
  }
  func.func @transform_14(%arg0: i32) -> (i32, i32, i32) {
    %c0_i32 = arith.constant 0 : i32
    %c0_i32_0 = arith.constant 0 : i32
    %c0_i32_1 = arith.constant 0 : i32
    return %arg0, %c0_i32, %c0_i32_0 : i32, i32, i32
  }
}

</mosaic_0001>

<llo_original>
// kernel: tpu_custom_call.1
$region0: #{tpu_custom_call.1}
  #allocation0 [shape = 'u32[]', space=smem, size = 0x4, offset = 0x4, fixed_abs, tag = 'smem constant byte address 0x4 - core index']
  #allocation1 [shape = 'u32[72,128]{1,0:T(1,128)}', space=vmem, size = 0x9000, scoped, tag = 'internal scratch']
  %s0 = inlined_call_operand.vmem [shape: f32[2,64,192], index: 0, kind: input, shape index: {}]
  %s1 = inlined_call_operand.vmem [shape: f32[4,32,64], index: 1, kind: input, shape index: {}]
  %s2 = inlined_call_operand.hbm [shape: f32[4,192,256], index: 2, kind: input, shape index: {}]
  %s3 = inlined_call_operand.vmem [shape: f32[256,8], index: 3, kind: input, shape index: {}]
  %s4 = inlined_call_operand.vmem [shape: f32[8,256], index: 4, kind: input, shape index: {}]
  %s5 = inlined_call_operand.vmem [shape: f32[4,16,32], index: 5, kind: input, shape index: {}]
  %s6 = inlined_call_operand.vmem [shape: f32[4,256,256], index: 6, kind: input, shape index: {}]
  %s7 = inlined_call_operand.vmem [shape: f32[256,16], index: 7, kind: input, shape index: {}]
  %s8 = inlined_call_operand.vmem [shape: f32[16,256], index: 8, kind: input, shape index: {}]
  %s9 = inlined_call_operand.vmem [shape: f32[4,8,16], index: 9, kind: input, shape index: {}]
  %s10 = inlined_call_operand.hbm [shape: f32[4,256,256], index: 10, kind: input, shape index: {}]
  %s11 = inlined_call_operand.vmem [shape: f32[256,32], index: 11, kind: input, shape index: {}]
  %s12 = inlined_call_operand.vmem [shape: f32[32,256], index: 12, kind: input, shape index: {}]
  %s13 = inlined_call_operand.vmem [shape: f32[8,256,8], index: 13, kind: input, shape index: {}]
  %s14 = inlined_call_operand.hbm [shape: f32[2,1,8], index: 14, kind: output, shape index: {}]
  %s15 = sld [smem:[#allocation0]]
  $region97: #{tpu_custom_call.1} parent=0
    _
  %s17 = ssub.s32 1, %s15
  %s18 = scalar_select 0, %s17, %s15
  $region1: #{tpu_custom_call.1} parent=0
    #allocation2 [shape = 'u8[786432]{0}', space=vmem, size = 0xc0000, scoped, tag = 'input window, operand 2, single buffered']
    #allocation3 [shape = 's32[2]{0}', space=sflag, size = 0x8, scoped, tag = 'scoped memory for tpu_custom_call.1']
    #allocation4 [shape = 's32[2]{0}', space=sflag, size = 0x8, scoped, tag = 'scoped memory for tpu_custom_call.1']
    #allocation5 [shape = 'u8[1048576]{0}', space=vmem, size = 0x100000, scoped, tag = 'input window, operand 10, single buffered']
    #allocation6 [shape = 's32[1]{0}', space=sflag, size = 0x4, scoped, tag = 'scoped memory for tpu_custom_call.1']
    #allocation7 [shape = 'u8[1024]{0}', space=vmem, size = 0x400, scoped, tag = 'output window, operand 0']
    %19 = vsyncpa [#allocation3], 0
    %20 = vsyncpa [#allocation6], 0
    %21 = vsyncpa [#allocation4], 0
    %s22 = scalar_lea.sflag [#allocation4], 1
    %23 = vsyncpa %s22, 0
    loop: start=0, step=1, limit=4
    $region2: #{tpu_custom_call.1} parent=1 // loop_pre_header
      _
    $region3: #{tpu_custom_call.1} parent=1 // loop_header
      %s25 = sphi 0, %s29
      %p26 = scmp.ge.s32.totalorder %s25, 4
      %s35 = sphi 0, %s37
      %s38 = sphi 0, %s35
      %s39 = sphi 0, %s38
      %s55 = sphi 0, %s39
      %s59 = sphi 0, %s59
      %s61 = sphi 0, %s59
      %s62 = sphi 0, %s61
      %s76 = sphi 0, %s62
      %s80 = sphi 0, %s80
      %s82 = sphi 0, %s80
      %s83 = sphi 0, %s82
      %s97 = sphi 0, %s83
      %s101 = sphi 0, %s101
      %s103 = sphi 0, %s101
      %s104 = sphi 0, %s103
      %s118 = sphi 0, %s104
      %s122 = sphi 0, %s122
      %s124 = sphi 0, %s122
      %s125 = sphi 0, %s124
      %s139 = sphi 0, %s125
      %s143 = sphi 0, %s143
      %s145 = sphi 0, %s143
      %s146 = sphi 0, %s145
      %s160 = sphi 0, %s146
      %s164 = sphi 0, %s164
      %s166 = sphi 0, %s164
      %s167 = sphi 0, %s166
      %s181 = sphi 0, %s167
      %s185 = sphi 0, %s185
      %s187 = sphi 0, %s185
      %s188 = sphi 0, %s187
      %s202 = sphi 0, %s188
      %s206 = sphi 0, %s206
      %s208 = sphi 0, %s206
      %s209 = sphi 0, %s208
      %s223 = sphi 0, %s209
      %s227 = sphi 0, %s227
      %s229 = sphi 0, %s227
      %s230 = sphi 0, %s229
      %s244 = sphi 0, %s230
      %s248 = sphi 0, %s248
      %s250 = sphi 0, %s248
      %s251 = sphi 0, %s250
      %s265 = sphi 0, %s251
      %s269 = sphi 0, %s269
      %s271 = sphi 0, %s269
      %s272 = sphi 0, %s271
      %s286 = sphi 0, %s272
      %s290 = sphi 0, %s290
      %s292 = sphi 0, %s290
      %s293 = sphi 0, %s292
      %s307 = sphi 0, %s293
      %s311 = sphi 0, %s311
      %s313 = sphi 0, %s311
      %s314 = sphi 0, %s313
      %s328 = sphi 0, %s314
      %s334 = sphi 0, %s336
      %s337 = sphi 0, %s334
      %s338 = sphi 0, %s337
      %s354 = sphi 0, %s338
    $region4: #{tpu_custom_call.1} parent=1 // loop_header_branch
      %28 = sbr.rel (%p26) target = $region8
    $region5: #{tpu_custom_call.1} parent=1 // loop_body
      %s30 = ssub.s32 %s25, 1
      %s31 = ssub.s32 %s25, 2
      %s32 = sadd.s32 %s25, 1
      %s33 = ssub.s32 %s25, %s32
      %p34 = scmp.eq.s32.totalorder %s33, 0
      %s36 = sadd.s32 %s35, 1
      %s37 = scalar_select %p34, %s35, %s36
      %p40 = pneg %p34
      %p41 = scmp.eq.s32.totalorder %s25, 1
      %p42 = por %p40, %p41
      %p43 = scmp.ne.s32.totalorder %s35, %s38
      %p44 = scmp.eq.s32.totalorder %s25, 0
      %p45 = por %p43, %p44
      %p46 = scmp.ne.s32.totalorder %s35, %s38
      %p47 = scmp.eq.s32.totalorder %s30, 1
      %p48 = por %p46, %p47
      %p49 = scmp.ne.s32.totalorder %s38, %s39
      %p50 = scmp.eq.s32.totalorder %s30, 0
      %p51 = por %p49, %p50
      %p52 = scmp.ne.s32.totalorder %s38, %s39
      %p53 = scmp.eq.s32.totalorder %s31, 1
      %p54 = por %p52, %p53
      %p56 = scmp.ne.s32.totalorder %s39, %s55
      %p57 = scmp.eq.s32.totalorder %s31, 0
      %p58 = por %p56, %p57
      %s60 = sadd.s32 %s59, 1
      %p63 = scmp.eq.s32.totalorder %s25, 1
      %p64 = scmp.ne.s32.totalorder %s59, %s61
      %p65 = scmp.eq.s32.totalorder %s25, 0
      %p66 = por %p64, %p65
      %p67 = scmp.ne.s32.totalorder %s59, %s61
      %p68 = scmp.eq.s32.totalorder %s30, 1
      %p69 = por %p67, %p68
      %p70 = scmp.ne.s32.totalorder %s61, %s62
      %p71 = scmp.eq.s32.totalorder %s30, 0
      %p72 = por %p70, %p71
      %p73 = scmp.ne.s32.totalorder %s61, %s62
      %p74 = scmp.eq.s32.totalorder %s31, 1
      %p75 = por %p73, %p74
      %p77 = scmp.ne.s32.totalorder %s62, %s76
      %p78 = scmp.eq.s32.totalorder %s31, 0
      %p79 = por %p77, %p78
      %s81 = sadd.s32 %s80, 1
      %p84 = scmp.eq.s32.totalorder %s25, 1
      %p85 = scmp.ne.s32.totalorder %s80, %s82
      %p86 = scmp.eq.s32.totalorder %s25, 0
      %p87 = por %p85, %p86
      %p88 = scmp.ne.s32.totalorder %s80, %s82
      %p89 = scmp.eq.s32.totalorder %s30, 1
      %p90 = por %p88, %p89
      %p91 = scmp.ne.s32.totalorder %s82, %s83
      %p92 = scmp.eq.s32.totalorder %s30, 0
      %p93 = por %p91, %p92
      %p94 = scmp.ne.s32.totalorder %s82, %s83
      %p95 = scmp.eq.s32.totalorder %s31, 1
      %p96 = por %p94, %p95
      %p98 = scmp.ne.s32.totalorder %s83, %s97
      %p99 = scmp.eq.s32.totalorder %s31, 0
      %p100 = por %p98, %p99
      %s102 = sadd.s32 %s101, 1
      %p105 = scmp.eq.s32.totalorder %s25, 1
      %p106 = scmp.ne.s32.totalorder %s101, %s103
      %p107 = scmp.eq.s32.totalorder %s25, 0
      %p108 = por %p106, %p107
      %p109 = scmp.ne.s32.totalorder %s101, %s103
      %p110 = scmp.eq.s32.totalorder %s30, 1
      %p111 = por %p109, %p110
      %p112 = scmp.ne.s32.totalorder %s103, %s104
      %p113 = scmp.eq.s32.totalorder %s30, 0
      %p114 = por %p112, %p113
      %p115 = scmp.ne.s32.totalorder %s103, %s104
      %p116 = scmp.eq.s32.totalorder %s31, 1
      %p117 = por %p115, %p116
      %p119 = scmp.ne.s32.totalorder %s104, %s118
      %p120 = scmp.eq.s32.totalorder %s31, 0
      %p121 = por %p119, %p120
      %s123 = sadd.s32 %s122, 1
      %p126 = scmp.eq.s32.totalorder %s25, 1
      %p127 = scmp.ne.s32.totalorder %s122, %s124
      %p128 = scmp.eq.s32.totalorder %s25, 0
      %p129 = por %p127, %p128
      %p130 = scmp.ne.s32.totalorder %s122, %s124
      %p131 = scmp.eq.s32.totalorder %s30, 1
      %p132 = por %p130, %p131
      %p133 = scmp.ne.s32.totalorder %s124, %s125
      %p134 = scmp.eq.s32.totalorder %s30, 0
      %p135 = por %p133, %p134
      %p136 = scmp.ne.s32.totalorder %s124, %s125
      %p137 = scmp.eq.s32.totalorder %s31, 1
      %p138 = por %p136, %p137
      %p140 = scmp.ne.s32.totalorder %s125, %s139
      %p141 = scmp.eq.s32.totalorder %s31, 0
      %p142 = por %p140, %p141
      %s144 = sadd.s32 %s143, 1
      %p147 = scmp.eq.s32.totalorder %s25, 1
      %p148 = scmp.ne.s32.totalorder %s143, %s145
      %p149 = scmp.eq.s32.totalorder %s25, 0
      %p150 = por %p148, %p149
      %p151 = scmp.ne.s32.totalorder %s143, %s145
      %p152 = scmp.eq.s32.totalorder %s30, 1
      %p153 = por %p151, %p152
      %p154 = scmp.ne.s32.totalorder %s145, %s146
      %p155 = scmp.eq.s32.totalorder %s30, 0
      %p156 = por %p154, %p155
      %p157 = scmp.ne.s32.totalorder %s145, %s146
      %p158 = scmp.eq.s32.totalorder %s31, 1
      %p159 = por %p157, %p158
      %p161 = scmp.ne.s32.totalorder %s146, %s160
      %p162 = scmp.eq.s32.totalorder %s31, 0
      %p163 = por %p161, %p162
      %s165 = sadd.s32 %s164, 1
      %p168 = scmp.eq.s32.totalorder %s25, 1
      %p169 = scmp.ne.s32.totalorder %s164, %s166
      %p170 = scmp.eq.s32.totalorder %s25, 0
      %p171 = por %p169, %p170
      %p172 = scmp.ne.s32.totalorder %s164, %s166
      %p173 = scmp.eq.s32.totalorder %s30, 1
      %p174 = por %p172, %p173
      %p175 = scmp.ne.s32.totalorder %s166, %s167
      %p176 = scmp.eq.s32.totalorder %s30, 0
      %p177 = por %p175, %p176
      %p178 = scmp.ne.s32.totalorder %s166, %s167
      %p179 = scmp.eq.s32.totalorder %s31, 1
      %p180 = por %p178, %p179
      %p182 = scmp.ne.s32.totalorder %s167, %s181
      %p183 = scmp.eq.s32.totalorder %s31, 0
      %p184 = por %p182, %p183
      %s186 = sadd.s32 %s185, 1
      %p189 = scmp.eq.s32.totalorder %s25, 1
      %p190 = scmp.ne.s32.totalorder %s185, %s187
      %p191 = scmp.eq.s32.totalorder %s25, 0
      %p192 = por %p190, %p191
      %p193 = scmp.ne.s32.totalorder %s185, %s187
      %p194 = scmp.eq.s32.totalorder %s30, 1
      %p195 = por %p193, %p194
      %p196 = scmp.ne.s32.totalorder %s187, %s188
      %p197 = scmp.eq.s32.totalorder %s30, 0
      %p198 = por %p196, %p197
      %p199 = scmp.ne.s32.totalorder %s187, %s188
      %p200 = scmp.eq.s32.totalorder %s31, 1
      %p201 = por %p199, %p200
      %p203 = scmp.ne.s32.totalorder %s188, %s202
      %p204 = scmp.eq.s32.totalorder %s31, 0
      %p205 = por %p203, %p204
      %s207 = sadd.s32 %s206, 1
      %p210 = scmp.eq.s32.totalorder %s25, 1
      %p211 = scmp.ne.s32.totalorder %s206, %s208
      %p212 = scmp.eq.s32.totalorder %s25, 0
      %p213 = por %p211, %p212
      %p214 = scmp.ne.s32.totalorder %s206, %s208
      %p215 = scmp.eq.s32.totalorder %s30, 1
      %p216 = por %p214, %p215
      %p217 = scmp.ne.s32.totalorder %s208, %s209
      %p218 = scmp.eq.s32.totalorder %s30, 0
      %p219 = por %p217, %p218
      %p220 = scmp.ne.s32.totalorder %s208, %s209
      %p221 = scmp.eq.s32.totalorder %s31, 1
      %p222 = por %p220, %p221
      %p224 = scmp.ne.s32.totalorder %s209, %s223
      %p225 = scmp.eq.s32.totalorder %s31, 0
      %p226 = por %p224, %p225
      %s228 = sadd.s32 %s227, 1
      %p231 = scmp.eq.s32.totalorder %s25, 1
      %p232 = scmp.ne.s32.totalorder %s227, %s229
      %p233 = scmp.eq.s32.totalorder %s25, 0
      %p234 = por %p232, %p233
      %p235 = scmp.ne.s32.totalorder %s227, %s229
      %p236 = scmp.eq.s32.totalorder %s30, 1
      %p237 = por %p235, %p236
      %p238 = scmp.ne.s32.totalorder %s229, %s230
      %p239 = scmp.eq.s32.totalorder %s30, 0
      %p240 = por %p238, %p239
      %p241 = scmp.ne.s32.totalorder %s229, %s230
      %p242 = scmp.eq.s32.totalorder %s31, 1
      %p243 = por %p241, %p242
      %p245 = scmp.ne.s32.totalorder %s230, %s244
      %p246 = scmp.eq.s32.totalorder %s31, 0
      %p247 = por %p245, %p246
      %s249 = sadd.s32 %s248, 1
      %p252 = scmp.eq.s32.totalorder %s25, 1
      %p253 = scmp.ne.s32.totalorder %s248, %s250
      %p254 = scmp.eq.s32.totalorder %s25, 0
      %p255 = por %p253, %p254
      %p256 = scmp.ne.s32.totalorder %s248, %s250
      %p257 = scmp.eq.s32.totalorder %s30, 1
      %p258 = por %p256, %p257
      %p259 = scmp.ne.s32.totalorder %s250, %s251
      %p260 = scmp.eq.s32.totalorder %s30, 0
      %p261 = por %p259, %p260
      %p262 = scmp.ne.s32.totalorder %s250, %s251
      %p263 = scmp.eq.s32.totalorder %s31, 1
      %p264 = por %p262, %p263
      %p266 = scmp.ne.s32.totalorder %s251, %s265
      %p267 = scmp.eq.s32.totalorder %s31, 0
      %p268 = por %p266, %p267
      %s270 = sadd.s32 %s269, 1
      %p273 = scmp.eq.s32.totalorder %s25, 1
      %p274 = scmp.ne.s32.totalorder %s269, %s271
      %p275 = scmp.eq.s32.totalorder %s25, 0
      %p276 = por %p274, %p275
      %p277 = scmp.ne.s32.totalorder %s269, %s271
      %p278 = scmp.eq.s32.totalorder %s30, 1
      %p279 = por %p277, %p278
      %p280 = scmp.ne.s32.totalorder %s271, %s272
      %p281 = scmp.eq.s32.totalorder %s30, 0
      %p282 = por %p280, %p281
      %p283 = scmp.ne.s32.totalorder %s271, %s272
      %p284 = scmp.eq.s32.totalorder %s31, 1
      %p285 = por %p283, %p284
      %p287 = scmp.ne.s32.totalorder %s272, %s286
      %p288 = scmp.eq.s32.totalorder %s31, 0
      %p289 = por %p287, %p288
      %s291 = sadd.s32 %s290, 1
      %p294 = scmp.eq.s32.totalorder %s25, 1
      %p295 = scmp.ne.s32.totalorder %s290, %s292
      %p296 = scmp.eq.s32.totalorder %s25, 0
      %p297 = por %p295, %p296
      %p298 = scmp.ne.s32.totalorder %s290, %s292
      %p299 = scmp.eq.s32.totalorder %s30, 1
      %p300 = por %p298, %p299
      %p301 = scmp.ne.s32.totalorder %s292, %s293
      %p302 = scmp.eq.s32.totalorder %s30, 0
      %p303 = por %p301, %p302
      %p304 = scmp.ne.s32.totalorder %s292, %s293
      %p305 = scmp.eq.s32.totalorder %s31, 1
      %p306 = por %p304, %p305
      %p308 = scmp.ne.s32.totalorder %s293, %s307
      %p309 = scmp.eq.s32.totalorder %s31, 0
      %p310 = por %p308, %p309
      %s312 = sadd.s32 %s311, 1
      %p315 = scmp.eq.s32.totalorder %s25, 1
      %p316 = scmp.ne.s32.totalorder %s311, %s313
      %p317 = scmp.eq.s32.totalorder %s25, 0
      %p318 = por %p316, %p317
      %p319 = scmp.ne.s32.totalorder %s311, %s313
      %p320 = scmp.eq.s32.totalorder %s30, 1
      %p321 = por %p319, %p320
      %p322 = scmp.ne.s32.totalorder %s313, %s314
      %p323 = scmp.eq.s32.totalorder %s30, 0
      %p324 = por %p322, %p323
      %p325 = scmp.ne.s32.totalorder %s313, %s314
      %p326 = scmp.eq.s32.totalorder %s31, 1
      %p327 = por %p325, %p326
      %p329 = scmp.ne.s32.totalorder %s314, %s328
      %p330 = scmp.eq.s32.totalorder %s31, 0
      %p331 = por %p329, %p330
      %s332 = ssub.s32 %s25, %s32
      %p333 = scmp.eq.s32.totalorder %s332, 0
      %s335 = sadd.s32 %s334, 1
      %s336 = scalar_select %p333, %s334, %s335
      %p339 = pneg %p333
      %p340 = scmp.eq.s32.totalorder %s25, 1
      %p341 = por %p339, %p340
      %p342 = scmp.ne.s32.totalorder %s334, %s337
      %p343 = scmp.eq.s32.totalorder %s25, 0
      %p344 = por %p342, %p343
      %p345 = scmp.ne.s32.totalorder %s334, %s337
      %p346 = scmp.eq.s32.totalorder %s30, 1
      %p347 = por %p345, %p346
      %p348 = scmp.ne.s32.totalorder %s337, %s338
      %p349 = scmp.eq.s32.totalorder %s30, 0
      %p350 = por %p348, %p349
      %p351 = scmp.ne.s32.totalorder %s337, %s338
      %p352 = scmp.eq.s32.totalorder %s31, 1
      %p353 = por %p351, %p352
      %p355 = scmp.ne.s32.totalorder %s338, %s354
      %p356 = scmp.eq.s32.totalorder %s31, 0
      %p357 = por %p355, %p356
      %p358 = scmp.le.s32.totalorder 1, %s25
      %p359 = scmp.lt.s32.totalorder %s25, 3
      %p360 = pnand %p358, %p359
      %p361 = pneg %p360
      // Predicated region
      $region9: #{tpu_custom_call.1} parent=5 // pred_check
        _
      $region10: #{tpu_custom_call.1} parent=5 // pred_check_branch
        %363 = sbr.rel (%p360) target = $region12
      $region11: #{tpu_custom_call.1} parent=5 // pred_region
        %s364 = ssub.s32 %s25, 1
        // Predicated region
        $region13: #{tpu_custom_call.1} parent=11 // pred_check
          %p365 = pneg %p72
        $region14: #{tpu_custom_call.1} parent=11 // pred_check_branch
          %367 = sbr.rel (%p365) target = $region16
        $region15: #{tpu_custom_call.1} parent=11 // pred_region
          _
        $region16: #{tpu_custom_call.1} parent=11 // pred_fallthru
          _
        // Predicated region
        $region17: #{tpu_custom_call.1} parent=11 // pred_check
          %p368 = pneg %p93
        $region18: #{tpu_custom_call.1} parent=11 // pred_check_branch
          %370 = sbr.rel (%p368) target = $region20
        $region19: #{tpu_custom_call.1} parent=11 // pred_region
          %372 = vsyncadd [#allocation3], 0
          %s373 = sshll.u32 %s2, 4
          %s374 = int_to_ptr.hbm [resolvable:$true] %s373
          %s375 = sshll.u32 [#allocation2], 4
          %s376 = int_to_ptr.vmem [resolvable:$true] %s375
          %381 = dma.hbm_to_vmem [thread:$0]  %s374, 24576, %s376, [#allocation3], 256, 256, 16
        $region20: #{tpu_custom_call.1} parent=11 // pred_fallthru
          _
        // Predicated region
        $region21: #{tpu_custom_call.1} parent=11 // pred_check
          %p382 = pneg %p114
        $region22: #{tpu_custom_call.1} parent=11 // pred_check_branch
          %384 = sbr.rel (%p382) target = $region24
        $region23: #{tpu_custom_call.1} parent=11 // pred_region
          _
        $region24: #{tpu_custom_call.1} parent=11 // pred_fallthru
          _
        // Predicated region
        $region25: #{tpu_custom_call.1} parent=11 // pred_check
          %p385 = pneg %p135
        $region26: #{tpu_custom_call.1} parent=11 // pred_check_branch
          %387 = sbr.rel (%p385) target = $region28
        $region27: #{tpu_custom_call.1} parent=11 // pred_region
          _
        $region28: #{tpu_custom_call.1} parent=11 // pred_fallthru
          _
        // Predicated region
        $region29: #{tpu_custom_call.1} parent=11 // pred_check
          %p388 = pneg %p156
        $region30: #{tpu_custom_call.1} parent=11 // pred_check_branch
          %390 = sbr.rel (%p388) target = $region32
        $region31: #{tpu_custom_call.1} parent=11 // pred_region
          _
        $region32: #{tpu_custom_call.1} parent=11 // pred_fallthru
          _
        // Predicated region
        $region33: #{tpu_custom_call.1} parent=11 // pred_check
          %p391 = pneg %p177
        $region34: #{tpu_custom_call.1} parent=11 // pred_check_branch
          %393 = sbr.rel (%p391) target = $region36
        $region35: #{tpu_custom_call.1} parent=11 // pred_region
          _
        $region36: #{tpu_custom_call.1} parent=11 // pred_fallthru
          _
        // Predicated region
        $region37: #{tpu_custom_call.1} parent=11 // pred_check
          %p394 = pneg %p198
        $region38: #{tpu_custom_call.1} parent=11 // pred_check_branch
          %396 = sbr.rel (%p394) target = $region40
        $region39: #{tpu_custom_call.1} parent=11 // pred_region
          _
        $region40: #{tpu_custom_call.1} parent=11 // pred_fallthru
          _
        // Predicated region
        $region41: #{tpu_custom_call.1} parent=11 // pred_check
          %p397 = pneg %p219
        $region42: #{tpu_custom_call.1} parent=11 // pred_check_branch
          %399 = sbr.rel (%p397) target = $region44
        $region43: #{tpu_custom_call.1} parent=11 // pred_region
          _
        $region44: #{tpu_custom_call.1} parent=11 // pred_fallthru
          _
        // Predicated region
        $region45: #{tpu_custom_call.1} parent=11 // pred_check
          %p400 = pneg %p240
        $region46: #{tpu_custom_call.1} parent=11 // pred_check_branch
          %402 = sbr.rel (%p400) target = $region48
        $region47: #{tpu_custom_call.1} parent=11 // pred_region
          _
        $region48: #{tpu_custom_call.1} parent=11 // pred_fallthru
          _
        // Predicated region
        $region49: #{tpu_custom_call.1} parent=11 // pred_check
          %p403 = pneg %p261
        $region50: #{tpu_custom_call.1} parent=11 // pred_check_branch
          %405 = sbr.rel (%p403) target = $region52
        $region51: #{tpu_custom_call.1} parent=11 // pred_region
          %407 = vsyncadd [#allocation6], 0
          %s408 = sshll.u32 %s10, 4
          %s409 = int_to_ptr.hbm [resolvable:$true] %s408
          %s410 = sshll.u32 [#allocation5], 4
          %s411 = int_to_ptr.vmem [resolvable:$true] %s410
          %416 = dma.hbm_to_vmem [thread:$0]  %s409, 32768, %s411, [#allocation6], 256, 256, 16
        $region52: #{tpu_custom_call.1} parent=11 // pred_fallthru
          _
        // Predicated region
        $region53: #{tpu_custom_call.1} parent=11 // pred_check
          %p417 = pneg %p282
        $region54: #{tpu_custom_call.1} parent=11 // pred_check_branch
          %419 = sbr.rel (%p417) target = $region56
        $region55: #{tpu_custom_call.1} parent=11 // pred_region
          _
        $region56: #{tpu_custom_call.1} parent=11 // pred_fallthru
          _
        // Predicated region
        $region57: #{tpu_custom_call.1} parent=11 // pred_check
          %p420 = pneg %p303
        $region58: #{tpu_custom_call.1} parent=11 // pred_check_branch
          %422 = sbr.rel (%p420) target = $region60
        $region59: #{tpu_custom_call.1} parent=11 // pred_region
          _
        $region60: #{tpu_custom_call.1} parent=11 // pred_fallthru
          _
        // Predicated region
        $region61: #{tpu_custom_call.1} parent=11 // pred_check
          %p423 = pneg %p324
        $region62: #{tpu_custom_call.1} parent=11 // pred_check_branch
          %425 = sbr.rel (%p423) target = $region64
        $region63: #{tpu_custom_call.1} parent=11 // pred_region
          _
        $region64: #{tpu_custom_call.1} parent=11 // pred_fallthru
          _
      $region12: #{tpu_custom_call.1} parent=5 // pred_fallthru
        _
      %p426 = scmp.lt.s32.totalorder %s25, 2
      // Predicated region
      $region65: #{tpu_custom_call.1} parent=5 // pred_check
        %p427 = pneg %p426
      $region66: #{tpu_custom_call.1} parent=5 // pred_check_branch
        %429 = sbr.rel (%p427) target = $region68
      $region67: #{tpu_custom_call.1} parent=5 // pred_region
        // Predicated region
        $region69: #{tpu_custom_call.1} parent=67 // pred_check
          %p430 = pneg %p45
        $region70: #{tpu_custom_call.1} parent=67 // pred_check_branch
          %432 = sbr.rel (%p430) target = $region72
        $region71: #{tpu_custom_call.1} parent=67 // pred_region
          %p433 = scmp.lt.s32.totalorder %s25, 1
          %s434 = scalar_select %p433, %s25, 1
          %s435 = smul.addr %s434, 16
          %s436 = smul.addr %s435, 8
          %s437 = scalar_lea.vmem %s0, %s436
        $region72: #{tpu_custom_call.1} parent=67 // pred_fallthru
          _
      $region68: #{tpu_custom_call.1} parent=5 // pred_fallthru
        _
      %p438 = scmp.le.s32.totalorder 1, %s25
      %p439 = scmp.lt.s32.totalorder %s25, 3
      %p440 = pnand %p438, %p439
      %p441 = pneg %p440
      // Predicated region
      $region73: #{tpu_custom_call.1} parent=5 // pred_check
        _
      $region74: #{tpu_custom_call.1} parent=5 // pred_check_branch
        %443 = sbr.rel (%p440) target = $region76
      $region75: #{tpu_custom_call.1} parent=5 // pred_region
        %s444 = ssub.s32 %s25, 1
        // Predicated region
        $region77: #{tpu_custom_call.1} parent=75 // pred_check
          %p445 = pneg %p93
        $region78: #{tpu_custom_call.1} parent=75 // pred_check_branch
          %447 = sbr.rel (%p445) target = $region80
        $region79: #{tpu_custom_call.1} parent=75 // pred_region
          %449 = dma.done [#allocation3], 24576
        $region80: #{tpu_custom_call.1} parent=75 // pred_fallthru
          _
        // Predicated region
        $region81: #{tpu_custom_call.1} parent=75 // pred_check
          %p450 = pneg %p261
        $region82: #{tpu_custom_call.1} parent=75 // pred_check_branch
          %452 = sbr.rel (%p450) target = $region84
        $region83: #{tpu_custom_call.1} parent=75 // pred_region
          %454 = dma.done [#allocation6], 32768
        $region84: #{tpu_custom_call.1} parent=75 // pred_fallthru
          _
        %p455 = scmp.lt.s32.totalorder %s30, 1
        %s456 = scalar_select %p455, %s30, 1
        %s457 = smul.addr %s456, 16
        %s458 = smul.addr %s457, 8
        %s459 = scalar_lea.vmem %s0, %s458
        %p460 = pneg %p51
        %p461 = pneg %p48
        %p462 = pneg %p72
        %p463 = pneg %p69
        %p464 = pneg %p93
        %p465 = pneg %p90
        %p466 = pneg %p114
        %p467 = pneg %p111
        %p468 = pneg %p135
        %p469 = pneg %p132
        %p470 = pneg %p156
        %p471 = pneg %p153
        %p472 = pneg %p177
        %p473 = pneg %p174
        %p474 = pneg %p198
        %p475 = pneg %p195
        %p476 = pneg %p219
        %p477 = pneg %p216
        %p478 = pneg %p240
        %p479 = pneg %p237
        %p480 = pneg %p261
        %p481 = pneg %p258
        %p482 = pneg %p282
        %p483 = pneg %p279
        %p484 = pneg %p303
        %p485 = pneg %p300
        %p486 = pneg %p324
        %p487 = pneg %p321
        %p488 = pneg %p350
        %p489 = pneg %p347
        %s490 = sand.u32 %s337, 1
        %s491 = scalar_lea.sflag [#allocation4], %s490
        %s492 = sand.u32 %s337, 1
        %s493 = scalar_lea.vmem [#allocation7], %s492
        %p494 = scmp.lt.s32.totalorder %s30, 1
        %s495 = scalar_select %p494, %s30, 1
        %s496 = smul.addr %s495, 16
        %s497 = smul.addr %s496, 8
        %s498 = scalar_lea.vmem %s0, %s497
        %v499 = vld [vmem:[%s498] sm:$0xff]
        %v500 = vld [vmem:[%s498 + $0x8] sm:$0xff]
        %v501 = vld [vmem:[%s498 + $0x10] sm:$0xff]
        %v502 = vld [vmem:[%s498 + $0x18] sm:$0xff]
        %v503 = vld [vmem:[%s498 + $0x20] sm:$0xff]
        %v504 = vld [vmem:[%s498 + $0x28] sm:$0xff]
        %v505 = vld [vmem:[%s498 + $0x30] sm:$0xff]
        %v506 = vld [vmem:[%s498 + $0x38] sm:$0xff]
        %v507 = vld [vmem:[%s498 + $0x40] sm:$0xff]
        %v508 = vld [vmem:[%s498 + $0x48] sm:$0xff]
        %v509 = vld [vmem:[%s498 + $0x50] sm:$0xff]
        %v510 = vld [vmem:[%s498 + $0x58] sm:$0xff]
        %v511 = vld [vmem:[%s498 + $0x60] sm:$0xff]
        %v512 = vld [vmem:[%s498 + $0x68] sm:$0xff]
        %v513 = vld [vmem:[%s498 + $0x70] sm:$0xff]
        %v514 = vld [vmem:[%s498 + $0x78] sm:$0xff]
        %v515 = vld [vmem:[%s1] sm:$0xff]
        %v516 = vld [vmem:[%s1 + $0x8] sm:$0xff]
        %v517 = vld [vmem:[%s1 + $0x10] sm:$0xff]
        %v518 = vld [vmem:[%s1 + $0x18] sm:$0xff]
        %vm519 = vcmask 523264
        %v521 = vsel %vm519, %v515, 0
        %v524 = vsel %vm519, %v516, 0
        %v527 = vsel %vm519, %v517, 0
        %v530 = vsel %vm519, %v518, 0
        %532 = vmatpush.msra.mxu0 0.0
        %533 = vmatpush.msra.mxu0 0.0
        %534 = vmatpush.msra.mxu0 0.0
        %535 = vmatpush.msra.mxu0 0.0
        %536 = vmatpush.msra.mxu0 0.0
        %537 = vmatpush.msra.mxu0 0.0
        %538 = vmatpush.msra.mxu0 0.0
        %539 = vmatpush.msra.mxu0 0.0
        %540 = vmatpush.msra.mxu0 %v513
        %541 = vmatpush.msra.mxu0 %v511
        %542 = vmatpush.msra.mxu0 %v509
        %543 = vmatpush.msra.mxu0 %v507
        %544 = vmatpush.msra.mxu0 %v505
        %545 = vmatpush.msra.mxu0 %v503
        %546 = vmatpush.msra.mxu0 %v501
        %547 = vmatpush.msra.mxu0 %v499
        %548 = vmatmul.f32.gmra.mxu0 %v521
        %v549 = vpop.f32.mrf.mxu0
        %v550 = vadd.f32 0.0, %v549
        %551 = vmatmul.f32.gmra.mxu0 %v524
        %v552 = vpop.f32.mrf.mxu0
        %v553 = vadd.f32 0.0, %v552
        %554 = vmatmul.f32.gmra.mxu0 %v527
        %v555 = vpop.f32.mrf.mxu0
        %v556 = vadd.f32 0.0, %v555
        %557 = vmatmul.f32.gmra.mxu0 %v530
        %v558 = vpop.f32.mrf.mxu0
        %v559 = vadd.f32 0.0, %v558
        %560 = vdwg.mxu0
        %561 = vmatpush.msra.mxu0 0.0
        %562 = vmatpush.msra.mxu0 0.0
        %563 = vmatpush.msra.mxu0 0.0
        %564 = vmatpush.msra.mxu0 0.0
        %565 = vmatpush.msra.mxu0 0.0
        %566 = vmatpush.msra.mxu0 0.0
        %567 = vmatpush.msra.mxu0 0.0
        %568 = vmatpush.msra.mxu0 0.0
        %569 = vmatpush.msra.mxu0 %v514
        %570 = vmatpush.msra.mxu0 %v512
        %571 = vmatpush.msra.mxu0 %v510
        %572 = vmatpush.msra.mxu0 %v508
        %573 = vmatpush.msra.mxu0 %v506
        %574 = vmatpush.msra.mxu0 %v504
        %575 = vmatpush.msra.mxu0 %v502
        %576 = vmatpush.msra.mxu0 %v500
        %577 = vmatmul.f32.gmra.mxu0 %v521
        %v578 = vpop.f32.mrf.mxu0
        %v579 = vadd.f32 0.0, %v578
        %580 = vmatmul.f32.gmra.mxu0 %v524
        %v581 = vpop.f32.mrf.mxu0
        %v582 = vadd.f32 0.0, %v581
        %583 = vmatmul.f32.gmra.mxu0 %v527
        %v584 = vpop.f32.mrf.mxu0
        %v585 = vadd.f32 0.0, %v584
        %586 = vmatmul.f32.gmra.mxu0 %v530
        %v587 = vpop.f32.mrf.mxu0
        %v588 = vadd.f32 0.0, %v587
        %589 = vdwg.mxu0
        %v590 = vld [vmem:[#allocation2] sm:$0xff]
        %v591 = vld [vmem:[#allocation2 + $0x8] sm:$0xff]
        %v592 = vld [vmem:[#allocation2 + $0x10] sm:$0xff]
        %v593 = vld [vmem:[#allocation2 + $0x18] sm:$0xff]
        %v594 = vld [vmem:[#allocation2 + $0x20] sm:$0xff]
        %v595 = vld [vmem:[#allocation2 + $0x28] sm:$0xff]
        %v596 = vld [vmem:[#allocation2 + $0x30] sm:$0xff]
        %v597 = vld [vmem:[#allocation2 + $0x38] sm:$0xff]
        %v598 = vld [vmem:[#allocation2 + $0x40] sm:$0xff]
        %v599 = vld [vmem:[#allocation2 + $0x48] sm:$0xff]
        %v600 = vld [vmem:[#allocation2 + $0x50] sm:$0xff]
        %v601 = vld [vmem:[#allocation2 + $0x58] sm:$0xff]
        %v602 = vld [vmem:[#allocation2 + $0x60] sm:$0xff]
        %v603 = vld [vmem:[#allocation2 + $0x68] sm:$0xff]
        %v604 = vld [vmem:[#allocation2 + $0x70] sm:$0xff]
        %v605 = vld [vmem:[#allocation2 + $0x78] sm:$0xff]
        %v606 = vld [vmem:[#allocation2 + $0x80] sm:$0xff]
        %v607 = vld [vmem:[#allocation2 + $0x88] sm:$0xff]
        %v608 = vld [vmem:[#allocation2 + $0x90] sm:$0xff]
        %v609 = vld [vmem:[#allocation2 + $0x98] sm:$0xff]
        %v610 = vld [vmem:[#allocation2 + $0xa0] sm:$0xff]
        %v611 = vld [vmem:[#allocation2 + $0xa8] sm:$0xff]
        %v612 = vld [vmem:[#allocation2 + $0xb0] sm:$0xff]
        %v613 = vld [vmem:[#allocation2 + $0xb8] sm:$0xff]
        %v614 = vld [vmem:[#allocation2 + $0xc0] sm:$0xff]
        %v615 = vld [vmem:[#allocation2 + $0xc8] sm:$0xff]
        %v616 = vld [vmem:[#allocation2 + $0xd0] sm:$0xff]
        %v617 = vld [vmem:[#allocation2 + $0xd8] sm:$0xff]
        %v618 = vld [vmem:[#allocation2 + $0xe0] sm:$0xff]
        %v619 = vld [vmem:[#allocation2 + $0xe8] sm:$0xff]
        %v620 = vld [vmem:[#allocation2 + $0xf0] sm:$0xff]
        %v621 = vld [vmem:[#allocation2 + $0xf8] sm:$0xff]
        %v622 = vld [vmem:[#allocation2 + $0x100] sm:$0xff]
        %v623 = vld [vmem:[#allocation2 + $0x108] sm:$0xff]
        %v624 = vld [vmem:[#allocation2 + $0x110] sm:$0xff]
        %v625 = vld [vmem:[#allocation2 + $0x118] sm:$0xff]
        %v626 = vld [vmem:[#allocation2 + $0x120] sm:$0xff]
        %v627 = vld [vmem:[#allocation2 + $0x128] sm:$0xff]
        %v628 = vld [vmem:[#allocation2 + $0x130] sm:$0xff]
        %v629 = vld [vmem:[#allocation2 + $0x138] sm:$0xff]
        %v630 = vld [vmem:[#allocation2 + $0x140] sm:$0xff]
        %v631 = vld [vmem:[#allocation2 + $0x148] sm:$0xff]
        %v632 = vld [vmem:[#allocation2 + $0x150] sm:$0xff]
        %v633 = vld [vmem:[#allocation2 + $0x158] sm:$0xff]
        %v634 = vld [vmem:[#allocation2 + $0x160] sm:$0xff]
        %v635 = vld [vmem:[#allocation2 + $0x168] sm:$0xff]
        %v636 = vld [vmem:[#allocation2 + $0x170] sm:$0xff]
        %v637 = vld [vmem:[#allocation2 + $0x178] sm:$0xff]
        %s638 = scalar_lea.vmem %s1, 32
        %v639 = vld [vmem:[%s638] sm:$0xff]
        %v640 = vld [vmem:[%s638 + $0x8] sm:$0xff]
        %v641 = vld [vmem:[%s638 + $0x10] sm:$0xff]
        %v642 = vld [vmem:[%s638 + $0x18] sm:$0xff]
        %v644 = vsel %vm519, %v639, 0
        %v647 = vsel %vm519, %v640, 0
        %v650 = vsel %vm519, %v641, 0
        %v653 = vsel %vm519, %v642, 0
        %655 = vmatpush.msra.mxu0 0.0
        %656 = vmatpush.msra.mxu0 0.0
        %657 = vmatpush.msra.mxu0 0.0
        %658 = vmatpush.msra.mxu0 0.0
        %659 = vmatpush.msra.mxu0 0.0
        %660 = vmatpush.msra.mxu0 0.0
        %661 = vmatpush.msra.mxu0 0.0
        %662 = vmatpush.msra.mxu0 0.0
        %663 = vmatpush.msra.mxu0 %v513
        %664 = vmatpush.msra.mxu0 %v511
        %665 = vmatpush.msra.mxu0 %v509
        %666 = vmatpush.msra.mxu0 %v507
        %667 = vmatpush.msra.mxu0 %v505
        %668 = vmatpush.msra.mxu0 %v503
        %669 = vmatpush.msra.mxu0 %v501
        %670 = vmatpush.msra.mxu0 %v499
        %671 = vmatmul.f32.gmra.mxu0 %v644
        %v672 = vpop.f32.mrf.mxu0
        %v673 = vadd.f32 0.0, %v672
        %674 = vmatmul.f32.gmra.mxu0 %v647
        %v675 = vpop.f32.mrf.mxu0
        %v676 = vadd.f32 0.0, %v675
        %677 = vmatmul.f32.gmra.mxu0 %v650
        %v678 = vpop.f32.mrf.mxu0
        %v679 = vadd.f32 0.0, %v678
        %680 = vmatmul.f32.gmra.mxu0 %v653
        %v681 = vpop.f32.mrf.mxu0
        %v682 = vadd.f32 0.0, %v681
        %683 = vdwg.mxu0
        %684 = vmatpush.msra.mxu0 0.0
        %685 = vmatpush.msra.mxu0 0.0
        %686 = vmatpush.msra.mxu0 0.0
        %687 = vmatpush.msra.mxu0 0.0
        %688 = vmatpush.msra.mxu0 0.0
        %689 = vmatpush.msra.mxu0 0.0
        %690 = vmatpush.msra.mxu0 0.0
        %691 = vmatpush.msra.mxu0 0.0
        %692 = vmatpush.msra.mxu0 %v514
        %693 = vmatpush.msra.mxu0 %v512
        %694 = vmatpush.msra.mxu0 %v510
        %695 = vmatpush.msra.mxu0 %v508
        %696 = vmatpush.msra.mxu0 %v506
        %697 = vmatpush.msra.mxu0 %v504
        %698 = vmatpush.msra.mxu0 %v502
        %699 = vmatpush.msra.mxu0 %v500
        %700 = vmatmul.f32.gmra.mxu0 %v644
        %v701 = vpop.f32.mrf.mxu0
        %v702 = vadd.f32 0.0, %v701
        %703 = vmatmul.f32.gmra.mxu0 %v647
        %v704 = vpop.f32.mrf.mxu0
        %v705 = vadd.f32 0.0, %v704
        %706 = vmatmul.f32.gmra.mxu0 %v650
        %v707 = vpop.f32.mrf.mxu0
        %v708 = vadd.f32 0.0, %v707
        %709 = vmatmul.f32.gmra.mxu0 %v653
        %v710 = vpop.f32.mrf.mxu0
        %v711 = vadd.f32 0.0, %v710
        %712 = vdwg.mxu0
        %s713 = scalar_lea.vmem [#allocation2], 384
        %v714 = vld [vmem:[%s713] sm:$0xff]
        %v715 = vld [vmem:[%s713 + $0x8] sm:$0xff]
        %v716 = vld [vmem:[%s713 + $0x10] sm:$0xff]
        %v717 = vld [vmem:[%s713 + $0x18] sm:$0xff]
        %v718 = vld [vmem:[%s713 + $0x20] sm:$0xff]
        %v719 = vld [vmem:[%s713 + $0x28] sm:$0xff]
        %v720 = vld [vmem:[%s713 + $0x30] sm:$0xff]
        %v721 = vld [vmem:[%s713 + $0x38] sm:$0xff]
        %v722 = vld [vmem:[%s713 + $0x40] sm:$0xff]
        %v723 = vld [vmem:[%s713 + $0x48] sm:$0xff]
        %v724 = vld [vmem:[%s713 + $0x50] sm:$0xff]
        %v725 = vld [vmem:[%s713 + $0x58] sm:$0xff]
        %v726 = vld [vmem:[%s713 + $0x60] sm:$0xff]
        %v727 = vld [vmem:[%s713 + $0x68] sm:$0xff]
        %v728 = vld [vmem:[%s713 + $0x70] sm:$0xff]
        %v729 = vld [vmem:[%s713 + $0x78] sm:$0xff]
        %v730 = vld [vmem:[%s713 + $0x80] sm:$0xff]
        %v731 = vld [vmem:[%s713 + $0x88] sm:$0xff]
        %v732 = vld [vmem:[%s713 + $0x90] sm:$0xff]
        %v733 = vld [vmem:[%s713 + $0x98] sm:$0xff]
        %v734 = vld [vmem:[%s713 + $0xa0] sm:$0xff]
        %v735 = vld [vmem:[%s713 + $0xa8] sm:$0xff]
        %v736 = vld [vmem:[%s713 + $0xb0] sm:$0xff]
        %v737 = vld [vmem:[%s713 + $0xb8] sm:$0xff]
        %v738 = vld [vmem:[%s713 + $0xc0] sm:$0xff]
        %v739 = vld [vmem:[%s713 + $0xc8] sm:$0xff]
        %v740 = vld [vmem:[%s713 + $0xd0] sm:$0xff]
        %v741 = vld [vmem:[%s713 + $0xd8] sm:$0xff]
        %v742 = vld [vmem:[%s713 + $0xe0] sm:$0xff]
        %v743 = vld [vmem:[%s713 + $0xe8] sm:$0xff]
        %v744 = vld [vmem:[%s713 + $0xf0] sm:$0xff]
        %v745 = vld [vmem:[%s713 + $0xf8] sm:$0xff]
        %v746 = vld [vmem:[%s713 + $0x100] sm:$0xff]
        %v747 = vld [vmem:[%s713 + $0x108] sm:$0xff]
        %v748 = vld [vmem:[%s713 + $0x110] sm:$0xff]
        %v749 = vld [vmem:[%s713 + $0x118] sm:$0xff]
        %v750 = vld [vmem:[%s713 + $0x120] sm:$0xff]
        %v751 = vld [vmem:[%s713 + $0x128] sm:$0xff]
        %v752 = vld [vmem:[%s713 + $0x130] sm:$0xff]
        %v753 = vld [vmem:[%s713 + $0x138] sm:$0xff]
        %v754 = vld [vmem:[%s713 + $0x140] sm:$0xff]
        %v755 = vld [vmem:[%s713 + $0x148] sm:$0xff]
        %v756 = vld [vmem:[%s713 + $0x150] sm:$0xff]
        %v757 = vld [vmem:[%s713 + $0x158] sm:$0xff]
        %v758 = vld [vmem:[%s713 + $0x160] sm:$0xff]
        %v759 = vld [vmem:[%s713 + $0x168] sm:$0xff]
        %v760 = vld [vmem:[%s713 + $0x170] sm:$0xff]
        %v761 = vld [vmem:[%s713 + $0x178] sm:$0xff]
        %v763 = vsel %vm519, %v702, 0
        %v766 = vsel %vm519, %v705, 0
        %v769 = vsel %vm519, %v708, 0
        %v772 = vsel %vm519, %v711, 0
        %774 = vmatpush.msra.mxu0 %v744
        %775 = vmatpush.msra.mxu0 %v742
        %776 = vmatpush.msra.mxu0 %v740
        %777 = vmatpush.msra.mxu0 %v738
        %778 = vmatpush.msra.mxu0 %v736
        %779 = vmatpush.msra.mxu0 %v734
        %780 = vmatpush.msra.mxu0 %v732
        %781 = vmatpush.msra.mxu0 %v730
        %782 = vmatpush.msra.mxu0 %v728
        %783 = vmatpush.msra.mxu0 %v726
        %784 = vmatpush.msra.mxu0 %v724
        %785 = vmatpush.msra.mxu0 %v722
        %786 = vmatpush.msra.mxu0 %v720
        %787 = vmatpush.msra.mxu0 %v718
        %788 = vmatpush.msra.mxu0 %v716
        %789 = vmatpush.msra.mxu0 %v714
        %790 = vmatmul.f32.gmra.mxu0 %v673
        %v791 = vpop.f32.mrf.mxu0
        %v792 = vadd.f32 0.0, %v791
        %793 = vmatmul.f32.gmra.mxu0 %v676
        %v794 = vpop.f32.mrf.mxu0
        %v795 = vadd.f32 0.0, %v794
        %796 = vmatmul.f32.gmra.mxu0 %v679
        %v797 = vpop.f32.mrf.mxu0
        %v798 = vadd.f32 0.0, %v797
        %799 = vmatmul.f32.gmra.mxu0 %v682
        %v800 = vpop.f32.mrf.mxu0
        %v801 = vadd.f32 0.0, %v800
        %802 = vdwg.mxu0
        %803 = vmatpush.msra.mxu0 0.0
        %804 = vmatpush.msra.mxu0 0.0
        %805 = vmatpush.msra.mxu0 0.0
        %806 = vmatpush.msra.mxu0 0.0
        %807 = vmatpush.msra.mxu0 0.0
        %808 = vmatpush.msra.mxu0 0.0
        %809 = vmatpush.msra.mxu0 0.0
        %810 = vmatpush.msra.mxu0 0.0
        %811 = vmatpush.msra.mxu0 %v760
        %812 = vmatpush.msra.mxu0 %v758
        %813 = vmatpush.msra.mxu0 %v756
        %814 = vmatpush.msra.mxu0 %v754
        %815 = vmatpush.msra.mxu0 %v752
        %816 = vmatpush.msra.mxu0 %v750
        %817 = vmatpush.msra.mxu0 %v748
        %818 = vmatpush.msra.mxu0 %v746
        %819 = vmatmul.f32.gmra.mxu0 %v763
        %v820 = vpop.f32.mrf.mxu0
        %v821 = vadd.f32 %v792, %v820
        %822 = vmatmul.f32.gmra.mxu0 %v766
        %v823 = vpop.f32.mrf.mxu0
        %v824 = vadd.f32 %v795, %v823
        %825 = vmatmul.f32.gmra.mxu0 %v769
        %v826 = vpop.f32.mrf.mxu0
        %v827 = vadd.f32 %v798, %v826
        %828 = vmatmul.f32.gmra.mxu0 %v772
        %v829 = vpop.f32.mrf.mxu0
        %v830 = vadd.f32 %v801, %v829
        %831 = vdwg.mxu0
        %832 = vmatpush.msra.mxu0 %v745
        %833 = vmatpush.msra.mxu0 %v743
        %834 = vmatpush.msra.mxu0 %v741
        %835 = vmatpush.msra.mxu0 %v739
        %836 = vmatpush.msra.mxu0 %v737
        %837 = vmatpush.msra.mxu0 %v735
        %838 = vmatpush.msra.mxu0 %v733
        %839 = vmatpush.msra.mxu0 %v731
        %840 = vmatpush.msra.mxu0 %v729
        %841 = vmatpush.msra.mxu0 %v727
        %842 = vmatpush.msra.mxu0 %v725
        %843 = vmatpush.msra.mxu0 %v723
        %844 = vmatpush.msra.mxu0 %v721
        %845 = vmatpush.msra.mxu0 %v719
        %846 = vmatpush.msra.mxu0 %v717
        %847 = vmatpush.msra.mxu0 %v715
        %848 = vmatmul.f32.gmra.mxu0 %v673
        %v849 = vpop.f32.mrf.mxu0
        %v850 = vadd.f32 0.0, %v849
        %851 = vmatmul.f32.gmra.mxu0 %v676
        %v852 = vpop.f32.mrf.mxu0
        %v853 = vadd.f32 0.0, %v852
        %854 = vmatmul.f32.gmra.mxu0 %v679
        %v855 = vpop.f32.mrf.mxu0
        %v856 = vadd.f32 0.0, %v855
        %857 = vmatmul.f32.gmra.mxu0 %v682
        %v858 = vpop.f32.mrf.mxu0
        %v859 = vadd.f32 0.0, %v858
        %860 = vdwg.mxu0
        %861 = vmatpush.msra.mxu0 0.0
        %862 = vmatpush.msra.mxu0 0.0
        %863 = vmatpush.msra.mxu0 0.0
        %864 = vmatpush.msra.mxu0 0.0
        %865 = vmatpush.msra.mxu0 0.0
        %866 = vmatpush.msra.mxu0 0.0
        %867 = vmatpush.msra.mxu0 0.0
        %868 = vmatpush.msra.mxu0 0.0
        %869 = vmatpush.msra.mxu0 %v761
        %870 = vmatpush.msra.mxu0 %v759
        %871 = vmatpush.msra.mxu0 %v757
        %872 = vmatpush.msra.mxu0 %v755
        %873 = vmatpush.msra.mxu0 %v753
        %874 = vmatpush.msra.mxu0 %v751
        %875 = vmatpush.msra.mxu0 %v749
        %876 = vmatpush.msra.mxu0 %v747
        %877 = vmatmul.f32.gmra.mxu0 %v763
        %v878 = vpop.f32.mrf.mxu0
        %v879 = vadd.f32 %v850, %v878
        %880 = vmatmul.f32.gmra.mxu0 %v766
        %v881 = vpop.f32.mrf.mxu0
        %v882 = vadd.f32 %v853, %v881
        %883 = vmatmul.f32.gmra.mxu0 %v769
        %v884 = vpop.f32.mrf.mxu0
        %v885 = vadd.f32 %v856, %v884
        %886 = vmatmul.f32.gmra.mxu0 %v772
        %v887 = vpop.f32.mrf.mxu0
        %v888 = vadd.f32 %v859, %v887
        %889 = vdwg.mxu0
        %v891 = vsel %vm519, %v579, 0
        %v894 = vsel %vm519, %v582, 0
        %v897 = vsel %vm519, %v585, 0
        %v900 = vsel %vm519, %v588, 0
        %902 = vmatpush.msra.mxu0 %v620
        %903 = vmatpush.msra.mxu0 %v618
        %904 = vmatpush.msra.mxu0 %v616
        %905 = vmatpush.msra.mxu0 %v614
        %906 = vmatpush.msra.mxu0 %v612
        %907 = vmatpush.msra.mxu0 %v610
        %908 = vmatpush.msra.mxu0 %v608
        %909 = vmatpush.msra.mxu0 %v606
        %910 = vmatpush.msra.mxu0 %v604
        %911 = vmatpush.msra.mxu0 %v602
        %912 = vmatpush.msra.mxu0 %v600
        %913 = vmatpush.msra.mxu0 %v598
        %914 = vmatpush.msra.mxu0 %v596
        %915 = vmatpush.msra.mxu0 %v594
        %916 = vmatpush.msra.mxu0 %v592
        %917 = vmatpush.msra.mxu0 %v590
        %918 = vmatmul.f32.gmra.mxu0 %v550
        %v919 = vpop.f32.mrf.mxu0
        %v920 = vadd.f32 %v821, %v919
        %921 = vmatmul.f32.gmra.mxu0 %v553
        %v922 = vpop.f32.mrf.mxu0
        %v923 = vadd.f32 %v824, %v922
        %924 = vmatmul.f32.gmra.mxu0 %v556
        %v925 = vpop.f32.mrf.mxu0
        %v926 = vadd.f32 %v827, %v925
        %927 = vmatmul.f32.gmra.mxu0 %v559
        %v928 = vpop.f32.mrf.mxu0
        %v929 = vadd.f32 %v830, %v928
        %930 = vdwg.mxu0
        %931 = vmatpush.msra.mxu0 0.0
        %932 = vmatpush.msra.mxu0 0.0
        %933 = vmatpush.msra.mxu0 0.0
        %934 = vmatpush.msra.mxu0 0.0
        %935 = vmatpush.msra.mxu0 0.0
        %936 = vmatpush.msra.mxu0 0.0
        %937 = vmatpush.msra.mxu0 0.0
        %938 = vmatpush.msra.mxu0 0.0
        %939 = vmatpush.msra.mxu0 %v636
        %940 = vmatpush.msra.mxu0 %v634
        %941 = vmatpush.msra.mxu0 %v632
        %942 = vmatpush.msra.mxu0 %v630
        %943 = vmatpush.msra.mxu0 %v628
        %944 = vmatpush.msra.mxu0 %v626
        %945 = vmatpush.msra.mxu0 %v624
        %946 = vmatpush.msra.mxu0 %v622
        %947 = vmatmul.f32.gmra.mxu0 %v891
        %v948 = vpop.f32.mrf.mxu0
        %v949 = vadd.f32 %v920, %v948
        %950 = vmatmul.f32.gmra.mxu0 %v894
        %v951 = vpop.f32.mrf.mxu0
        %v952 = vadd.f32 %v923, %v951
        %953 = vmatmul.f32.gmra.mxu0 %v897
        %v954 = vpop.f32.mrf.mxu0
        %v955 = vadd.f32 %v926, %v954
        %956 = vmatmul.f32.gmra.mxu0 %v900
        %v957 = vpop.f32.mrf.mxu0
        %v958 = vadd.f32 %v929, %v957
        %959 = vdwg.mxu0
        %960 = vmatpush.msra.mxu0 %v621
        %961 = vmatpush.msra.mxu0 %v619
        %962 = vmatpush.msra.mxu0 %v617
        %963 = vmatpush.msra.mxu0 %v615
        %964 = vmatpush.msra.mxu0 %v613
        %965 = vmatpush.msra.mxu0 %v611
        %966 = vmatpush.msra.mxu0 %v609
        %967 = vmatpush.msra.mxu0 %v607
        %968 = vmatpush.msra.mxu0 %v605
        %969 = vmatpush.msra.mxu0 %v603
        %970 = vmatpush.msra.mxu0 %v601
        %971 = vmatpush.msra.mxu0 %v599
        %972 = vmatpush.msra.mxu0 %v597
        %973 = vmatpush.msra.mxu0 %v595
        %974 = vmatpush.msra.mxu0 %v593
        %975 = vmatpush.msra.mxu0 %v591
        %976 = vmatmul.f32.gmra.mxu0 %v550
        %v977 = vpop.f32.mrf.mxu0
        %v978 = vadd.f32 %v879, %v977
        %979 = vmatmul.f32.gmra.mxu0 %v553
        %v980 = vpop.f32.mrf.mxu0
        %v981 = vadd.f32 %v882, %v980
        %982 = vmatmul.f32.gmra.mxu0 %v556
        %v983 = vpop.f32.mrf.mxu0
        %v984 = vadd.f32 %v885, %v983
        %985 = vmatmul.f32.gmra.mxu0 %v559
        %v986 = vpop.f32.mrf.mxu0
        %v987 = vadd.f32 %v888, %v986
        %988 = vdwg.mxu0
        %989 = vmatpush.msra.mxu0 0.0
        %990 = vmatpush.msra.mxu0 0.0
        %991 = vmatpush.msra.mxu0 0.0
        %992 = vmatpush.msra.mxu0 0.0
        %993 = vmatpush.msra.mxu0 0.0
        %994 = vmatpush.msra.mxu0 0.0
        %995 = vmatpush.msra.mxu0 0.0
        %996 = vmatpush.msra.mxu0 0.0
        %997 = vmatpush.msra.mxu0 %v637
        %998 = vmatpush.msra.mxu0 %v635
        %999 = vmatpush.msra.mxu0 %v633
        %1000 = vmatpush.msra.mxu0 %v631
        %1001 = vmatpush.msra.mxu0 %v629
        %1002 = vmatpush.msra.mxu0 %v627
        %1003 = vmatpush.msra.mxu0 %v625
        %1004 = vmatpush.msra.mxu0 %v623
        %1005 = vmatmul.f32.gmra.mxu0 %v891
        %v1006 = vpop.f32.mrf.mxu0
        %v1007 = vadd.f32 %v978, %v1006
        %1008 = vmatmul.f32.gmra.mxu0 %v894
        %v1009 = vpop.f32.mrf.mxu0
        %v1010 = vadd.f32 %v981, %v1009
        %1011 = vmatmul.f32.gmra.mxu0 %v897
        %v1012 = vpop.f32.mrf.mxu0
        %v1013 = vadd.f32 %v984, %v1012
        %1014 = vmatmul.f32.gmra.mxu0 %v900
        %v1015 = vpop.f32.mrf.mxu0
        %v1016 = vadd.f32 %v987, %v1015
        %1017 = vdwg.mxu0
        %s1018 = scalar_lea.vmem %s1, 64
        %v1019 = vld [vmem:[%s1018] sm:$0xff]
        %v1020 = vld [vmem:[%s1018 + $0x8] sm:$0xff]
        %v1021 = vld [vmem:[%s1018 + $0x10] sm:$0xff]
        %v1022 = vld [vmem:[%s1018 + $0x18] sm:$0xff]
        %v1024 = vsel %vm519, %v1019, 0
        %v1027 = vsel %vm519, %v1020, 0
        %v1030 = vsel %vm519, %v1021, 0
        %v1033 = vsel %vm519, %v1022, 0
        %1035 = vmatpush.msra.mxu0 0.0
        %1036 = vmatpush.msra.mxu0 0.0
        %1037 = vmatpush.msra.mxu0 0.0
        %1038 = vmatpush.msra.mxu0 0.0
        %1039 = vmatpush.msra.mxu0 0.0
        %1040 = vmatpush.msra.mxu0 0.0
        %1041 = vmatpush.msra.mxu0 0.0
        %1042 = vmatpush.msra.mxu0 0.0
        %1043 = vmatpush.msra.mxu0 %v513
        %1044 = vmatpush.msra.mxu0 %v511
        %1045 = vmatpush.msra.mxu0 %v509
        %1046 = vmatpush.msra.mxu0 %v507
        %1047 = vmatpush.msra.mxu0 %v505
        %1048 = vmatpush.msra.mxu0 %v503
        %1049 = vmatpush.msra.mxu0 %v501
        %1050 = vmatpush.msra.mxu0 %v499
        %1051 = vmatmul.f32.gmra.mxu0 %v1024
        %v1052 = vpop.f32.mrf.mxu0
        %v1053 = vadd.f32 0.0, %v1052
        %1054 = vmatmul.f32.gmra.mxu0 %v1027
        %v1055 = vpop.f32.mrf.mxu0
        %v1056 = vadd.f32 0.0, %v1055
        %1057 = vmatmul.f32.gmra.mxu0 %v1030
        %v1058 = vpop.f32.mrf.mxu0
        %v1059 = vadd.f32 0.0, %v1058
        %1060 = vmatmul.f32.gmra.mxu0 %v1033
        %v1061 = vpop.f32.mrf.mxu0
        %v1062 = vadd.f32 0.0, %v1061
        %1063 = vdwg.mxu0
        %1064 = vmatpush.msra.mxu0 0.0
        %1065 = vmatpush.msra.mxu0 0.0
        %1066 = vmatpush.msra.mxu0 0.0
        %1067 = vmatpush.msra.mxu0 0.0
        %1068 = vmatpush.msra.mxu0 0.0
        %1069 = vmatpush.msra.mxu0 0.0
        %1070 = vmatpush.msra.mxu0 0.0
        %1071 = vmatpush.msra.mxu0 0.0
        %1072 = vmatpush.msra.mxu0 %v514
        %1073 = vmatpush.msra.mxu0 %v512
        %1074 = vmatpush.msra.mxu0 %v510
        %1075 = vmatpush.msra.mxu0 %v508
        %1076 = vmatpush.msra.mxu0 %v506
        %1077 = vmatpush.msra.mxu0 %v504
        %1078 = vmatpush.msra.mxu0 %v502
        %1079 = vmatpush.msra.mxu0 %v500
        %1080 = vmatmul.f32.gmra.mxu0 %v1024
        %v1081 = vpop.f32.mrf.mxu0
        %v1082 = vadd.f32 0.0, %v1081
        %1083 = vmatmul.f32.gmra.mxu0 %v1027
        %v1084 = vpop.f32.mrf.mxu0
        %v1085 = vadd.f32 0.0, %v1084
        %1086 = vmatmul.f32.gmra.mxu0 %v1030
        %v1087 = vpop.f32.mrf.mxu0
        %v1088 = vadd.f32 0.0, %v1087
        %1089 = vmatmul.f32.gmra.mxu0 %v1033
        %v1090 = vpop.f32.mrf.mxu0
        %v1091 = vadd.f32 0.0, %v1090
        %1092 = vdwg.mxu0
        %s1093 = scalar_lea.vmem [#allocation2], 768
        %v1094 = vld [vmem:[%s1093] sm:$0xff]
        %v1095 = vld [vmem:[%s1093 + $0x8] sm:$0xff]
        %v1096 = vld [vmem:[%s1093 + $0x10] sm:$0xff]
        %v1097 = vld [vmem:[%s1093 + $0x18] sm:$0xff]
        %v1098 = vld [vmem:[%s1093 + $0x20] sm:$0xff]
        %v1099 = vld [vmem:[%s1093 + $0x28] sm:$0xff]
        %v1100 = vld [vmem:[%s1093 + $0x30] sm:$0xff]
        %v1101 = vld [vmem:[%s1093 + $0x38] sm:$0xff]
        %v1102 = vld [vmem:[%s1093 + $0x40] sm:$0xff]
        %v1103 = vld [vmem:[%s1093 + $0x48] sm:$0xff]
        %v1104 = vld [vmem:[%s1093 + $0x50] sm:$0xff]
        %v1105 = vld [vmem:[%s1093 + $0x58] sm:$0xff]
        %v1106 = vld [vmem:[%s1093 + $0x60] sm:$0xff]
        %v1107 = vld [vmem:[%s1093 + $0x68] sm:$0xff]
        %v1108 = vld [vmem:[%s1093 + $0x70] sm:$0xff]
        %v1109 = vld [vmem:[%s1093 + $0x78] sm:$0xff]
        %v1110 = vld [vmem:[%s1093 + $0x80] sm:$0xff]
        %v1111 = vld [vmem:[%s1093 + $0x88] sm:$0xff]
        %v1112 = vld [vmem:[%s1093 + $0x90] sm:$0xff]
        %v1113 = vld [vmem:[%s1093 + $0x98] sm:$0xff]
        %v1114 = vld [vmem:[%s1093 + $0xa0] sm:$0xff]
        %v1115 = vld [vmem:[%s1093 + $0xa8] sm:$0xff]
        %v1116 = vld [vmem:[%s1093 + $0xb0] sm:$0xff]
        %v1117 = vld [vmem:[%s1093 + $0xb8] sm:$0xff]
        %v1118 = vld [vmem:[%s1093 + $0xc0] sm:$0xff]
        %v1119 = vld [vmem:[%s1093 + $0xc8] sm:$0xff]
        %v1120 = vld [vmem:[%s1093 + $0xd0] sm:$0xff]
        %v1121 = vld [vmem:[%s1093 + $0xd8] sm:$0xff]
        %v1122 = vld [vmem:[%s1093 + $0xe0] sm:$0xff]
        %v1123 = vld [vmem:[%s1093 + $0xe8] sm:$0xff]
        %v1124 = vld [vmem:[%s1093 + $0xf0] sm:$0xff]
        %v1125 = vld [vmem:[%s1093 + $0xf8] sm:$0xff]
        %v1126 = vld [vmem:[%s1093 + $0x100] sm:$0xff]
        %v1127 = vld [vmem:[%s1093 + $0x108] sm:$0xff]
        %v1128 = vld [vmem:[%s1093 + $0x110] sm:$0xff]
        %v1129 = vld [vmem:[%s1093 + $0x118] sm:$0xff]
        %v1130 = vld [vmem:[%s1093 + $0x120] sm:$0xff]
        %v1131 = vld [vmem:[%s1093 + $0x128] sm:$0xff]
        %v1132 = vld [vmem:[%s1093 + $0x130] sm:$0xff]
        %v1133 = vld [vmem:[%s1093 + $0x138] sm:$0xff]
        %v1134 = vld [vmem:[%s1093 + $0x140] sm:$0xff]
        %v1135 = vld [vmem:[%s1093 + $0x148] sm:$0xff]
        %v1136 = vld [vmem:[%s1093 + $0x150] sm:$0xff]
        %v1137 = vld [vmem:[%s1093 + $0x158] sm:$0xff]
        %v1138 = vld [vmem:[%s1093 + $0x160] sm:$0xff]
        %v1139 = vld [vmem:[%s1093 + $0x168] sm:$0xff]
        %v1140 = vld [vmem:[%s1093 + $0x170] sm:$0xff]
        %v1141 = vld [vmem:[%s1093 + $0x178] sm:$0xff]
        %v1143 = vsel %vm519, %v1082, 0
        %v1146 = vsel %vm519, %v1085, 0
        %v1149 = vsel %vm519, %v1088, 0
        %v1152 = vsel %vm519, %v1091, 0
        %1154 = vmatpush.msra.mxu0 %v1124
        %1155 = vmatpush.msra.mxu0 %v1122
        %1156 = vmatpush.msra.mxu0 %v1120
        %1157 = vmatpush.msra.mxu0 %v1118
        %1158 = vmatpush.msra.mxu0 %v1116
        %1159 = vmatpush.msra.mxu0 %v1114
        %1160 = vmatpush.msra.mxu0 %v1112
        %1161 = vmatpush.msra.mxu0 %v1110
        %1162 = vmatpush.msra.mxu0 %v1108
        %1163 = vmatpush.msra.mxu0 %v1106
        %1164 = vmatpush.msra.mxu0 %v1104
        %1165 = vmatpush.msra.mxu0 %v1102
        %1166 = vmatpush.msra.mxu0 %v1100
        %1167 = vmatpush.msra.mxu0 %v1098
        %1168 = vmatpush.msra.mxu0 %v1096
        %1169 = vmatpush.msra.mxu0 %v1094
        %1170 = vmatmul.f32.gmra.mxu0 %v1053
        %v1171 = vpop.f32.mrf.mxu0
        %v1172 = vadd.f32 0.0, %v1171
        %1173 = vmatmul.f32.gmra.mxu0 %v1056
        %v1174 = vpop.f32.mrf.mxu0
        %v1175 = vadd.f32 0.0, %v1174
        %1176 = vmatmul.f32.gmra.mxu0 %v1059
        %v1177 = vpop.f32.mrf.mxu0
        %v1178 = vadd.f32 0.0, %v1177
        %1179 = vmatmul.f32.gmra.mxu0 %v1062
        %v1180 = vpop.f32.mrf.mxu0
        %v1181 = vadd.f32 0.0, %v1180
        %1182 = vdwg.mxu0
        %1183 = vmatpush.msra.mxu0 0.0
        %1184 = vmatpush.msra.mxu0 0.0
        %1185 = vmatpush.msra.mxu0 0.0
        %1186 = vmatpush.msra.mxu0 0.0
        %1187 = vmatpush.msra.mxu0 0.0
        %1188 = vmatpush.msra.mxu0 0.0
        %1189 = vmatpush.msra.mxu0 0.0
        %1190 = vmatpush.msra.mxu0 0.0
        %1191 = vmatpush.msra.mxu0 %v1140
        %1192 = vmatpush.msra.mxu0 %v1138
        %1193 = vmatpush.msra.mxu0 %v1136
        %1194 = vmatpush.msra.mxu0 %v1134
        %1195 = vmatpush.msra.mxu0 %v1132
        %1196 = vmatpush.msra.mxu0 %v1130
        %1197 = vmatpush.msra.mxu0 %v1128
        %1198 = vmatpush.msra.mxu0 %v1126
        %1199 = vmatmul.f32.gmra.mxu0 %v1143
        %v1200 = vpop.f32.mrf.mxu0
        %v1201 = vadd.f32 %v1172, %v1200
        %1202 = vmatmul.f32.gmra.mxu0 %v1146
        %v1203 = vpop.f32.mrf.mxu0
        %v1204 = vadd.f32 %v1175, %v1203
        %1205 = vmatmul.f32.gmra.mxu0 %v1149
        %v1206 = vpop.f32.mrf.mxu0
        %v1207 = vadd.f32 %v1178, %v1206
        %1208 = vmatmul.f32.gmra.mxu0 %v1152
        %v1209 = vpop.f32.mrf.mxu0
        %v1210 = vadd.f32 %v1181, %v1209
        %1211 = vdwg.mxu0
        %1212 = vmatpush.msra.mxu0 %v1125
        %1213 = vmatpush.msra.mxu0 %v1123
        %1214 = vmatpush.msra.mxu0 %v1121
        %1215 = vmatpush.msra.mxu0 %v1119
        %1216 = vmatpush.msra.mxu0 %v1117
        %1217 = vmatpush.msra.mxu0 %v1115
        %1218 = vmatpush.msra.mxu0 %v1113
        %1219 = vmatpush.msra.mxu0 %v1111
        %1220 = vmatpush.msra.mxu0 %v1109
        %1221 = vmatpush.msra.mxu0 %v1107
        %1222 = vmatpush.msra.mxu0 %v1105
        %1223 = vmatpush.msra.mxu0 %v1103
        %1224 = vmatpush.msra.mxu0 %v1101
        %1225 = vmatpush.msra.mxu0 %v1099
        %1226 = vmatpush.msra.mxu0 %v1097
        %1227 = vmatpush.msra.mxu0 %v1095
        %1228 = vmatmul.f32.gmra.mxu0 %v1053
        %v1229 = vpop.f32.mrf.mxu0
        %v1230 = vadd.f32 0.0, %v1229
        %1231 = vmatmul.f32.gmra.mxu0 %v1056
        %v1232 = vpop.f32.mrf.mxu0
        %v1233 = vadd.f32 0.0, %v1232
        %1234 = vmatmul.f32.gmra.mxu0 %v1059
        %v1235 = vpop.f32.mrf.mxu0
        %v1236 = vadd.f32 0.0, %v1235
        %1237 = vmatmul.f32.gmra.mxu0 %v1062
        %v1238 = vpop.f32.mrf.mxu0
        %v1239 = vadd.f32 0.0, %v1238
        %1240 = vdwg.mxu0
        %1241 = vmatpush.msra.mxu0 0.0
        %1242 = vmatpush.msra.mxu0 0.0
        %1243 = vmatpush.msra.mxu0 0.0
        %1244 = vmatpush.msra.mxu0 0.0
        %1245 = vmatpush.msra.mxu0 0.0
        %1246 = vmatpush.msra.mxu0 0.0
        %1247 = vmatpush.msra.mxu0 0.0
        %1248 = vmatpush.msra.mxu0 0.0
        %1249 = vmatpush.msra.mxu0 %v1141
        %1250 = vmatpush.msra.mxu0 %v1139
        %1251 = vmatpush.msra.mxu0 %v1137
        %1252 = vmatpush.msra.mxu0 %v1135
        %1253 = vmatpush.msra.mxu0 %v1133
        %1254 = vmatpush.msra.mxu0 %v1131
        %1255 = vmatpush.msra.mxu0 %v1129
        %1256 = vmatpush.msra.mxu0 %v1127
        %1257 = vmatmul.f32.gmra.mxu0 %v1143
        %v1258 = vpop.f32.mrf.mxu0
        %v1259 = vadd.f32 %v1230, %v1258
        %1260 = vmatmul.f32.gmra.mxu0 %v1146
        %v1261 = vpop.f32.mrf.mxu0
        %v1262 = vadd.f32 %v1233, %v1261
        %1263 = vmatmul.f32.gmra.mxu0 %v1149
        %v1264 = vpop.f32.mrf.mxu0
        %v1265 = vadd.f32 %v1236, %v1264
        %1266 = vmatmul.f32.gmra.mxu0 %v1152
        %v1267 = vpop.f32.mrf.mxu0
        %v1268 = vadd.f32 %v1239, %v1267
        %1269 = vdwg.mxu0
        %v1270 = vadd.f32 %v949, %v1201
        %v1271 = vadd.f32 %v1007, %v1259
        %v1272 = vadd.f32 %v952, %v1204
        %v1273 = vadd.f32 %v1010, %v1262
        %v1274 = vadd.f32 %v955, %v1207
        %v1275 = vadd.f32 %v1013, %v1265
        %v1276 = vadd.f32 %v958, %v1210
        %v1277 = vadd.f32 %v1016, %v1268
        %s1278 = scalar_lea.vmem %s1, 96
        %v1279 = vld [vmem:[%s1278] sm:$0xff]
        %v1280 = vld [vmem:[%s1278 + $0x8] sm:$0xff]
        %v1281 = vld [vmem:[%s1278 + $0x10] sm:$0xff]
        %v1282 = vld [vmem:[%s1278 + $0x18] sm:$0xff]
        %v1284 = vsel %vm519, %v1279, 0
        %v1287 = vsel %vm519, %v1280, 0
        %v1290 = vsel %vm519, %v1281, 0
        %v1293 = vsel %vm519, %v1282, 0
        %1295 = vmatpush.msra.mxu0 0.0
        %1296 = vmatpush.msra.mxu0 0.0
        %1297 = vmatpush.msra.mxu0 0.0
        %1298 = vmatpush.msra.mxu0 0.0
        %1299 = vmatpush.msra.mxu0 0.0
        %1300 = vmatpush.msra.mxu0 0.0
        %1301 = vmatpush.msra.mxu0 0.0
        %1302 = vmatpush.msra.mxu0 0.0
        %1303 = vmatpush.msra.mxu0 %v513
        %1304 = vmatpush.msra.mxu0 %v511
        %1305 = vmatpush.msra.mxu0 %v509
        %1306 = vmatpush.msra.mxu0 %v507
        %1307 = vmatpush.msra.mxu0 %v505
        %1308 = vmatpush.msra.mxu0 %v503
        %1309 = vmatpush.msra.mxu0 %v501
        %1310 = vmatpush.msra.mxu0 %v499
        %1311 = vmatmul.f32.gmra.mxu0 %v1284
        %v1312 = vpop.f32.mrf.mxu0
        %v1313 = vadd.f32 0.0, %v1312
        %1314 = vmatmul.f32.gmra.mxu0 %v1287
        %v1315 = vpop.f32.mrf.mxu0
        %v1316 = vadd.f32 0.0, %v1315
        %1317 = vmatmul.f32.gmra.mxu0 %v1290
        %v1318 = vpop.f32.mrf.mxu0
        %v1319 = vadd.f32 0.0, %v1318
        %1320 = vmatmul.f32.gmra.mxu0 %v1293
        %v1321 = vpop.f32.mrf.mxu0
        %v1322 = vadd.f32 0.0, %v1321
        %1323 = vdwg.mxu0
        %1324 = vmatpush.msra.mxu0 0.0
        %1325 = vmatpush.msra.mxu0 0.0
        %1326 = vmatpush.msra.mxu0 0.0
        %1327 = vmatpush.msra.mxu0 0.0
        %1328 = vmatpush.msra.mxu0 0.0
        %1329 = vmatpush.msra.mxu0 0.0
        %1330 = vmatpush.msra.mxu0 0.0
        %1331 = vmatpush.msra.mxu0 0.0
        %1332 = vmatpush.msra.mxu0 %v514
        %1333 = vmatpush.msra.mxu0 %v512
        %1334 = vmatpush.msra.mxu0 %v510
        %1335 = vmatpush.msra.mxu0 %v508
        %1336 = vmatpush.msra.mxu0 %v506
        %1337 = vmatpush.msra.mxu0 %v504
        %1338 = vmatpush.msra.mxu0 %v502
        %1339 = vmatpush.msra.mxu0 %v500
        %1340 = vmatmul.f32.gmra.mxu0 %v1284
        %v1341 = vpop.f32.mrf.mxu0
        %v1342 = vadd.f32 0.0, %v1341
        %1343 = vmatmul.f32.gmra.mxu0 %v1287
        %v1344 = vpop.f32.mrf.mxu0
        %v1345 = vadd.f32 0.0, %v1344
        %1346 = vmatmul.f32.gmra.mxu0 %v1290
        %v1347 = vpop.f32.mrf.mxu0
        %v1348 = vadd.f32 0.0, %v1347
        %1349 = vmatmul.f32.gmra.mxu0 %v1293
        %v1350 = vpop.f32.mrf.mxu0
        %v1351 = vadd.f32 0.0, %v1350
        %1352 = vdwg.mxu0
        %s1353 = scalar_lea.vmem [#allocation2], 1152
        %v1354 = vld [vmem:[%s1353] sm:$0xff]
        %v1355 = vld [vmem:[%s1353 + $0x8] sm:$0xff]
        %v1356 = vld [vmem:[%s1353 + $0x10] sm:$0xff]
        %v1357 = vld [vmem:[%s1353 + $0x18] sm:$0xff]
        %v1358 = vld [vmem:[%s1353 + $0x20] sm:$0xff]
        %v1359 = vld [vmem:[%s1353 + $0x28] sm:$0xff]
        %v1360 = vld [vmem:[%s1353 + $0x30] sm:$0xff]
        %v1361 = vld [vmem:[%s1353 + $0x38] sm:$0xff]
        %v1362 = vld [vmem:[%s1353 + $0x40] sm:$0xff]
        %v1363 = vld [vmem:[%s1353 + $0x48] sm:$0xff]
        %v1364 = vld [vmem:[%s1353 + $0x50] sm:$0xff]
        %v1365 = vld [vmem:[%s1353 + $0x58] sm:$0xff]
        %v1366 = vld [vmem:[%s1353 + $0x60] sm:$0xff]
        %v1367 = vld [vmem:[%s1353 + $0x68] sm:$0xff]
        %v1368 = vld [vmem:[%s1353 + $0x70] sm:$0xff]
        %v1369 = vld [vmem:[%s1353 + $0x78] sm:$0xff]
        %v1370 = vld [vmem:[%s1353 + $0x80] sm:$0xff]
        %v1371 = vld [vmem:[%s1353 + $0x88] sm:$0xff]
        %v1372 = vld [vmem:[%s1353 + $0x90] sm:$0xff]
        %v1373 = vld [vmem:[%s1353 + $0x98] sm:$0xff]
        %v1374 = vld [vmem:[%s1353 + $0xa0] sm:$0xff]
        %v1375 = vld [vmem:[%s1353 + $0xa8] sm:$0xff]
        %v1376 = vld [vmem:[%s1353 + $0xb0] sm:$0xff]
        %v1377 = vld [vmem:[%s1353 + $0xb8] sm:$0xff]
        %v1378 = vld [vmem:[%s1353 + $0xc0] sm:$0xff]
        %v1379 = vld [vmem:[%s1353 + $0xc8] sm:$0xff]
        %v1380 = vld [vmem:[%s1353 + $0xd0] sm:$0xff]
        %v1381 = vld [vmem:[%s1353 + $0xd8] sm:$0xff]
        %v1382 = vld [vmem:[%s1353 + $0xe0] sm:$0xff]
        %v1383 = vld [vmem:[%s1353 + $0xe8] sm:$0xff]
        %v1384 = vld [vmem:[%s1353 + $0xf0] sm:$0xff]
        %v1385 = vld [vmem:[%s1353 + $0xf8] sm:$0xff]
        %v1386 = vld [vmem:[%s1353 + $0x100] sm:$0xff]
        %v1387 = vld [vmem:[%s1353 + $0x108] sm:$0xff]
        %v1388 = vld [vmem:[%s1353 + $0x110] sm:$0xff]
        %v1389 = vld [vmem:[%s1353 + $0x118] sm:$0xff]
        %v1390 = vld [vmem:[%s1353 + $0x120] sm:$0xff]
        %v1391 = vld [vmem:[%s1353 + $0x128] sm:$0xff]
        %v1392 = vld [vmem:[%s1353 + $0x130] sm:$0xff]
        %v1393 = vld [vmem:[%s1353 + $0x138] sm:$0xff]
        %v1394 = vld [vmem:[%s1353 + $0x140] sm:$0xff]
        %v1395 = vld [vmem:[%s1353 + $0x148] sm:$0xff]
        %v1396 = vld [vmem:[%s1353 + $0x150] sm:$0xff]
        %v1397 = vld [vmem:[%s1353 + $0x158] sm:$0xff]
        %v1398 = vld [vmem:[%s1353 + $0x160] sm:$0xff]
        %v1399 = vld [vmem:[%s1353 + $0x168] sm:$0xff]
        %v1400 = vld [vmem:[%s1353 + $0x170] sm:$0xff]
        %v1401 = vld [vmem:[%s1353 + $0x178] sm:$0xff]
        %v1403 = vsel %vm519, %v1342, 0
        %v1406 = vsel %vm519, %v1345, 0
        %v1409 = vsel %vm519, %v1348, 0
        %v1412 = vsel %vm519, %v1351, 0
        %1414 = vmatpush.msra.mxu0 %v1384
        %1415 = vmatpush.msra.mxu0 %v1382
        %1416 = vmatpush.msra.mxu0 %v1380
        %1417 = vmatpush.msra.mxu0 %v1378
        %1418 = vmatpush.msra.mxu0 %v1376
        %1419 = vmatpush.msra.mxu0 %v1374
        %1420 = vmatpush.msra.mxu0 %v1372
        %1421 = vmatpush.msra.mxu0 %v1370
        %1422 = vmatpush.msra.mxu0 %v1368
        %1423 = vmatpush.msra.mxu0 %v1366
        %1424 = vmatpush.msra.mxu0 %v1364
        %1425 = vmatpush.msra.mxu0 %v1362
        %1426 = vmatpush.msra.mxu0 %v1360
        %1427 = vmatpush.msra.mxu0 %v1358
        %1428 = vmatpush.msra.mxu0 %v1356
        %1429 = vmatpush.msra.mxu0 %v1354
        %1430 = vmatmul.f32.gmra.mxu0 %v1313
        %v1431 = vpop.f32.mrf.mxu0
        %v1432 = vadd.f32 0.0, %v1431
        %1433 = vmatmul.f32.gmra.mxu0 %v1316
        %v1434 = vpop.f32.mrf.mxu0
        %v1435 = vadd.f32 0.0, %v1434
        %1436 = vmatmul.f32.gmra.mxu0 %v1319
        %v1437 = vpop.f32.mrf.mxu0
        %v1438 = vadd.f32 0.0, %v1437
        %1439 = vmatmul.f32.gmra.mxu0 %v1322
        %v1440 = vpop.f32.mrf.mxu0
        %v1441 = vadd.f32 0.0, %v1440
        %1442 = vdwg.mxu0
        %1443 = vmatpush.msra.mxu0 0.0
        %1444 = vmatpush.msra.mxu0 0.0
        %1445 = vmatpush.msra.mxu0 0.0
        %1446 = vmatpush.msra.mxu0 0.0
        %1447 = vmatpush.msra.mxu0 0.0
        %1448 = vmatpush.msra.mxu0 0.0
        %1449 = vmatpush.msra.mxu0 0.0
        %1450 = vmatpush.msra.mxu0 0.0
        %1451 = vmatpush.msra.mxu0 %v1400
        %1452 = vmatpush.msra.mxu0 %v1398
        %1453 = vmatpush.msra.mxu0 %v1396
        %1454 = vmatpush.msra.mxu0 %v1394
        %1455 = vmatpush.msra.mxu0 %v1392
        %1456 = vmatpush.msra.mxu0 %v1390
        %1457 = vmatpush.msra.mxu0 %v1388
        %1458 = vmatpush.msra.mxu0 %v1386
        %1459 = vmatmul.f32.gmra.mxu0 %v1403
        %v1460 = vpop.f32.mrf.mxu0
        %v1461 = vadd.f32 %v1432, %v1460
        %1462 = vmatmul.f32.gmra.mxu0 %v1406
        %v1463 = vpop.f32.mrf.mxu0
        %v1464 = vadd.f32 %v1435, %v1463
        %1465 = vmatmul.f32.gmra.mxu0 %v1409
        %v1466 = vpop.f32.mrf.mxu0
        %v1467 = vadd.f32 %v1438, %v1466
        %1468 = vmatmul.f32.gmra.mxu0 %v1412
        %v1469 = vpop.f32.mrf.mxu0
        %v1470 = vadd.f32 %v1441, %v1469
        %1471 = vdwg.mxu0
        %1472 = vmatpush.msra.mxu0 %v1385
        %1473 = vmatpush.msra.mxu0 %v1383
        %1474 = vmatpush.msra.mxu0 %v1381
        %1475 = vmatpush.msra.mxu0 %v1379
        %1476 = vmatpush.msra.mxu0 %v1377
        %1477 = vmatpush.msra.mxu0 %v1375
        %1478 = vmatpush.msra.mxu0 %v1373
        %1479 = vmatpush.msra.mxu0 %v1371
        %1480 = vmatpush.msra.mxu0 %v1369
        %1481 = vmatpush.msra.mxu0 %v1367
        %1482 = vmatpush.msra.mxu0 %v1365
        %1483 = vmatpush.msra.mxu0 %v1363
        %1484 = vmatpush.msra.mxu0 %v1361
        %1485 = vmatpush.msra.mxu0 %v1359
        %1486 = vmatpush.msra.mxu0 %v1357
        %1487 = vmatpush.msra.mxu0 %v1355
        %1488 = vmatmul.f32.gmra.mxu0 %v1313
        %v1489 = vpop.f32.mrf.mxu0
        %v1490 = vadd.f32 0.0, %v1489
        %1491 = vmatmul.f32.gmra.mxu0 %v1316
        %v1492 = vpop.f32.mrf.mxu0
        %v1493 = vadd.f32 0.0, %v1492
        %1494 = vmatmul.f32.gmra.mxu0 %v1319
        %v1495 = vpop.f32.mrf.mxu0
        %v1496 = vadd.f32 0.0, %v1495
        %1497 = vmatmul.f32.gmra.mxu0 %v1322
        %v1498 = vpop.f32.mrf.mxu0
        %v1499 = vadd.f32 0.0, %v1498
        %1500 = vdwg.mxu0
        %1501 = vmatpush.msra.mxu0 0.0
        %1502 = vmatpush.msra.mxu0 0.0
        %1503 = vmatpush.msra.mxu0 0.0
        %1504 = vmatpush.msra.mxu0 0.0
        %1505 = vmatpush.msra.mxu0 0.0
        %1506 = vmatpush.msra.mxu0 0.0
        %1507 = vmatpush.msra.mxu0 0.0
        %1508 = vmatpush.msra.mxu0 0.0
        %1509 = vmatpush.msra.mxu0 %v1401
        %1510 = vmatpush.msra.mxu0 %v1399
        %1511 = vmatpush.msra.mxu0 %v1397
        %1512 = vmatpush.msra.mxu0 %v1395
        %1513 = vmatpush.msra.mxu0 %v1393
        %1514 = vmatpush.msra.mxu0 %v1391
        %1515 = vmatpush.msra.mxu0 %v1389
        %1516 = vmatpush.msra.mxu0 %v1387
        %1517 = vmatmul.f32.gmra.mxu0 %v1403
        %v1518 = vpop.f32.mrf.mxu0
        %v1519 = vadd.f32 %v1490, %v1518
        %1520 = vmatmul.f32.gmra.mxu0 %v1406
        %v1521 = vpop.f32.mrf.mxu0
        %v1522 = vadd.f32 %v1493, %v1521
        %1523 = vmatmul.f32.gmra.mxu0 %v1409
        %v1524 = vpop.f32.mrf.mxu0
        %v1525 = vadd.f32 %v1496, %v1524
        %1526 = vmatmul.f32.gmra.mxu0 %v1412
        %v1527 = vpop.f32.mrf.mxu0
        %v1528 = vadd.f32 %v1499, %v1527
        %1529 = vdwg.mxu0
        %v1530 = vadd.f32 %v1270, %v1461
        %v1531 = vadd.f32 %v1271, %v1519
        %v1532 = vadd.f32 %v1272, %v1464
        %v1533 = vadd.f32 %v1273, %v1522
        %v1534 = vadd.f32 %v1274, %v1467
        %v1535 = vadd.f32 %v1275, %v1525
        %v1536 = vadd.f32 %v1276, %v1470
        %v1537 = vadd.f32 %v1277, %v1528
        %v1538 = vadd.f32 %v1530, %v1532
        %v1539 = vadd.f32 %v1538, %v1534
        %v1540 = vadd.f32 %v1539, %v1536
        %v1541 = vrot.slane %v1540, 4
        %v1542 = vadd.f32 %v1540, %v1541
        %v1543 = vrot.slane %v1542, 2
        %v1544 = vadd.f32 %v1542, %v1543
        %v1545 = vrot.slane %v1544, 1
        %v1546 = vadd.f32 %v1544, %v1545
        %v1547 = vadd.f32 %v1531, %v1533
        %v1548 = vadd.f32 %v1547, %v1535
        %v1549 = vadd.f32 %v1548, %v1537
        %v1550 = vrot.slane %v1549, 4
        %v1551 = vadd.f32 %v1549, %v1550
        %v1552 = vrot.slane %v1551, 2
        %v1553 = vadd.f32 %v1551, %v1552
        %v1554 = vrot.slane %v1553, 1
        %v1555 = vadd.f32 %v1553, %v1554
        %v1556 = vld [vmem:[%s3] sm:$0xff]
        %v1557 = vld [vmem:[%s3 + $0x8] sm:$0xff]
        %v1558 = vld [vmem:[%s3 + $0x10] sm:$0xff]
        %v1559 = vld [vmem:[%s3 + $0x18] sm:$0xff]
        %v1560 = vld [vmem:[%s3 + $0x20] sm:$0xff]
        %v1561 = vld [vmem:[%s3 + $0x28] sm:$0xff]
        %v1562 = vld [vmem:[%s3 + $0x30] sm:$0xff]
        %v1563 = vld [vmem:[%s3 + $0x38] sm:$0xff]
        %v1564 = vld [vmem:[%s3 + $0x40] sm:$0xff]
        %v1565 = vld [vmem:[%s3 + $0x48] sm:$0xff]
        %v1566 = vld [vmem:[%s3 + $0x50] sm:$0xff]
        %v1567 = vld [vmem:[%s3 + $0x58] sm:$0xff]
        %v1568 = vld [vmem:[%s3 + $0x60] sm:$0xff]
        %v1569 = vld [vmem:[%s3 + $0x68] sm:$0xff]
        %v1570 = vld [vmem:[%s3 + $0x70] sm:$0xff]
        %v1571 = vld [vmem:[%s3 + $0x78] sm:$0xff]
        %v1572 = vld [vmem:[%s3 + $0x80] sm:$0xff]
        %v1573 = vld [vmem:[%s3 + $0x88] sm:$0xff]
        %v1574 = vld [vmem:[%s3 + $0x90] sm:$0xff]
        %v1575 = vld [vmem:[%s3 + $0x98] sm:$0xff]
        %v1576 = vld [vmem:[%s3 + $0xa0] sm:$0xff]
        %v1577 = vld [vmem:[%s3 + $0xa8] sm:$0xff]
        %v1578 = vld [vmem:[%s3 + $0xb0] sm:$0xff]
        %v1579 = vld [vmem:[%s3 + $0xb8] sm:$0xff]
        %v1580 = vld [vmem:[%s3 + $0xc0] sm:$0xff]
        %v1581 = vld [vmem:[%s3 + $0xc8] sm:$0xff]
        %v1582 = vld [vmem:[%s3 + $0xd0] sm:$0xff]
        %v1583 = vld [vmem:[%s3 + $0xd8] sm:$0xff]
        %v1584 = vld [vmem:[%s3 + $0xe0] sm:$0xff]
        %v1585 = vld [vmem:[%s3 + $0xe8] sm:$0xff]
        %v1586 = vld [vmem:[%s3 + $0xf0] sm:$0xff]
        %v1587 = vld [vmem:[%s3 + $0xf8] sm:$0xff]
        %1588 = vmatpush.msra.mxu0 %v1571
        %1589 = vmatpush.msra.mxu0 %v1570
        %1590 = vmatpush.msra.mxu0 %v1569
        %1591 = vmatpush.msra.mxu0 %v1568
        %1592 = vmatpush.msra.mxu0 %v1567
        %1593 = vmatpush.msra.mxu0 %v1566
        %1594 = vmatpush.msra.mxu0 %v1565
        %1595 = vmatpush.msra.mxu0 %v1564
        %1596 = vmatpush.msra.mxu0 %v1563
        %1597 = vmatpush.msra.mxu0 %v1562
        %1598 = vmatpush.msra.mxu0 %v1561
        %1599 = vmatpush.msra.mxu0 %v1560
        %1600 = vmatpush.msra.mxu0 %v1559
        %1601 = vmatpush.msra.mxu0 %v1558
        %1602 = vmatpush.msra.mxu0 %v1557
        %1603 = vmatpush.msra.mxu0 %v1556
        %1604 = vmatmul.f32.gmra.mxu0 %v1546
        %v1605 = vpop.f32.mrf.mxu0
        %v1606 = vadd.f32 0.0, %v1605
        %1607 = vdwg.mxu0
        %1608 = vmatpush.msra.mxu0 %v1587
        %1609 = vmatpush.msra.mxu0 %v1586
        %1610 = vmatpush.msra.mxu0 %v1585
        %1611 = vmatpush.msra.mxu0 %v1584
        %1612 = vmatpush.msra.mxu0 %v1583
        %1613 = vmatpush.msra.mxu0 %v1582
        %1614 = vmatpush.msra.mxu0 %v1581
        %1615 = vmatpush.msra.mxu0 %v1580
        %1616 = vmatpush.msra.mxu0 %v1579
        %1617 = vmatpush.msra.mxu0 %v1578
        %1618 = vmatpush.msra.mxu0 %v1577
        %1619 = vmatpush.msra.mxu0 %v1576
        %1620 = vmatpush.msra.mxu0 %v1575
        %1621 = vmatpush.msra.mxu0 %v1574
        %1622 = vmatpush.msra.mxu0 %v1573
        %1623 = vmatpush.msra.mxu0 %v1572
        %1624 = vmatmul.f32.gmra.mxu0 %v1555
        %v1625 = vpop.f32.mrf.mxu0
        %v1626 = vadd.f32 %v1606, %v1625
        %1627 = vdwg.mxu0
        %v1628 = vmul.f32 %v1626, 0.0009765625
        %v1629 = vld [vmem:[%s4] sm:$0xff]
        %v1630 = vld [vmem:[%s4 + $0x8] sm:$0xff]
        %vm1631 = vcmask 64512
        %v1633 = vsel %vm1631, %v1628, 0
        %1635 = vmatpush.msra.mxu0 0.0
        %1636 = vmatpush.msra.mxu0 0.0
        %1637 = vmatpush.msra.mxu0 0.0
        %1638 = vmatpush.msra.mxu0 0.0
        %1639 = vmatpush.msra.mxu0 0.0
        %1640 = vmatpush.msra.mxu0 0.0
        %1641 = vmatpush.msra.mxu0 0.0
        %1642 = vmatpush.msra.mxu0 0.0
        %1643 = vmatpush.msra.mxu0 0.0
        %1644 = vmatpush.msra.mxu0 0.0
        %1645 = vmatpush.msra.mxu0 0.0
        %1646 = vmatpush.msra.mxu0 0.0
        %1647 = vmatpush.msra.mxu0 0.0
        %1648 = vmatpush.msra.mxu0 0.0
        %1649 = vmatpush.msra.mxu0 0.0
        %1650 = vmatpush.msra.mxu0 %v1629
        %1651 = vmatmul.f32.gmra.mxu0 %v1633
        %v1652 = vpop.f32.mrf.mxu0
        %v1653 = vadd.f32 0.0, %v1652
        %1654 = vdwg.mxu0
        %1655 = vmatpush.msra.mxu0 0.0
        %1656 = vmatpush.msra.mxu0 0.0
        %1657 = vmatpush.msra.mxu0 0.0
        %1658 = vmatpush.msra.mxu0 0.0
        %1659 = vmatpush.msra.mxu0 0.0
        %1660 = vmatpush.msra.mxu0 0.0
        %1661 = vmatpush.msra.mxu0 0.0
        %1662 = vmatpush.msra.mxu0 0.0
        %1663 = vmatpush.msra.mxu0 0.0
        %1664 = vmatpush.msra.mxu0 0.0
        %1665 = vmatpush.msra.mxu0 0.0
        %1666 = vmatpush.msra.mxu0 0.0
        %1667 = vmatpush.msra.mxu0 0.0
        %1668 = vmatpush.msra.mxu0 0.0
        %1669 = vmatpush.msra.mxu0 0.0
        %1670 = vmatpush.msra.mxu0 %v1630
        %1671 = vmatmul.f32.gmra.mxu0 %v1633
        %v1672 = vpop.f32.mrf.mxu0
        %v1673 = vadd.f32 0.0, %v1672
        %1674 = vdwg.mxu0
        %v1675 = vperm.slane %v1653, 0
        %v1676 = vperm.slane %v1673, 0
        %v1677 = vsub.f32 %v1530, %v1675
        %v1678 = vsub.f32 %v1531, %v1676
        %v1679 = vsub.f32 %v1532, %v1675
        %v1680 = vsub.f32 %v1533, %v1676
        %v1681 = vsub.f32 %v1534, %v1675
        %v1682 = vsub.f32 %v1535, %v1676
        %v1683 = vsub.f32 %v1536, %v1675
        %v1684 = vsub.f32 %v1537, %v1676
        %v1685 = vmul.f32 %v1677, %v1677
        %v1686 = vmul.f32 %v1678, %v1678
        %v1687 = vmul.f32 %v1679, %v1679
        %v1688 = vmul.f32 %v1680, %v1680
        %v1689 = vmul.f32 %v1681, %v1681
        %v1690 = vmul.f32 %v1682, %v1682
        %v1691 = vmul.f32 %v1683, %v1683
        %v1692 = vmul.f32 %v1684, %v1684
        %v1693 = vadd.f32 %v1685, %v1687
        %v1694 = vadd.f32 %v1693, %v1689
        %v1695 = vadd.f32 %v1694, %v1691
        %v1696 = vrot.slane %v1695, 4
        %v1697 = vadd.f32 %v1695, %v1696
        %v1698 = vrot.slane %v1697, 2
        %v1699 = vadd.f32 %v1697, %v1698
        %v1700 = vrot.slane %v1699, 1
        %v1701 = vadd.f32 %v1699, %v1700
        %v1702 = vadd.f32 %v1686, %v1688
        %v1703 = vadd.f32 %v1702, %v1690
        %v1704 = vadd.f32 %v1703, %v1692
        %v1705 = vrot.slane %v1704, 4
        %v1706 = vadd.f32 %v1704, %v1705
        %v1707 = vrot.slane %v1706, 2
        %v1708 = vadd.f32 %v1706, %v1707
        %v1709 = vrot.slane %v1708, 1
        %v1710 = vadd.f32 %v1708, %v1709
        %1711 = vmatpush.msra.mxu0 %v1571
        %1712 = vmatpush.msra.mxu0 %v1570
        %1713 = vmatpush.msra.mxu0 %v1569
        %1714 = vmatpush.msra.mxu0 %v1568
        %1715 = vmatpush.msra.mxu0 %v1567
        %1716 = vmatpush.msra.mxu0 %v1566
        %1717 = vmatpush.msra.mxu0 %v1565
        %1718 = vmatpush.msra.mxu0 %v1564
        %1719 = vmatpush.msra.mxu0 %v1563
        %1720 = vmatpush.msra.mxu0 %v1562
        %1721 = vmatpush.msra.mxu0 %v1561
        %1722 = vmatpush.msra.mxu0 %v1560
        %1723 = vmatpush.msra.mxu0 %v1559
        %1724 = vmatpush.msra.mxu0 %v1558
        %1725 = vmatpush.msra.mxu0 %v1557
        %1726 = vmatpush.msra.mxu0 %v1556
        %1727 = vmatmul.f32.gmra.mxu0 %v1701
        %v1728 = vpop.f32.mrf.mxu0
        %v1729 = vadd.f32 0.0, %v1728
        %1730 = vdwg.mxu0
        %1731 = vmatpush.msra.mxu0 %v1587
        %1732 = vmatpush.msra.mxu0 %v1586
        %1733 = vmatpush.msra.mxu0 %v1585
        %1734 = vmatpush.msra.mxu0 %v1584
        %1735 = vmatpush.msra.mxu0 %v1583
        %1736 = vmatpush.msra.mxu0 %v1582
        %1737 = vmatpush.msra.mxu0 %v1581
        %1738 = vmatpush.msra.mxu0 %v1580
        %1739 = vmatpush.msra.mxu0 %v1579
        %1740 = vmatpush.msra.mxu0 %v1578
        %1741 = vmatpush.msra.mxu0 %v1577
        %1742 = vmatpush.msra.mxu0 %v1576
        %1743 = vmatpush.msra.mxu0 %v1575
        %1744 = vmatpush.msra.mxu0 %v1574
        %1745 = vmatpush.msra.mxu0 %v1573
        %1746 = vmatpush.msra.mxu0 %v1572
        %1747 = vmatmul.f32.gmra.mxu0 %v1710
        %v1748 = vpop.f32.mrf.mxu0
        %v1749 = vadd.f32 %v1729, %v1748
        %1750 = vdwg.mxu0
        %v1751 = vmul.f32 %v1749, 0.0009765625
        %v1752 = vadd.f32 %v1751, 1e-05
        %v1753 = vrsqrt.pop %v1752
        %v1754 = vmul.f32 %v1753, %v1752
        %v1755 = vmul.f32 %v1754, %v1753
        %v1756 = vmul.f32 0.5, %v1755
        %v1757 = vsub.f32 1.5, %v1756
        %v1758 = vmul.f32 %v1753, %v1757
        %vm1759 = vweird.f32 %v1752
        %vm1760 = vweird.f32 %v1753
        %vm1761 = vmor %vm1759, %vm1760
        %v1762 = vsel %vm1761, %v1753, %v1758
        %v1764 = vsel %vm1631, %v1762, 0
        %1766 = vmatpush.msra.mxu0 0.0
        %1767 = vmatpush.msra.mxu0 0.0
        %1768 = vmatpush.msra.mxu0 0.0
        %1769 = vmatpush.msra.mxu0 0.0
        %1770 = vmatpush.msra.mxu0 0.0
        %1771 = vmatpush.msra.mxu0 0.0
        %1772 = vmatpush.msra.mxu0 0.0
        %1773 = vmatpush.msra.mxu0 0.0
        %1774 = vmatpush.msra.mxu0 0.0
        %1775 = vmatpush.msra.mxu0 0.0
        %1776 = vmatpush.msra.mxu0 0.0
        %1777 = vmatpush.msra.mxu0 0.0
        %1778 = vmatpush.msra.mxu0 0.0
        %1779 = vmatpush.msra.mxu0 0.0
        %1780 = vmatpush.msra.mxu0 0.0
        %1781 = vmatpush.msra.mxu0 %v1629
        %1782 = vmatmul.f32.gmra.mxu0 %v1764
        %v1783 = vpop.f32.mrf.mxu0
        %v1784 = vadd.f32 0.0, %v1783
        %1785 = vdwg.mxu0
        %1786 = vmatpush.msra.mxu0 0.0
        %1787 = vmatpush.msra.mxu0 0.0
        %1788 = vmatpush.msra.mxu0 0.0
        %1789 = vmatpush.msra.mxu0 0.0
        %1790 = vmatpush.msra.mxu0 0.0
        %1791 = vmatpush.msra.mxu0 0.0
        %1792 = vmatpush.msra.mxu0 0.0
        %1793 = vmatpush.msra.mxu0 0.0
        %1794 = vmatpush.msra.mxu0 0.0
        %1795 = vmatpush.msra.mxu0 0.0
        %1796 = vmatpush.msra.mxu0 0.0
        %1797 = vmatpush.msra.mxu0 0.0
        %1798 = vmatpush.msra.mxu0 0.0
        %1799 = vmatpush.msra.mxu0 0.0
        %1800 = vmatpush.msra.mxu0 0.0
        %1801 = vmatpush.msra.mxu0 %v1630
        %1802 = vmatmul.f32.gmra.mxu0 %v1764
        %v1803 = vpop.f32.mrf.mxu0
        %v1804 = vadd.f32 0.0, %v1803
        %1805 = vdwg.mxu0
        %v1806 = vperm.slane %v1784, 0
        %v1807 = vperm.slane %v1804, 0
        %v1808 = vmul.f32 %v1677, %v1806
        %v1809 = vmul.f32 %v1678, %v1807
        %v1810 = vmul.f32 %v1679, %v1806
        %v1811 = vmul.f32 %v1680, %v1807
        %v1812 = vmul.f32 %v1681, %v1806
        %v1813 = vmul.f32 %v1682, %v1807
        %v1814 = vmul.f32 %v1683, %v1806
        %v1815 = vmul.f32 %v1684, %v1807
        %vm1816 = vcmp.ge.f32.partialorder %v1808, 0.0
        %vm1817 = vcmp.ge.f32.partialorder %v1809, 0.0
        %vm1818 = vcmp.ge.f32.partialorder %v1810, 0.0
        %vm1819 = vcmp.ge.f32.partialorder %v1811, 0.0
        %vm1820 = vcmp.ge.f32.partialorder %v1812, 0.0
        %vm1821 = vcmp.ge.f32.partialorder %v1813, 0.0
        %vm1822 = vcmp.ge.f32.partialorder %v1814, 0.0
        %vm1823 = vcmp.ge.f32.partialorder %v1815, 0.0
        %v1824 = vmul.f32 %v1808, 0.2
        %v1825 = vmul.f32 %v1809, 0.2
        %v1826 = vmul.f32 %v1810, 0.2
        %v1827 = vmul.f32 %v1811, 0.2
        %v1828 = vmul.f32 %v1812, 0.2
        %v1829 = vmul.f32 %v1813, 0.2
        %v1830 = vmul.f32 %v1814, 0.2
        %v1831 = vmul.f32 %v1815, 0.2
        %v1832 = vsel %vm1816, %v1808, %v1824
        %v1833 = vsel %vm1817, %v1809, %v1825
        %v1834 = vsel %vm1818, %v1810, %v1826
        %v1835 = vsel %vm1819, %v1811, %v1827
        %v1836 = vsel %vm1820, %v1812, %v1828
        %v1837 = vsel %vm1821, %v1813, %v1829
        %v1838 = vsel %vm1822, %v1814, %v1830
        %v1839 = vsel %vm1823, %v1815, %v1831
        %v1840 = vld [vmem:[%s5] sm:$0xff]
        %v1841 = vld [vmem:[%s5 + $0x8] sm:$0xff]
        %vm1842 = vcmask 261120
        %v1844 = vsel %vm1842, %v1840, 0
        %v1847 = vsel %vm1842, %v1841, 0
        %1849 = vmatpush.msra.mxu0 0.0
        %1850 = vmatpush.msra.mxu0 0.0
        %1851 = vmatpush.msra.mxu0 0.0
        %1852 = vmatpush.msra.mxu0 0.0
        %1853 = vmatpush.msra.mxu0 0.0
        %1854 = vmatpush.msra.mxu0 0.0
        %1855 = vmatpush.msra.mxu0 0.0
        %1856 = vmatpush.msra.mxu0 0.0
        %1857 = vmatpush.msra.mxu0 0.0
        %1858 = vmatpush.msra.mxu0 0.0
        %1859 = vmatpush.msra.mxu0 0.0
        %1860 = vmatpush.msra.mxu0 0.0
        %1861 = vmatpush.msra.mxu0 %v1838
        %1862 = vmatpush.msra.mxu0 %v1836
        %1863 = vmatpush.msra.mxu0 %v1834
        %1864 = vmatpush.msra.mxu0 %v1832
        %1865 = vmatmul.f32.gmra.mxu0 %v1844
        %v1866 = vpop.f32.mrf.mxu0
        %v1867 = vadd.f32 0.0, %v1866
        %1868 = vmatmul.f32.gmra.mxu0 %v1847
        %v1869 = vpop.f32.mrf.mxu0
        %v1870 = vadd.f32 0.0, %v1869
        %1871 = vdwg.mxu0
        %1872 = vmatpush.msra.mxu0 0.0
        %1873 = vmatpush.msra.mxu0 0.0
        %1874 = vmatpush.msra.mxu0 0.0
        %1875 = vmatpush.msra.mxu0 0.0
        %1876 = vmatpush.msra.mxu0 0.0
        %1877 = vmatpush.msra.mxu0 0.0
        %1878 = vmatpush.msra.mxu0 0.0
        %1879 = vmatpush.msra.mxu0 0.0
        %1880 = vmatpush.msra.mxu0 0.0
        %1881 = vmatpush.msra.mxu0 0.0
        %1882 = vmatpush.msra.mxu0 0.0
        %1883 = vmatpush.msra.mxu0 0.0
        %1884 = vmatpush.msra.mxu0 %v1839
        %1885 = vmatpush.msra.mxu0 %v1837
        %1886 = vmatpush.msra.mxu0 %v1835
        %1887 = vmatpush.msra.mxu0 %v1833
        %1888 = vmatmul.f32.gmra.mxu0 %v1844
        %v1889 = vpop.f32.mrf.mxu0
        %v1890 = vadd.f32 0.0, %v1889
        %1891 = vmatmul.f32.gmra.mxu0 %v1847
        %v1892 = vpop.f32.mrf.mxu0
        %v1893 = vadd.f32 0.0, %v1892
        %1894 = vdwg.mxu0
        %v1895 = vld [vmem:[%s6] sm:$0xff]
        %v1896 = vld [vmem:[%s6 + $0x8] sm:$0xff]
        %v1897 = vld [vmem:[%s6 + $0x10] sm:$0xff]
        %v1898 = vld [vmem:[%s6 + $0x18] sm:$0xff]
        %v1899 = vld [vmem:[%s6 + $0x20] sm:$0xff]
        %v1900 = vld [vmem:[%s6 + $0x28] sm:$0xff]
        %v1901 = vld [vmem:[%s6 + $0x30] sm:$0xff]
        %v1902 = vld [vmem:[%s6 + $0x38] sm:$0xff]
        %v1903 = vld [vmem:[%s6 + $0x40] sm:$0xff]
        %v1904 = vld [vmem:[%s6 + $0x48] sm:$0xff]
        %v1905 = vld [vmem:[%s6 + $0x50] sm:$0xff]
        %v1906 = vld [vmem:[%s6 + $0x58] sm:$0xff]
        %v1907 = vld [vmem:[%s6 + $0x60] sm:$0xff]
        %v1908 = vld [vmem:[%s6 + $0x68] sm:$0xff]
        %v1909 = vld [vmem:[%s6 + $0x70] sm:$0xff]
        %v1910 = vld [vmem:[%s6 + $0x78] sm:$0xff]
        %v1911 = vld [vmem:[%s6 + $0x80] sm:$0xff]
        %v1912 = vld [vmem:[%s6 + $0x88] sm:$0xff]
        %v1913 = vld [vmem:[%s6 + $0x90] sm:$0xff]
        %v1914 = vld [vmem:[%s6 + $0x98] sm:$0xff]
        %v1915 = vld [vmem:[%s6 + $0xa0] sm:$0xff]
        %v1916 = vld [vmem:[%s6 + $0xa8] sm:$0xff]
        %v1917 = vld [vmem:[%s6 + $0xb0] sm:$0xff]
        %v1918 = vld [vmem:[%s6 + $0xb8] sm:$0xff]
        %v1919 = vld [vmem:[%s6 + $0xc0] sm:$0xff]
        %v1920 = vld [vmem:[%s6 + $0xc8] sm:$0xff]
        %v1921 = vld [vmem:[%s6 + $0xd0] sm:$0xff]
        %v1922 = vld [vmem:[%s6 + $0xd8] sm:$0xff]
        %v1923 = vld [vmem:[%s6 + $0xe0] sm:$0xff]
        %v1924 = vld [vmem:[%s6 + $0xe8] sm:$0xff]
        %v1925 = vld [vmem:[%s6 + $0xf0] sm:$0xff]
        %v1926 = vld [vmem:[%s6 + $0xf8] sm:$0xff]
        %v1927 = vld [vmem:[%s6 + $0x100] sm:$0xff]
        %v1928 = vld [vmem:[%s6 + $0x108] sm:$0xff]
        %v1929 = vld [vmem:[%s6 + $0x110] sm:$0xff]
        %v1930 = vld [vmem:[%s6 + $0x118] sm:$0xff]
        %v1931 = vld [vmem:[%s6 + $0x120] sm:$0xff]
        %v1932 = vld [vmem:[%s6 + $0x128] sm:$0xff]
        %v1933 = vld [vmem:[%s6 + $0x130] sm:$0xff]
        %v1934 = vld [vmem:[%s6 + $0x138] sm:$0xff]
        %v1935 = vld [vmem:[%s6 + $0x140] sm:$0xff]
        %v1936 = vld [vmem:[%s6 + $0x148] sm:$0xff]
        %v1937 = vld [vmem:[%s6 + $0x150] sm:$0xff]
        %v1938 = vld [vmem:[%s6 + $0x158] sm:$0xff]
        %v1939 = vld [vmem:[%s6 + $0x160] sm:$0xff]
        %v1940 = vld [vmem:[%s6 + $0x168] sm:$0xff]
        %v1941 = vld [vmem:[%s6 + $0x170] sm:$0xff]
        %v1942 = vld [vmem:[%s6 + $0x178] sm:$0xff]
        %v1943 = vld [vmem:[%s6 + $0x180] sm:$0xff]
        %v1944 = vld [vmem:[%s6 + $0x188] sm:$0xff]
        %v1945 = vld [vmem:[%s6 + $0x190] sm:$0xff]
        %v1946 = vld [vmem:[%s6 + $0x198] sm:$0xff]
        %v1947 = vld [vmem:[%s6 + $0x1a0] sm:$0xff]
        %v1948 = vld [vmem:[%s6 + $0x1a8] sm:$0xff]
        %v1949 = vld [vmem:[%s6 + $0x1b0] sm:$0xff]
        %v1950 = vld [vmem:[%s6 + $0x1b8] sm:$0xff]
        %v1951 = vld [vmem:[%s6 + $0x1c0] sm:$0xff]
        %v1952 = vld [vmem:[%s6 + $0x1c8] sm:$0xff]
        %v1953 = vld [vmem:[%s6 + $0x1d0] sm:$0xff]
        %v1954 = vld [vmem:[%s6 + $0x1d8] sm:$0xff]
        %v1955 = vld [vmem:[%s6 + $0x1e0] sm:$0xff]
        %v1956 = vld [vmem:[%s6 + $0x1e8] sm:$0xff]
        %v1957 = vld [vmem:[%s6 + $0x1f0] sm:$0xff]
        %v1958 = vld [vmem:[%s6 + $0x1f8] sm:$0xff]
        %s1959 = scalar_lea.vmem %s5, 16
        %v1960 = vld [vmem:[%s1959] sm:$0xff]
        %v1961 = vld [vmem:[%s1959 + $0x8] sm:$0xff]
        %v1963 = vsel %vm1842, %v1960, 0
        %v1966 = vsel %vm1842, %v1961, 0
        %1968 = vmatpush.msra.mxu0 0.0
        %1969 = vmatpush.msra.mxu0 0.0
        %1970 = vmatpush.msra.mxu0 0.0
        %1971 = vmatpush.msra.mxu0 0.0
        %1972 = vmatpush.msra.mxu0 0.0
        %1973 = vmatpush.msra.mxu0 0.0
        %1974 = vmatpush.msra.mxu0 0.0
        %1975 = vmatpush.msra.mxu0 0.0
        %1976 = vmatpush.msra.mxu0 0.0
        %1977 = vmatpush.msra.mxu0 0.0
        %1978 = vmatpush.msra.mxu0 0.0
        %1979 = vmatpush.msra.mxu0 0.0
        %1980 = vmatpush.msra.mxu0 %v1838
        %1981 = vmatpush.msra.mxu0 %v1836
        %1982 = vmatpush.msra.mxu0 %v1834
        %1983 = vmatpush.msra.mxu0 %v1832
        %1984 = vmatmul.f32.gmra.mxu0 %v1963
        %v1985 = vpop.f32.mrf.mxu0
        %v1986 = vadd.f32 0.0, %v1985
        %1987 = vmatmul.f32.gmra.mxu0 %v1966
        %v1988 = vpop.f32.mrf.mxu0
        %v1989 = vadd.f32 0.0, %v1988
        %1990 = vdwg.mxu0
        %1991 = vmatpush.msra.mxu0 0.0
        %1992 = vmatpush.msra.mxu0 0.0
        %1993 = vmatpush.msra.mxu0 0.0
        %1994 = vmatpush.msra.mxu0 0.0
        %1995 = vmatpush.msra.mxu0 0.0
        %1996 = vmatpush.msra.mxu0 0.0
        %1997 = vmatpush.msra.mxu0 0.0
        %1998 = vmatpush.msra.mxu0 0.0
        %1999 = vmatpush.msra.mxu0 0.0
        %2000 = vmatpush.msra.mxu0 0.0
        %2001 = vmatpush.msra.mxu0 0.0
        %2002 = vmatpush.msra.mxu0 0.0
        %2003 = vmatpush.msra.mxu0 %v1839
        %2004 = vmatpush.msra.mxu0 %v1837
        %2005 = vmatpush.msra.mxu0 %v1835
        %2006 = vmatpush.msra.mxu0 %v1833
        %2007 = vmatmul.f32.gmra.mxu0 %v1963
        %v2008 = vpop.f32.mrf.mxu0
        %v2009 = vadd.f32 0.0, %v2008
        %2010 = vmatmul.f32.gmra.mxu0 %v1966
        %v2011 = vpop.f32.mrf.mxu0
        %v2012 = vadd.f32 0.0, %v2011
        %2013 = vdwg.mxu0
        %s2014 = scalar_lea.vmem %s6, 512
        %v2015 = vld [vmem:[%s2014] sm:$0xff]
        %v2016 = vld [vmem:[%s2014 + $0x8] sm:$0xff]
        %v2017 = vld [vmem:[%s2014 + $0x10] sm:$0xff]
        %v2018 = vld [vmem:[%s2014 + $0x18] sm:$0xff]
        %v2019 = vld [vmem:[%s2014 + $0x20] sm:$0xff]
        %v2020 = vld [vmem:[%s2014 + $0x28] sm:$0xff]
        %v2021 = vld [vmem:[%s2014 + $0x30] sm:$0xff]
        %v2022 = vld [vmem:[%s2014 + $0x38] sm:$0xff]
        %v2023 = vld [vmem:[%s2014 + $0x40] sm:$0xff]
        %v2024 = vld [vmem:[%s2014 + $0x48] sm:$0xff]
        %v2025 = vld [vmem:[%s2014 + $0x50] sm:$0xff]
        %v2026 = vld [vmem:[%s2014 + $0x58] sm:$0xff]
        %v2027 = vld [vmem:[%s2014 + $0x60] sm:$0xff]
        %v2028 = vld [vmem:[%s2014 + $0x68] sm:$0xff]
        %v2029 = vld [vmem:[%s2014 + $0x70] sm:$0xff]
        %v2030 = vld [vmem:[%s2014 + $0x78] sm:$0xff]
        %v2031 = vld [vmem:[%s2014 + $0x80] sm:$0xff]
        %v2032 = vld [vmem:[%s2014 + $0x88] sm:$0xff]
        %v2033 = vld [vmem:[%s2014 + $0x90] sm:$0xff]
        %v2034 = vld [vmem:[%s2014 + $0x98] sm:$0xff]
        %v2035 = vld [vmem:[%s2014 + $0xa0] sm:$0xff]
        %v2036 = vld [vmem:[%s2014 + $0xa8] sm:$0xff]
        %v2037 = vld [vmem:[%s2014 + $0xb0] sm:$0xff]
        %v2038 = vld [vmem:[%s2014 + $0xb8] sm:$0xff]
        %v2039 = vld [vmem:[%s2014 + $0xc0] sm:$0xff]
        %v2040 = vld [vmem:[%s2014 + $0xc8] sm:$0xff]
        %v2041 = vld [vmem:[%s2014 + $0xd0] sm:$0xff]
        %v2042 = vld [vmem:[%s2014 + $0xd8] sm:$0xff]
        %v2043 = vld [vmem:[%s2014 + $0xe0] sm:$0xff]
        %v2044 = vld [vmem:[%s2014 + $0xe8] sm:$0xff]
        %v2045 = vld [vmem:[%s2014 + $0xf0] sm:$0xff]
        %v2046 = vld [vmem:[%s2014 + $0xf8] sm:$0xff]
        %v2047 = vld [vmem:[%s2014 + $0x100] sm:$0xff]
        %v2048 = vld [vmem:[%s2014 + $0x108] sm:$0xff]
        %v2049 = vld [vmem:[%s2014 + $0x110] sm:$0xff]
        %v2050 = vld [vmem:[%s2014 + $0x118] sm:$0xff]
        %v2051 = vld [vmem:[%s2014 + $0x120] sm:$0xff]
        %v2052 = vld [vmem:[%s2014 + $0x128] sm:$0xff]
        %v2053 = vld [vmem:[%s2014 + $0x130] sm:$0xff]
        %v2054 = vld [vmem:[%s2014 + $0x138] sm:$0xff]
        %v2055 = vld [vmem:[%s2014 + $0x140] sm:$0xff]
        %v2056 = vld [vmem:[%s2014 + $0x148] sm:$0xff]
        %v2057 = vld [vmem:[%s2014 + $0x150] sm:$0xff]
        %v2058 = vld [vmem:[%s2014 + $0x158] sm:$0xff]
        %v2059 = vld [vmem:[%s2014 + $0x160] sm:$0xff]
        %v2060 = vld [vmem:[%s2014 + $0x168] sm:$0xff]
        %v2061 = vld [vmem:[%s2014 + $0x170] sm:$0xff]
        %v2062 = vld [vmem:[%s2014 + $0x178] sm:$0xff]
        %v2063 = vld [vmem:[%s2014 + $0x180] sm:$0xff]
        %v2064 = vld [vmem:[%s2014 + $0x188] sm:$0xff]
        %v2065 = vld [vmem:[%s2014 + $0x190] sm:$0xff]
        %v2066 = vld [vmem:[%s2014 + $0x198] sm:$0xff]
        %v2067 = vld [vmem:[%s2014 + $0x1a0] sm:$0xff]
        %v2068 = vld [vmem:[%s2014 + $0x1a8] sm:$0xff]
        %v2069 = vld [vmem:[%s2014 + $0x1b0] sm:$0xff]
        %v2070 = vld [vmem:[%s2014 + $0x1b8] sm:$0xff]
        %v2071 = vld [vmem:[%s2014 + $0x1c0] sm:$0xff]
        %v2072 = vld [vmem:[%s2014 + $0x1c8] sm:$0xff]
        %v2073 = vld [vmem:[%s2014 + $0x1d0] sm:$0xff]
        %v2074 = vld [vmem:[%s2014 + $0x1d8] sm:$0xff]
        %v2075 = vld [vmem:[%s2014 + $0x1e0] sm:$0xff]
        %v2076 = vld [vmem:[%s2014 + $0x1e8] sm:$0xff]
        %v2077 = vld [vmem:[%s2014 + $0x1f0] sm:$0xff]
        %v2078 = vld [vmem:[%s2014 + $0x1f8] sm:$0xff]
        %2079 = vmatpush.msra.mxu0 %v2045
        %2080 = vmatpush.msra.mxu0 %v2043
        %2081 = vmatpush.msra.mxu0 %v2041
        %2082 = vmatpush.msra.mxu0 %v2039
        %2083 = vmatpush.msra.mxu0 %v2037
        %2084 = vmatpush.msra.mxu0 %v2035
        %2085 = vmatpush.msra.mxu0 %v2033
        %2086 = vmatpush.msra.mxu0 %v2031
        %2087 = vmatpush.msra.mxu0 %v2029
        %2088 = vmatpush.msra.mxu0 %v2027
        %2089 = vmatpush.msra.mxu0 %v2025
        %2090 = vmatpush.msra.mxu0 %v2023
        %2091 = vmatpush.msra.mxu0 %v2021
        %2092 = vmatpush.msra.mxu0 %v2019
        %2093 = vmatpush.msra.mxu0 %v2017
        %2094 = vmatpush.msra.mxu0 %v2015
        %2095 = vmatmul.f32.gmra.mxu0 %v1986
        %v2096 = vpop.f32.mrf.mxu0
        %v2097 = vadd.f32 0.0, %v2096
        %2098 = vmatmul.f32.gmra.mxu0 %v1989
        %v2099 = vpop.f32.mrf.mxu0
        %v2100 = vadd.f32 0.0, %v2099
        %2101 = vdwg.mxu0
        %2102 = vmatpush.msra.mxu0 %v2077
        %2103 = vmatpush.msra.mxu0 %v2075
        %2104 = vmatpush.msra.mxu0 %v2073
        %2105 = vmatpush.msra.mxu0 %v2071
        %2106 = vmatpush.msra.mxu0 %v2069
        %2107 = vmatpush.msra.mxu0 %v2067
        %2108 = vmatpush.msra.mxu0 %v2065
        %2109 = vmatpush.msra.mxu0 %v2063
        %2110 = vmatpush.msra.mxu0 %v2061
        %2111 = vmatpush.msra.mxu0 %v2059
        %2112 = vmatpush.msra.mxu0 %v2057
        %2113 = vmatpush.msra.mxu0 %v2055
        %2114 = vmatpush.msra.mxu0 %v2053
        %2115 = vmatpush.msra.mxu0 %v2051
        %2116 = vmatpush.msra.mxu0 %v2049
        %2117 = vmatpush.msra.mxu0 %v2047
        %2118 = vmatmul.f32.gmra.mxu0 %v2009
        %v2119 = vpop.f32.mrf.mxu0
        %v2120 = vadd.f32 %v2097, %v2119
        %2121 = vmatmul.f32.gmra.mxu0 %v2012
        %v2122 = vpop.f32.mrf.mxu0
        %v2123 = vadd.f32 %v2100, %v2122
        %2124 = vdwg.mxu0
        %2125 = vmatpush.msra.mxu0 %v2046
        %2126 = vmatpush.msra.mxu0 %v2044
        %2127 = vmatpush.msra.mxu0 %v2042
        %2128 = vmatpush.msra.mxu0 %v2040
        %2129 = vmatpush.msra.mxu0 %v2038
        %2130 = vmatpush.msra.mxu0 %v2036
        %2131 = vmatpush.msra.mxu0 %v2034
        %2132 = vmatpush.msra.mxu0 %v2032
        %2133 = vmatpush.msra.mxu0 %v2030
        %2134 = vmatpush.msra.mxu0 %v2028
        %2135 = vmatpush.msra.mxu0 %v2026
        %2136 = vmatpush.msra.mxu0 %v2024
        %2137 = vmatpush.msra.mxu0 %v2022
        %2138 = vmatpush.msra.mxu0 %v2020
        %2139 = vmatpush.msra.mxu0 %v2018
        %2140 = vmatpush.msra.mxu0 %v2016
        %2141 = vmatmul.f32.gmra.mxu0 %v1986
        %v2142 = vpop.f32.mrf.mxu0
        %v2143 = vadd.f32 0.0, %v2142
        %2144 = vmatmul.f32.gmra.mxu0 %v1989
        %v2145 = vpop.f32.mrf.mxu0
        %v2146 = vadd.f32 0.0, %v2145
        %2147 = vdwg.mxu0
        %2148 = vmatpush.msra.mxu0 %v2078
        %2149 = vmatpush.msra.mxu0 %v2076
        %2150 = vmatpush.msra.mxu0 %v2074
        %2151 = vmatpush.msra.mxu0 %v2072
        %2152 = vmatpush.msra.mxu0 %v2070
        %2153 = vmatpush.msra.mxu0 %v2068
        %2154 = vmatpush.msra.mxu0 %v2066
        %2155 = vmatpush.msra.mxu0 %v2064
        %2156 = vmatpush.msra.mxu0 %v2062
        %2157 = vmatpush.msra.mxu0 %v2060
        %2158 = vmatpush.msra.mxu0 %v2058
        %2159 = vmatpush.msra.mxu0 %v2056
        %2160 = vmatpush.msra.mxu0 %v2054
        %2161 = vmatpush.msra.mxu0 %v2052
        %2162 = vmatpush.msra.mxu0 %v2050
        %2163 = vmatpush.msra.mxu0 %v2048
        %2164 = vmatmul.f32.gmra.mxu0 %v2009
        %v2165 = vpop.f32.mrf.mxu0
        %v2166 = vadd.f32 %v2143, %v2165
        %2167 = vmatmul.f32.gmra.mxu0 %v2012
        %v2168 = vpop.f32.mrf.mxu0
        %v2169 = vadd.f32 %v2146, %v2168
        %2170 = vdwg.mxu0
        %2171 = vmatpush.msra.mxu0 %v1925
        %2172 = vmatpush.msra.mxu0 %v1923
        %2173 = vmatpush.msra.mxu0 %v1921
        %2174 = vmatpush.msra.mxu0 %v1919
        %2175 = vmatpush.msra.mxu0 %v1917
        %2176 = vmatpush.msra.mxu0 %v1915
        %2177 = vmatpush.msra.mxu0 %v1913
        %2178 = vmatpush.msra.mxu0 %v1911
        %2179 = vmatpush.msra.mxu0 %v1909
        %2180 = vmatpush.msra.mxu0 %v1907
        %2181 = vmatpush.msra.mxu0 %v1905
        %2182 = vmatpush.msra.mxu0 %v1903
        %2183 = vmatpush.msra.mxu0 %v1901
        %2184 = vmatpush.msra.mxu0 %v1899
        %2185 = vmatpush.msra.mxu0 %v1897
        %2186 = vmatpush.msra.mxu0 %v1895
        %2187 = vmatmul.f32.gmra.mxu0 %v1867
        %v2188 = vpop.f32.mrf.mxu0
        %v2189 = vadd.f32 %v2120, %v2188
        %2190 = vmatmul.f32.gmra.mxu0 %v1870
        %v2191 = vpop.f32.mrf.mxu0
        %v2192 = vadd.f32 %v2123, %v2191
        %2193 = vdwg.mxu0
        %2194 = vmatpush.msra.mxu0 %v1957
        %2195 = vmatpush.msra.mxu0 %v1955
        %2196 = vmatpush.msra.mxu0 %v1953
        %2197 = vmatpush.msra.mxu0 %v1951
        %2198 = vmatpush.msra.mxu0 %v1949
        %2199 = vmatpush.msra.mxu0 %v1947
        %2200 = vmatpush.msra.mxu0 %v1945
        %2201 = vmatpush.msra.mxu0 %v1943
        %2202 = vmatpush.msra.mxu0 %v1941
        %2203 = vmatpush.msra.mxu0 %v1939
        %2204 = vmatpush.msra.mxu0 %v1937
        %2205 = vmatpush.msra.mxu0 %v1935
        %2206 = vmatpush.msra.mxu0 %v1933
        %2207 = vmatpush.msra.mxu0 %v1931
        %2208 = vmatpush.msra.mxu0 %v1929
        %2209 = vmatpush.msra.mxu0 %v1927
        %2210 = vmatmul.f32.gmra.mxu0 %v1890
        %v2211 = vpop.f32.mrf.mxu0
        %v2212 = vadd.f32 %v2189, %v2211
        %2213 = vmatmul.f32.gmra.mxu0 %v1893
        %v2214 = vpop.f32.mrf.mxu0
        %v2215 = vadd.f32 %v2192, %v2214
        %2216 = vdwg.mxu0
        %2217 = vmatpush.msra.mxu0 %v1926
        %2218 = vmatpush.msra.mxu0 %v1924
        %2219 = vmatpush.msra.mxu0 %v1922
        %2220 = vmatpush.msra.mxu0 %v1920
        %2221 = vmatpush.msra.mxu0 %v1918
        %2222 = vmatpush.msra.mxu0 %v1916
        %2223 = vmatpush.msra.mxu0 %v1914
        %2224 = vmatpush.msra.mxu0 %v1912
        %2225 = vmatpush.msra.mxu0 %v1910
        %2226 = vmatpush.msra.mxu0 %v1908
        %2227 = vmatpush.msra.mxu0 %v1906
        %2228 = vmatpush.msra.mxu0 %v1904
        %2229 = vmatpush.msra.mxu0 %v1902
        %2230 = vmatpush.msra.mxu0 %v1900
        %2231 = vmatpush.msra.mxu0 %v1898
        %2232 = vmatpush.msra.mxu0 %v1896
        %2233 = vmatmul.f32.gmra.mxu0 %v1867
        %v2234 = vpop.f32.mrf.mxu0
        %v2235 = vadd.f32 %v2166, %v2234
        %2236 = vmatmul.f32.gmra.mxu0 %v1870
        %v2237 = vpop.f32.mrf.mxu0
        %v2238 = vadd.f32 %v2169, %v2237
        %2239 = vdwg.mxu0
        %2240 = vmatpush.msra.mxu0 %v1958
        %2241 = vmatpush.msra.mxu0 %v1956
        %2242 = vmatpush.msra.mxu0 %v1954
        %2243 = vmatpush.msra.mxu0 %v1952
        %2244 = vmatpush.msra.mxu0 %v1950
        %2245 = vmatpush.msra.mxu0 %v1948
        %2246 = vmatpush.msra.mxu0 %v1946
        %2247 = vmatpush.msra.mxu0 %v1944
        %2248 = vmatpush.msra.mxu0 %v1942
        %2249 = vmatpush.msra.mxu0 %v1940
        %2250 = vmatpush.msra.mxu0 %v1938
        %2251 = vmatpush.msra.mxu0 %v1936
        %2252 = vmatpush.msra.mxu0 %v1934
        %2253 = vmatpush.msra.mxu0 %v1932
        %2254 = vmatpush.msra.mxu0 %v1930
        %2255 = vmatpush.msra.mxu0 %v1928
        %2256 = vmatmul.f32.gmra.mxu0 %v1890
        %v2257 = vpop.f32.mrf.mxu0
        %v2258 = vadd.f32 %v2235, %v2257
        %2259 = vmatmul.f32.gmra.mxu0 %v1893
        %v2260 = vpop.f32.mrf.mxu0
        %v2261 = vadd.f32 %v2238, %v2260
        %2262 = vdwg.mxu0
        %s2263 = scalar_lea.vmem %s5, 32
        %v2264 = vld [vmem:[%s2263] sm:$0xff]
        %v2265 = vld [vmem:[%s2263 + $0x8] sm:$0xff]
        %v2267 = vsel %vm1842, %v2264, 0
        %v2270 = vsel %vm1842, %v2265, 0
        %2272 = vmatpush.msra.mxu0 0.0
        %2273 = vmatpush.msra.mxu0 0.0
        %2274 = vmatpush.msra.mxu0 0.0
        %2275 = vmatpush.msra.mxu0 0.0
        %2276 = vmatpush.msra.mxu0 0.0
        %2277 = vmatpush.msra.mxu0 0.0
        %2278 = vmatpush.msra.mxu0 0.0
        %2279 = vmatpush.msra.mxu0 0.0
        %2280 = vmatpush.msra.mxu0 0.0
        %2281 = vmatpush.msra.mxu0 0.0
        %2282 = vmatpush.msra.mxu0 0.0
        %2283 = vmatpush.msra.mxu0 0.0
        %2284 = vmatpush.msra.mxu0 %v1838
        %2285 = vmatpush.msra.mxu0 %v1836
        %2286 = vmatpush.msra.mxu0 %v1834
        %2287 = vmatpush.msra.mxu0 %v1832
        %2288 = vmatmul.f32.gmra.mxu0 %v2267
        %v2289 = vpop.f32.mrf.mxu0
        %v2290 = vadd.f32 0.0, %v2289
        %2291 = vmatmul.f32.gmra.mxu0 %v2270
        %v2292 = vpop.f32.mrf.mxu0
        %v2293 = vadd.f32 0.0, %v2292
        %2294 = vdwg.mxu0
        %2295 = vmatpush.msra.mxu0 0.0
        %2296 = vmatpush.msra.mxu0 0.0
        %2297 = vmatpush.msra.mxu0 0.0
        %2298 = vmatpush.msra.mxu0 0.0
        %2299 = vmatpush.msra.mxu0 0.0
        %2300 = vmatpush.msra.mxu0 0.0
        %2301 = vmatpush.msra.mxu0 0.0
        %2302 = vmatpush.msra.mxu0 0.0
        %2303 = vmatpush.msra.mxu0 0.0
        %2304 = vmatpush.msra.mxu0 0.0
        %2305 = vmatpush.msra.mxu0 0.0
        %2306 = vmatpush.msra.mxu0 0.0
        %2307 = vmatpush.msra.mxu0 %v1839
        %2308 = vmatpush.msra.mxu0 %v1837
        %2309 = vmatpush.msra.mxu0 %v1835
        %2310 = vmatpush.msra.mxu0 %v1833
        %2311 = vmatmul.f32.gmra.mxu0 %v2267
        %v2312 = vpop.f32.mrf.mxu0
        %v2313 = vadd.f32 0.0, %v2312
        %2314 = vmatmul.f32.gmra.mxu0 %v2270
        %v2315 = vpop.f32.mrf.mxu0
        %v2316 = vadd.f32 0.0, %v2315
        %2317 = vdwg.mxu0
        %s2318 = scalar_lea.vmem %s6, 1024
        %v2319 = vld [vmem:[%s2318] sm:$0xff]
        %v2320 = vld [vmem:[%s2318 + $0x8] sm:$0xff]
        %v2321 = vld [vmem:[%s2318 + $0x10] sm:$0xff]
        %v2322 = vld [vmem:[%s2318 + $0x18] sm:$0xff]
        %v2323 = vld [vmem:[%s2318 + $0x20] sm:$0xff]
        %v2324 = vld [vmem:[%s2318 + $0x28] sm:$0xff]
        %v2325 = vld [vmem:[%s2318 + $0x30] sm:$0xff]
        %v2326 = vld [vmem:[%s2318 + $0x38] sm:$0xff]
        %v2327 = vld [vmem:[%s2318 + $0x40] sm:$0xff]
        %v2328 = vld [vmem:[%s2318 + $0x48] sm:$0xff]
        %v2329 = vld [vmem:[%s2318 + $0x50] sm:$0xff]
        %v2330 = vld [vmem:[%s2318 + $0x58] sm:$0xff]
        %v2331 = vld [vmem:[%s2318 + $0x60] sm:$0xff]
        %v2332 = vld [vmem:[%s2318 + $0x68] sm:$0xff]
        %v2333 = vld [vmem:[%s2318 + $0x70] sm:$0xff]
        %v2334 = vld [vmem:[%s2318 + $0x78] sm:$0xff]
        %v2335 = vld [vmem:[%s2318 + $0x80] sm:$0xff]
        %v2336 = vld [vmem:[%s2318 + $0x88] sm:$0xff]
        %v2337 = vld [vmem:[%s2318 + $0x90] sm:$0xff]
        %v2338 = vld [vmem:[%s2318 + $0x98] sm:$0xff]
        %v2339 = vld [vmem:[%s2318 + $0xa0] sm:$0xff]
        %v2340 = vld [vmem:[%s2318 + $0xa8] sm:$0xff]
        %v2341 = vld [vmem:[%s2318 + $0xb0] sm:$0xff]
        %v2342 = vld [vmem:[%s2318 + $0xb8] sm:$0xff]
        %v2343 = vld [vmem:[%s2318 + $0xc0] sm:$0xff]
        %v2344 = vld [vmem:[%s2318 + $0xc8] sm:$0xff]
        %v2345 = vld [vmem:[%s2318 + $0xd0] sm:$0xff]
        %v2346 = vld [vmem:[%s2318 + $0xd8] sm:$0xff]
        %v2347 = vld [vmem:[%s2318 + $0xe0] sm:$0xff]
        %v2348 = vld [vmem:[%s2318 + $0xe8] sm:$0xff]
        %v2349 = vld [vmem:[%s2318 + $0xf0] sm:$0xff]
        %v2350 = vld [vmem:[%s2318 + $0xf8] sm:$0xff]
        %v2351 = vld [vmem:[%s2318 + $0x100] sm:$0xff]
        %v2352 = vld [vmem:[%s2318 + $0x108] sm:$0xff]
        %v2353 = vld [vmem:[%s2318 + $0x110] sm:$0xff]
        %v2354 = vld [vmem:[%s2318 + $0x118] sm:$0xff]
        %v2355 = vld [vmem:[%s2318 + $0x120] sm:$0xff]
        %v2356 = vld [vmem:[%s2318 + $0x128] sm:$0xff]
        %v2357 = vld [vmem:[%s2318 + $0x130] sm:$0xff]
        %v2358 = vld [vmem:[%s2318 + $0x138] sm:$0xff]
        %v2359 = vld [vmem:[%s2318 + $0x140] sm:$0xff]
        %v2360 = vld [vmem:[%s2318 + $0x148] sm:$0xff]
        %v2361 = vld [vmem:[%s2318 + $0x150] sm:$0xff]
        %v2362 = vld [vmem:[%s2318 + $0x158] sm:$0xff]
        %v2363 = vld [vmem:[%s2318 + $0x160] sm:$0xff]
        %v2364 = vld [vmem:[%s2318 + $0x168] sm:$0xff]
        %v2365 = vld [vmem:[%s2318 + $0x170] sm:$0xff]
        %v2366 = vld [vmem:[%s2318 + $0x178] sm:$0xff]
        %v2367 = vld [vmem:[%s2318 + $0x180] sm:$0xff]
        %v2368 = vld [vmem:[%s2318 + $0x188] sm:$0xff]
        %v2369 = vld [vmem:[%s2318 + $0x190] sm:$0xff]
        %v2370 = vld [vmem:[%s2318 + $0x198] sm:$0xff]
        %v2371 = vld [vmem:[%s2318 + $0x1a0] sm:$0xff]
        %v2372 = vld [vmem:[%s2318 + $0x1a8] sm:$0xff]
        %v2373 = vld [vmem:[%s2318 + $0x1b0] sm:$0xff]
        %v2374 = vld [vmem:[%s2318 + $0x1b8] sm:$0xff]
        %v2375 = vld [vmem:[%s2318 + $0x1c0] sm:$0xff]
        %v2376 = vld [vmem:[%s2318 + $0x1c8] sm:$0xff]
        %v2377 = vld [vmem:[%s2318 + $0x1d0] sm:$0xff]
        %v2378 = vld [vmem:[%s2318 + $0x1d8] sm:$0xff]
        %v2379 = vld [vmem:[%s2318 + $0x1e0] sm:$0xff]
        %v2380 = vld [vmem:[%s2318 + $0x1e8] sm:$0xff]
        %v2381 = vld [vmem:[%s2318 + $0x1f0] sm:$0xff]
        %v2382 = vld [vmem:[%s2318 + $0x1f8] sm:$0xff]
        %2383 = vmatpush.msra.mxu0 %v2349
        %2384 = vmatpush.msra.mxu0 %v2347
        %2385 = vmatpush.msra.mxu0 %v2345
        %2386 = vmatpush.msra.mxu0 %v2343
        %2387 = vmatpush.msra.mxu0 %v2341
        %2388 = vmatpush.msra.mxu0 %v2339
        %2389 = vmatpush.msra.mxu0 %v2337
        %2390 = vmatpush.msra.mxu0 %v2335
        %2391 = vmatpush.msra.mxu0 %v2333
        %2392 = vmatpush.msra.mxu0 %v2331
        %2393 = vmatpush.msra.mxu0 %v2329
        %2394 = vmatpush.msra.mxu0 %v2327
        %2395 = vmatpush.msra.mxu0 %v2325
        %2396 = vmatpush.msra.mxu0 %v2323
        %2397 = vmatpush.msra.mxu0 %v2321
        %2398 = vmatpush.msra.mxu0 %v2319
        %2399 = vmatmul.f32.gmra.mxu0 %v2290
        %v2400 = vpop.f32.mrf.mxu0
        %v2401 = vadd.f32 0.0, %v2400
        %2402 = vmatmul.f32.gmra.mxu0 %v2293
        %v2403 = vpop.f32.mrf.mxu0
        %v2404 = vadd.f32 0.0, %v2403
        %2405 = vdwg.mxu0
        %2406 = vmatpush.msra.mxu0 %v2381
        %2407 = vmatpush.msra.mxu0 %v2379
        %2408 = vmatpush.msra.mxu0 %v2377
        %2409 = vmatpush.msra.mxu0 %v2375
        %2410 = vmatpush.msra.mxu0 %v2373
        %2411 = vmatpush.msra.mxu0 %v2371
        %2412 = vmatpush.msra.mxu0 %v2369
        %2413 = vmatpush.msra.mxu0 %v2367
        %2414 = vmatpush.msra.mxu0 %v2365
        %2415 = vmatpush.msra.mxu0 %v2363
        %2416 = vmatpush.msra.mxu0 %v2361
        %2417 = vmatpush.msra.mxu0 %v2359
        %2418 = vmatpush.msra.mxu0 %v2357
        %2419 = vmatpush.msra.mxu0 %v2355
        %2420 = vmatpush.msra.mxu0 %v2353
        %2421 = vmatpush.msra.mxu0 %v2351
        %2422 = vmatmul.f32.gmra.mxu0 %v2313
        %v2423 = vpop.f32.mrf.mxu0
        %v2424 = vadd.f32 %v2401, %v2423
        %2425 = vmatmul.f32.gmra.mxu0 %v2316
        %v2426 = vpop.f32.mrf.mxu0
        %v2427 = vadd.f32 %v2404, %v2426
        %2428 = vdwg.mxu0
        %2429 = vmatpush.msra.mxu0 %v2350
        %2430 = vmatpush.msra.mxu0 %v2348
        %2431 = vmatpush.msra.mxu0 %v2346
        %2432 = vmatpush.msra.mxu0 %v2344
        %2433 = vmatpush.msra.mxu0 %v2342
        %2434 = vmatpush.msra.mxu0 %v2340
        %2435 = vmatpush.msra.mxu0 %v2338
        %2436 = vmatpush.msra.mxu0 %v2336
        %2437 = vmatpush.msra.mxu0 %v2334
        %2438 = vmatpush.msra.mxu0 %v2332
        %2439 = vmatpush.msra.mxu0 %v2330
        %2440 = vmatpush.msra.mxu0 %v2328
        %2441 = vmatpush.msra.mxu0 %v2326
        %2442 = vmatpush.msra.mxu0 %v2324
        %2443 = vmatpush.msra.mxu0 %v2322
        %2444 = vmatpush.msra.mxu0 %v2320
        %2445 = vmatmul.f32.gmra.mxu0 %v2290
        %v2446 = vpop.f32.mrf.mxu0
        %v2447 = vadd.f32 0.0, %v2446
        %2448 = vmatmul.f32.gmra.mxu0 %v2293
        %v2449 = vpop.f32.mrf.mxu0
        %v2450 = vadd.f32 0.0, %v2449
        %2451 = vdwg.mxu0
        %2452 = vmatpush.msra.mxu0 %v2382
        %2453 = vmatpush.msra.mxu0 %v2380
        %2454 = vmatpush.msra.mxu0 %v2378
        %2455 = vmatpush.msra.mxu0 %v2376
        %2456 = vmatpush.msra.mxu0 %v2374
        %2457 = vmatpush.msra.mxu0 %v2372
        %2458 = vmatpush.msra.mxu0 %v2370
        %2459 = vmatpush.msra.mxu0 %v2368
        %2460 = vmatpush.msra.mxu0 %v2366
        %2461 = vmatpush.msra.mxu0 %v2364
        %2462 = vmatpush.msra.mxu0 %v2362
        %2463 = vmatpush.msra.mxu0 %v2360
        %2464 = vmatpush.msra.mxu0 %v2358
        %2465 = vmatpush.msra.mxu0 %v2356
        %2466 = vmatpush.msra.mxu0 %v2354
        %2467 = vmatpush.msra.mxu0 %v2352
        %2468 = vmatmul.f32.gmra.mxu0 %v2313
        %v2469 = vpop.f32.mrf.mxu0
        %v2470 = vadd.f32 %v2447, %v2469
        %2471 = vmatmul.f32.gmra.mxu0 %v2316
        %v2472 = vpop.f32.mrf.mxu0
        %v2473 = vadd.f32 %v2450, %v2472
        %2474 = vdwg.mxu0
        %v2475 = vadd.f32 %v2212, %v2424
        %v2476 = vadd.f32 %v2258, %v2470
        %v2477 = vadd.f32 %v2215, %v2427
        %v2478 = vadd.f32 %v2261, %v2473
        %s2479 = scalar_lea.vmem %s5, 48
        %v2480 = vld [vmem:[%s2479] sm:$0xff]
        %v2481 = vld [vmem:[%s2479 + $0x8] sm:$0xff]
        %v2483 = vsel %vm1842, %v2480, 0
        %v2486 = vsel %vm1842, %v2481, 0
        %2488 = vmatpush.msra.mxu0 0.0
        %2489 = vmatpush.msra.mxu0 0.0
        %2490 = vmatpush.msra.mxu0 0.0
        %2491 = vmatpush.msra.mxu0 0.0
        %2492 = vmatpush.msra.mxu0 0.0
        %2493 = vmatpush.msra.mxu0 0.0
        %2494 = vmatpush.msra.mxu0 0.0
        %2495 = vmatpush.msra.mxu0 0.0
        %2496 = vmatpush.msra.mxu0 0.0
        %2497 = vmatpush.msra.mxu0 0.0
        %2498 = vmatpush.msra.mxu0 0.0
        %2499 = vmatpush.msra.mxu0 0.0
        %2500 = vmatpush.msra.mxu0 %v1838
        %2501 = vmatpush.msra.mxu0 %v1836
        %2502 = vmatpush.msra.mxu0 %v1834
        %2503 = vmatpush.msra.mxu0 %v1832
        %2504 = vmatmul.f32.gmra.mxu0 %v2483
        %v2505 = vpop.f32.mrf.mxu0
        %v2506 = vadd.f32 0.0, %v2505
        %2507 = vmatmul.f32.gmra.mxu0 %v2486
        %v2508 = vpop.f32.mrf.mxu0
        %v2509 = vadd.f32 0.0, %v2508
        %2510 = vdwg.mxu0
        %2511 = vmatpush.msra.mxu0 0.0
        %2512 = vmatpush.msra.mxu0 0.0
        %2513 = vmatpush.msra.mxu0 0.0
        %2514 = vmatpush.msra.mxu0 0.0
        %2515 = vmatpush.msra.mxu0 0.0
        %2516 = vmatpush.msra.mxu0 0.0
        %2517 = vmatpush.msra.mxu0 0.0
        %2518 = vmatpush.msra.mxu0 0.0
        %2519 = vmatpush.msra.mxu0 0.0
        %2520 = vmatpush.msra.mxu0 0.0
        %2521 = vmatpush.msra.mxu0 0.0
        %2522 = vmatpush.msra.mxu0 0.0
        %2523 = vmatpush.msra.mxu0 %v1839
        %2524 = vmatpush.msra.mxu0 %v1837
        %2525 = vmatpush.msra.mxu0 %v1835
        %2526 = vmatpush.msra.mxu0 %v1833
        %2527 = vmatmul.f32.gmra.mxu0 %v2483
        %v2528 = vpop.f32.mrf.mxu0
        %v2529 = vadd.f32 0.0, %v2528
        %2530 = vmatmul.f32.gmra.mxu0 %v2486
        %v2531 = vpop.f32.mrf.mxu0
        %v2532 = vadd.f32 0.0, %v2531
        %2533 = vdwg.mxu0
        %s2534 = scalar_lea.vmem %s6, 1536
        %v2535 = vld [vmem:[%s2534] sm:$0xff]
        %v2536 = vld [vmem:[%s2534 + $0x8] sm:$0xff]
        %v2537 = vld [vmem:[%s2534 + $0x10] sm:$0xff]
        %v2538 = vld [vmem:[%s2534 + $0x18] sm:$0xff]
        %v2539 = vld [vmem:[%s2534 + $0x20] sm:$0xff]
        %v2540 = vld [vmem:[%s2534 + $0x28] sm:$0xff]
        %v2541 = vld [vmem:[%s2534 + $0x30] sm:$0xff]
        %v2542 = vld [vmem:[%s2534 + $0x38] sm:$0xff]
        %v2543 = vld [vmem:[%s2534 + $0x40] sm:$0xff]
        %v2544 = vld [vmem:[%s2534 + $0x48] sm:$0xff]
        %v2545 = vld [vmem:[%s2534 + $0x50] sm:$0xff]
        %v2546 = vld [vmem:[%s2534 + $0x58] sm:$0xff]
        %v2547 = vld [vmem:[%s2534 + $0x60] sm:$0xff]
        %v2548 = vld [vmem:[%s2534 + $0x68] sm:$0xff]
        %v2549 = vld [vmem:[%s2534 + $0x70] sm:$0xff]
        %v2550 = vld [vmem:[%s2534 + $0x78] sm:$0xff]
        %v2551 = vld [vmem:[%s2534 + $0x80] sm:$0xff]
        %v2552 = vld [vmem:[%s2534 + $0x88] sm:$0xff]
        %v2553 = vld [vmem:[%s2534 + $0x90] sm:$0xff]
        %v2554 = vld [vmem:[%s2534 + $0x98] sm:$0xff]
        %v2555 = vld [vmem:[%s2534 + $0xa0] sm:$0xff]
        %v2556 = vld [vmem:[%s2534 + $0xa8] sm:$0xff]
        %v2557 = vld [vmem:[%s2534 + $0xb0] sm:$0xff]
        %v2558 = vld [vmem:[%s2534 + $0xb8] sm:$0xff]
        %v2559 = vld [vmem:[%s2534 + $0xc0] sm:$0xff]
        %v2560 = vld [vmem:[%s2534 + $0xc8] sm:$0xff]
        %v2561 = vld [vmem:[%s2534 + $0xd0] sm:$0xff]
        %v2562 = vld [vmem:[%s2534 + $0xd8] sm:$0xff]
        %v2563 = vld [vmem:[%s2534 + $0xe0] sm:$0xff]
        %v2564 = vld [vmem:[%s2534 + $0xe8] sm:$0xff]
        %v2565 = vld [vmem:[%s2534 + $0xf0] sm:$0xff]
        %v2566 = vld [vmem:[%s2534 + $0xf8] sm:$0xff]
        %v2567 = vld [vmem:[%s2534 + $0x100] sm:$0xff]
        %v2568 = vld [vmem:[%s2534 + $0x108] sm:$0xff]
        %v2569 = vld [vmem:[%s2534 + $0x110] sm:$0xff]
        %v2570 = vld [vmem:[%s2534 + $0x118] sm:$0xff]
        %v2571 = vld [vmem:[%s2534 + $0x120] sm:$0xff]
        %v2572 = vld [vmem:[%s2534 + $0x128] sm:$0xff]
        %v2573 = vld [vmem:[%s2534 + $0x130] sm:$0xff]
        %v2574 = vld [vmem:[%s2534 + $0x138] sm:$0xff]
        %v2575 = vld [vmem:[%s2534 + $0x140] sm:$0xff]
        %v2576 = vld [vmem:[%s2534 + $0x148] sm:$0xff]
        %v2577 = vld [vmem:[%s2534 + $0x150] sm:$0xff]
        %v2578 = vld [vmem:[%s2534 + $0x158] sm:$0xff]
        %v2579 = vld [vmem:[%s2534 + $0x160] sm:$0xff]
        %v2580 = vld [vmem:[%s2534 + $0x168] sm:$0xff]
        %v2581 = vld [vmem:[%s2534 + $0x170] sm:$0xff]
        %v2582 = vld [vmem:[%s2534 + $0x178] sm:$0xff]
        %v2583 = vld [vmem:[%s2534 + $0x180] sm:$0xff]
        %v2584 = vld [vmem:[%s2534 + $0x188] sm:$0xff]
        %v2585 = vld [vmem:[%s2534 + $0x190] sm:$0xff]
        %v2586 = vld [vmem:[%s2534 + $0x198] sm:$0xff]
        %v2587 = vld [vmem:[%s2534 + $0x1a0] sm:$0xff]
        %v2588 = vld [vmem:[%s2534 + $0x1a8] sm:$0xff]
        %v2589 = vld [vmem:[%s2534 + $0x1b0] sm:$0xff]
        %v2590 = vld [vmem:[%s2534 + $0x1b8] sm:$0xff]
        %v2591 = vld [vmem:[%s2534 + $0x1c0] sm:$0xff]
        %v2592 = vld [vmem:[%s2534 + $0x1c8] sm:$0xff]
        %v2593 = vld [vmem:[%s2534 + $0x1d0] sm:$0xff]
        %v2594 = vld [vmem:[%s2534 + $0x1d8] sm:$0xff]
        %v2595 = vld [vmem:[%s2534 + $0x1e0] sm:$0xff]
        %v2596 = vld [vmem:[%s2534 + $0x1e8] sm:$0xff]
        %v2597 = vld [vmem:[%s2534 + $0x1f0] sm:$0xff]
        %v2598 = vld [vmem:[%s2534 + $0x1f8] sm:$0xff]
        %2599 = vmatpush.msra.mxu0 %v2565
        %2600 = vmatpush.msra.mxu0 %v2563
        %2601 = vmatpush.msra.mxu0 %v2561
        %2602 = vmatpush.msra.mxu0 %v2559
        %2603 = vmatpush.msra.mxu0 %v2557
        %2604 = vmatpush.msra.mxu0 %v2555
        %2605 = vmatpush.msra.mxu0 %v2553
        %2606 = vmatpush.msra.mxu0 %v2551
        %2607 = vmatpush.msra.mxu0 %v2549
        %2608 = vmatpush.msra.mxu0 %v2547
        %2609 = vmatpush.msra.mxu0 %v2545
        %2610 = vmatpush.msra.mxu0 %v2543
        %2611 = vmatpush.msra.mxu0 %v2541
        %2612 = vmatpush.msra.mxu0 %v2539
        %2613 = vmatpush.msra.mxu0 %v2537
        %2614 = vmatpush.msra.mxu0 %v2535
        %2615 = vmatmul.f32.gmra.mxu0 %v2506
        %v2616 = vpop.f32.mrf.mxu0
        %v2617 = vadd.f32 0.0, %v2616
        %2618 = vmatmul.f32.gmra.mxu0 %v2509
        %v2619 = vpop.f32.mrf.mxu0
        %v2620 = vadd.f32 0.0, %v2619
        %2621 = vdwg.mxu0
        %2622 = vmatpush.msra.mxu0 %v2597
        %2623 = vmatpush.msra.mxu0 %v2595
        %2624 = vmatpush.msra.mxu0 %v2593
        %2625 = vmatpush.msra.mxu0 %v2591
        %2626 = vmatpush.msra.mxu0 %v2589
        %2627 = vmatpush.msra.mxu0 %v2587
        %2628 = vmatpush.msra.mxu0 %v2585
        %2629 = vmatpush.msra.mxu0 %v2583
        %2630 = vmatpush.msra.mxu0 %v2581
        %2631 = vmatpush.msra.mxu0 %v2579
        %2632 = vmatpush.msra.mxu0 %v2577
        %2633 = vmatpush.msra.mxu0 %v2575
        %2634 = vmatpush.msra.mxu0 %v2573
        %2635 = vmatpush.msra.mxu0 %v2571
        %2636 = vmatpush.msra.mxu0 %v2569
        %2637 = vmatpush.msra.mxu0 %v2567
        %2638 = vmatmul.f32.gmra.mxu0 %v2529
        %v2639 = vpop.f32.mrf.mxu0
        %v2640 = vadd.f32 %v2617, %v2639
        %2641 = vmatmul.f32.gmra.mxu0 %v2532
        %v2642 = vpop.f32.mrf.mxu0
        %v2643 = vadd.f32 %v2620, %v2642
        %2644 = vdwg.mxu0
        %2645 = vmatpush.msra.mxu0 %v2566
        %2646 = vmatpush.msra.mxu0 %v2564
        %2647 = vmatpush.msra.mxu0 %v2562
        %2648 = vmatpush.msra.mxu0 %v2560
        %2649 = vmatpush.msra.mxu0 %v2558
        %2650 = vmatpush.msra.mxu0 %v2556
        %2651 = vmatpush.msra.mxu0 %v2554
        %2652 = vmatpush.msra.mxu0 %v2552
        %2653 = vmatpush.msra.mxu0 %v2550
        %2654 = vmatpush.msra.mxu0 %v2548
        %2655 = vmatpush.msra.mxu0 %v2546
        %2656 = vmatpush.msra.mxu0 %v2544
        %2657 = vmatpush.msra.mxu0 %v2542
        %2658 = vmatpush.msra.mxu0 %v2540
        %2659 = vmatpush.msra.mxu0 %v2538
        %2660 = vmatpush.msra.mxu0 %v2536
        %2661 = vmatmul.f32.gmra.mxu0 %v2506
        %v2662 = vpop.f32.mrf.mxu0
        %v2663 = vadd.f32 0.0, %v2662
        %2664 = vmatmul.f32.gmra.mxu0 %v2509
        %v2665 = vpop.f32.mrf.mxu0
        %v2666 = vadd.f32 0.0, %v2665
        %2667 = vdwg.mxu0
        %2668 = vmatpush.msra.mxu0 %v2598
        %2669 = vmatpush.msra.mxu0 %v2596
        %2670 = vmatpush.msra.mxu0 %v2594
        %2671 = vmatpush.msra.mxu0 %v2592
        %2672 = vmatpush.msra.mxu0 %v2590
        %2673 = vmatpush.msra.mxu0 %v2588
        %2674 = vmatpush.msra.mxu0 %v2586
        %2675 = vmatpush.msra.mxu0 %v2584
        %2676 = vmatpush.msra.mxu0 %v2582
        %2677 = vmatpush.msra.mxu0 %v2580
        %2678 = vmatpush.msra.mxu0 %v2578
        %2679 = vmatpush.msra.mxu0 %v2576
        %2680 = vmatpush.msra.mxu0 %v2574
        %2681 = vmatpush.msra.mxu0 %v2572
        %2682 = vmatpush.msra.mxu0 %v2570
        %2683 = vmatpush.msra.mxu0 %v2568
        %2684 = vmatmul.f32.gmra.mxu0 %v2529
        %v2685 = vpop.f32.mrf.mxu0
        %v2686 = vadd.f32 %v2663, %v2685
        %2687 = vmatmul.f32.gmra.mxu0 %v2532
        %v2688 = vpop.f32.mrf.mxu0
        %v2689 = vadd.f32 %v2666, %v2688
        %2690 = vdwg.mxu0
        %v2691 = vadd.f32 %v2475, %v2640
        %v2692 = vadd.f32 %v2476, %v2686
        %v2693 = vadd.f32 %v2477, %v2643
        %v2694 = vadd.f32 %v2478, %v2689
        %v2695 = vadd.f32 %v2691, %v2693
        %v2696 = vrot.slane %v2695, 4
        %v2697 = vadd.f32 %v2695, %v2696
        %v2698 = vrot.slane %v2697, 2
        %v2699 = vadd.f32 %v2697, %v2698
        %v2700 = vrot.slane %v2699, 1
        %v2701 = vadd.f32 %v2699, %v2700
        %v2702 = vadd.f32 %v2692, %v2694
        %v2703 = vrot.slane %v2702, 4
        %v2704 = vadd.f32 %v2702, %v2703
        %v2705 = vrot.slane %v2704, 2
        %v2706 = vadd.f32 %v2704, %v2705
        %v2707 = vrot.slane %v2706, 1
        %v2708 = vadd.f32 %v2706, %v2707
        %v2709 = vld [vmem:[%s7] sm:$0xff]
        %v2710 = vld [vmem:[%s7 + $0x8] sm:$0xff]
        %v2711 = vld [vmem:[%s7 + $0x10] sm:$0xff]
        %v2712 = vld [vmem:[%s7 + $0x18] sm:$0xff]
        %v2713 = vld [vmem:[%s7 + $0x20] sm:$0xff]
        %v2714 = vld [vmem:[%s7 + $0x28] sm:$0xff]
        %v2715 = vld [vmem:[%s7 + $0x30] sm:$0xff]
        %v2716 = vld [vmem:[%s7 + $0x38] sm:$0xff]
        %v2717 = vld [vmem:[%s7 + $0x40] sm:$0xff]
        %v2718 = vld [vmem:[%s7 + $0x48] sm:$0xff]
        %v2719 = vld [vmem:[%s7 + $0x50] sm:$0xff]
        %v2720 = vld [vmem:[%s7 + $0x58] sm:$0xff]
        %v2721 = vld [vmem:[%s7 + $0x60] sm:$0xff]
        %v2722 = vld [vmem:[%s7 + $0x68] sm:$0xff]
        %v2723 = vld [vmem:[%s7 + $0x70] sm:$0xff]
        %v2724 = vld [vmem:[%s7 + $0x78] sm:$0xff]
        %v2725 = vld [vmem:[%s7 + $0x80] sm:$0xff]
        %v2726 = vld [vmem:[%s7 + $0x88] sm:$0xff]
        %v2727 = vld [vmem:[%s7 + $0x90] sm:$0xff]
        %v2728 = vld [vmem:[%s7 + $0x98] sm:$0xff]
        %v2729 = vld [vmem:[%s7 + $0xa0] sm:$0xff]
        %v2730 = vld [vmem:[%s7 + $0xa8] sm:$0xff]
        %v2731 = vld [vmem:[%s7 + $0xb0] sm:$0xff]
        %v2732 = vld [vmem:[%s7 + $0xb8] sm:$0xff]
        %v2733 = vld [vmem:[%s7 + $0xc0] sm:$0xff]
        %v2734 = vld [vmem:[%s7 + $0xc8] sm:$0xff]
        %v2735 = vld [vmem:[%s7 + $0xd0] sm:$0xff]
        %v2736 = vld [vmem:[%s7 + $0xd8] sm:$0xff]
        %v2737 = vld [vmem:[%s7 + $0xe0] sm:$0xff]
        %v2738 = vld [vmem:[%s7 + $0xe8] sm:$0xff]
        %v2739 = vld [vmem:[%s7 + $0xf0] sm:$0xff]
        %v2740 = vld [vmem:[%s7 + $0xf8] sm:$0xff]
        %2741 = vmatpush.msra.mxu0 %v2724
        %2742 = vmatpush.msra.mxu0 %v2723
        %2743 = vmatpush.msra.mxu0 %v2722
        %2744 = vmatpush.msra.mxu0 %v2721
        %2745 = vmatpush.msra.mxu0 %v2720
        %2746 = vmatpush.msra.mxu0 %v2719
        %2747 = vmatpush.msra.mxu0 %v2718
        %2748 = vmatpush.msra.mxu0 %v2717
        %2749 = vmatpush.msra.mxu0 %v2716
        %2750 = vmatpush.msra.mxu0 %v2715
        %2751 = vmatpush.msra.mxu0 %v2714
        %2752 = vmatpush.msra.mxu0 %v2713
        %2753 = vmatpush.msra.mxu0 %v2712
        %2754 = vmatpush.msra.mxu0 %v2711
        %2755 = vmatpush.msra.mxu0 %v2710
        %2756 = vmatpush.msra.mxu0 %v2709
        %2757 = vmatmul.f32.gmra.mxu0 %v2701
        %v2758 = vpop.f32.mrf.mxu0
        %v2759 = vadd.f32 0.0, %v2758
        %2760 = vdwg.mxu0
        %2761 = vmatpush.msra.mxu0 %v2740
        %2762 = vmatpush.msra.mxu0 %v2739
        %2763 = vmatpush.msra.mxu0 %v2738
        %2764 = vmatpush.msra.mxu0 %v2737
        %2765 = vmatpush.msra.mxu0 %v2736
        %2766 = vmatpush.msra.mxu0 %v2735
        %2767 = vmatpush.msra.mxu0 %v2734
        %2768 = vmatpush.msra.mxu0 %v2733
        %2769 = vmatpush.msra.mxu0 %v2732
        %2770 = vmatpush.msra.mxu0 %v2731
        %2771 = vmatpush.msra.mxu0 %v2730
        %2772 = vmatpush.msra.mxu0 %v2729
        %2773 = vmatpush.msra.mxu0 %v2728
        %2774 = vmatpush.msra.mxu0 %v2727
        %2775 = vmatpush.msra.mxu0 %v2726
        %2776 = vmatpush.msra.mxu0 %v2725
        %2777 = vmatmul.f32.gmra.mxu0 %v2708
        %v2778 = vpop.f32.mrf.mxu0
        %v2779 = vadd.f32 %v2759, %v2778
        %2780 = vdwg.mxu0
        %v2781 = vmul.f32 %v2779, 0.00390625
        %v2782 = vld [vmem:[%s8] sm:$0xff]
        %v2783 = vld [vmem:[%s8 + $0x8] sm:$0xff]
        %v2784 = vld [vmem:[%s8 + $0x10] sm:$0xff]
        %v2785 = vld [vmem:[%s8 + $0x18] sm:$0xff]
        %vm2786 = vcmask 130048
        %v2788 = vsel %vm2786, %v2781, 0
        %2790 = vmatpush.msra.mxu0 0.0
        %2791 = vmatpush.msra.mxu0 0.0
        %2792 = vmatpush.msra.mxu0 0.0
        %2793 = vmatpush.msra.mxu0 0.0
        %2794 = vmatpush.msra.mxu0 0.0
        %2795 = vmatpush.msra.mxu0 0.0
        %2796 = vmatpush.msra.mxu0 0.0
        %2797 = vmatpush.msra.mxu0 0.0
        %2798 = vmatpush.msra.mxu0 0.0
        %2799 = vmatpush.msra.mxu0 0.0
        %2800 = vmatpush.msra.mxu0 0.0
        %2801 = vmatpush.msra.mxu0 0.0
        %2802 = vmatpush.msra.mxu0 0.0
        %2803 = vmatpush.msra.mxu0 0.0
        %2804 = vmatpush.msra.mxu0 %v2784
        %2805 = vmatpush.msra.mxu0 %v2782
        %2806 = vmatmul.f32.gmra.mxu0 %v2788
        %v2807 = vpop.f32.mrf.mxu0
        %v2808 = vadd.f32 0.0, %v2807
        %2809 = vdwg.mxu0
        %2810 = vmatpush.msra.mxu0 0.0
        %2811 = vmatpush.msra.mxu0 0.0
        %2812 = vmatpush.msra.mxu0 0.0
        %2813 = vmatpush.msra.mxu0 0.0
        %2814 = vmatpush.msra.mxu0 0.0
        %2815 = vmatpush.msra.mxu0 0.0
        %2816 = vmatpush.msra.mxu0 0.0
        %2817 = vmatpush.msra.mxu0 0.0
        %2818 = vmatpush.msra.mxu0 0.0
        %2819 = vmatpush.msra.mxu0 0.0
        %2820 = vmatpush.msra.mxu0 0.0
        %2821 = vmatpush.msra.mxu0 0.0
        %2822 = vmatpush.msra.mxu0 0.0
        %2823 = vmatpush.msra.mxu0 0.0
        %2824 = vmatpush.msra.mxu0 %v2785
        %2825 = vmatpush.msra.mxu0 %v2783
        %2826 = vmatmul.f32.gmra.mxu0 %v2788
        %v2827 = vpop.f32.mrf.mxu0
        %v2828 = vadd.f32 0.0, %v2827
        %2829 = vdwg.mxu0
        %v2830 = vperm.slane %v2808, 0
        %v2831 = vperm.slane %v2828, 0
        %v2832 = vsub.f32 %v2691, %v2830
        %v2833 = vsub.f32 %v2692, %v2831
        %v2834 = vsub.f32 %v2693, %v2830
        %v2835 = vsub.f32 %v2694, %v2831
        %v2836 = vmul.f32 %v2832, %v2832
        %v2837 = vmul.f32 %v2833, %v2833
        %v2838 = vmul.f32 %v2834, %v2834
        %v2839 = vmul.f32 %v2835, %v2835
        %v2840 = vadd.f32 %v2836, %v2838
        %v2841 = vrot.slane %v2840, 4
        %v2842 = vadd.f32 %v2840, %v2841
        %v2843 = vrot.slane %v2842, 2
        %v2844 = vadd.f32 %v2842, %v2843
        %v2845 = vrot.slane %v2844, 1
        %v2846 = vadd.f32 %v2844, %v2845
        %v2847 = vadd.f32 %v2837, %v2839
        %v2848 = vrot.slane %v2847, 4
        %v2849 = vadd.f32 %v2847, %v2848
        %v2850 = vrot.slane %v2849, 2
        %v2851 = vadd.f32 %v2849, %v2850
        %v2852 = vrot.slane %v2851, 1
        %v2853 = vadd.f32 %v2851, %v2852
        %2854 = vmatpush.msra.mxu0 %v2724
        %2855 = vmatpush.msra.mxu0 %v2723
        %2856 = vmatpush.msra.mxu0 %v2722
        %2857 = vmatpush.msra.mxu0 %v2721
        %2858 = vmatpush.msra.mxu0 %v2720
        %2859 = vmatpush.msra.mxu0 %v2719
        %2860 = vmatpush.msra.mxu0 %v2718
        %2861 = vmatpush.msra.mxu0 %v2717
        %2862 = vmatpush.msra.mxu0 %v2716
        %2863 = vmatpush.msra.mxu0 %v2715
        %2864 = vmatpush.msra.mxu0 %v2714
        %2865 = vmatpush.msra.mxu0 %v2713
        %2866 = vmatpush.msra.mxu0 %v2712
        %2867 = vmatpush.msra.mxu0 %v2711
        %2868 = vmatpush.msra.mxu0 %v2710
        %2869 = vmatpush.msra.mxu0 %v2709
        %2870 = vmatmul.f32.gmra.mxu0 %v2846
        %v2871 = vpop.f32.mrf.mxu0
        %v2872 = vadd.f32 0.0, %v2871
        %2873 = vdwg.mxu0
        %2874 = vmatpush.msra.mxu0 %v2740
        %2875 = vmatpush.msra.mxu0 %v2739
        %2876 = vmatpush.msra.mxu0 %v2738
        %2877 = vmatpush.msra.mxu0 %v2737
        %2878 = vmatpush.msra.mxu0 %v2736
        %2879 = vmatpush.msra.mxu0 %v2735
        %2880 = vmatpush.msra.mxu0 %v2734
        %2881 = vmatpush.msra.mxu0 %v2733
        %2882 = vmatpush.msra.mxu0 %v2732
        %2883 = vmatpush.msra.mxu0 %v2731
        %2884 = vmatpush.msra.mxu0 %v2730
        %2885 = vmatpush.msra.mxu0 %v2729
        %2886 = vmatpush.msra.mxu0 %v2728
        %2887 = vmatpush.msra.mxu0 %v2727
        %2888 = vmatpush.msra.mxu0 %v2726
        %2889 = vmatpush.msra.mxu0 %v2725
        %2890 = vmatmul.f32.gmra.mxu0 %v2853
        %v2891 = vpop.f32.mrf.mxu0
        %v2892 = vadd.f32 %v2872, %v2891
        %2893 = vdwg.mxu0
        %v2894 = vmul.f32 %v2892, 0.00390625
        %v2895 = vadd.f32 %v2894, 1e-05
        %v2896 = vrsqrt.pop %v2895
        %v2897 = vmul.f32 %v2896, %v2895
        %v2898 = vmul.f32 %v2897, %v2896
        %v2899 = vmul.f32 0.5, %v2898
        %v2900 = vsub.f32 1.5, %v2899
        %v2901 = vmul.f32 %v2896, %v2900
        %vm2902 = vweird.f32 %v2895
        %vm2903 = vweird.f32 %v2896
        %vm2904 = vmor %vm2902, %vm2903
        %v2905 = vsel %vm2904, %v2896, %v2901
        %v2907 = vsel %vm2786, %v2905, 0
        %2909 = vmatpush.msra.mxu0 0.0
        %2910 = vmatpush.msra.mxu0 0.0
        %2911 = vmatpush.msra.mxu0 0.0
        %2912 = vmatpush.msra.mxu0 0.0
        %2913 = vmatpush.msra.mxu0 0.0
        %2914 = vmatpush.msra.mxu0 0.0
        %2915 = vmatpush.msra.mxu0 0.0
        %2916 = vmatpush.msra.mxu0 0.0
        %2917 = vmatpush.msra.mxu0 0.0
        %2918 = vmatpush.msra.mxu0 0.0
        %2919 = vmatpush.msra.mxu0 0.0
        %2920 = vmatpush.msra.mxu0 0.0
        %2921 = vmatpush.msra.mxu0 0.0
        %2922 = vmatpush.msra.mxu0 0.0
        %2923 = vmatpush.msra.mxu0 %v2784
        %2924 = vmatpush.msra.mxu0 %v2782
        %2925 = vmatmul.f32.gmra.mxu0 %v2907
        %v2926 = vpop.f32.mrf.mxu0
        %v2927 = vadd.f32 0.0, %v2926
        %2928 = vdwg.mxu0
        %2929 = vmatpush.msra.mxu0 0.0
        %2930 = vmatpush.msra.mxu0 0.0
        %2931 = vmatpush.msra.mxu0 0.0
        %2932 = vmatpush.msra.mxu0 0.0
        %2933 = vmatpush.msra.mxu0 0.0
        %2934 = vmatpush.msra.mxu0 0.0
        %2935 = vmatpush.msra.mxu0 0.0
        %2936 = vmatpush.msra.mxu0 0.0
        %2937 = vmatpush.msra.mxu0 0.0
        %2938 = vmatpush.msra.mxu0 0.0
        %2939 = vmatpush.msra.mxu0 0.0
        %2940 = vmatpush.msra.mxu0 0.0
        %2941 = vmatpush.msra.mxu0 0.0
        %2942 = vmatpush.msra.mxu0 0.0
        %2943 = vmatpush.msra.mxu0 %v2785
        %2944 = vmatpush.msra.mxu0 %v2783
        %2945 = vmatmul.f32.gmra.mxu0 %v2907
        %v2946 = vpop.f32.mrf.mxu0
        %v2947 = vadd.f32 0.0, %v2946
        %2948 = vdwg.mxu0
        %v2949 = vperm.slane %v2927, 0
        %v2950 = vperm.slane %v2947, 0
        %v2951 = vmul.f32 %v2832, %v2949
        %v2952 = vmul.f32 %v2833, %v2950
        %v2953 = vmul.f32 %v2834, %v2949
        %v2954 = vmul.f32 %v2835, %v2950
        %vm2955 = vcmp.ge.f32.partialorder %v2951, 0.0
        %vm2956 = vcmp.ge.f32.partialorder %v2952, 0.0
        %vm2957 = vcmp.ge.f32.partialorder %v2953, 0.0
        %vm2958 = vcmp.ge.f32.partialorder %v2954, 0.0
        %v2959 = vmul.f32 %v2951, 0.2
        %v2960 = vmul.f32 %v2952, 0.2
        %v2961 = vmul.f32 %v2953, 0.2
        %v2962 = vmul.f32 %v2954, 0.2
        %v2963 = vsel %vm2955, %v2951, %v2959
        %v2964 = vsel %vm2956, %v2952, %v2960
        %v2965 = vsel %vm2957, %v2953, %v2961
        %v2966 = vsel %vm2958, %v2954, %v2962
        %v2967 = vld [vmem:[%s9] sm:$0xff]
        %v2969 = vsel %vm2786, %v2967, 0
        %2971 = vmatpush.msra.mxu0 0.0
        %2972 = vmatpush.msra.mxu0 0.0
        %2973 = vmatpush.msra.mxu0 0.0
        %2974 = vmatpush.msra.mxu0 0.0
        %2975 = vmatpush.msra.mxu0 0.0
        %2976 = vmatpush.msra.mxu0 0.0
        %2977 = vmatpush.msra.mxu0 0.0
        %2978 = vmatpush.msra.mxu0 0.0
        %2979 = vmatpush.msra.mxu0 0.0
        %2980 = vmatpush.msra.mxu0 0.0
        %2981 = vmatpush.msra.mxu0 0.0
        %2982 = vmatpush.msra.mxu0 0.0
        %2983 = vmatpush.msra.mxu0 0.0
        %2984 = vmatpush.msra.mxu0 0.0
        %2985 = vmatpush.msra.mxu0 %v2965
        %2986 = vmatpush.msra.mxu0 %v2963
        %2987 = vmatmul.f32.gmra.mxu0 %v2969
        %v2988 = vpop.f32.mrf.mxu0
        %v2989 = vadd.f32 0.0, %v2988
        %2990 = vdwg.mxu0
        %2991 = vmatpush.msra.mxu0 0.0
        %2992 = vmatpush.msra.mxu0 0.0
        %2993 = vmatpush.msra.mxu0 0.0
        %2994 = vmatpush.msra.mxu0 0.0
        %2995 = vmatpush.msra.mxu0 0.0
        %2996 = vmatpush.msra.mxu0 0.0
        %2997 = vmatpush.msra.mxu0 0.0
        %2998 = vmatpush.msra.mxu0 0.0
        %2999 = vmatpush.msra.mxu0 0.0
        %3000 = vmatpush.msra.mxu0 0.0
        %3001 = vmatpush.msra.mxu0 0.0
        %3002 = vmatpush.msra.mxu0 0.0
        %3003 = vmatpush.msra.mxu0 0.0
        %3004 = vmatpush.msra.mxu0 0.0
        %3005 = vmatpush.msra.mxu0 %v2966
        %3006 = vmatpush.msra.mxu0 %v2964
        %3007 = vmatmul.f32.gmra.mxu0 %v2969
        %v3008 = vpop.f32.mrf.mxu0
        %v3009 = vadd.f32 0.0, %v3008
        %3010 = vdwg.mxu0
        %v3011 = vld [vmem:[#allocation5] sm:$0xff]
        %v3012 = vld [vmem:[#allocation5 + $0x8] sm:$0xff]
        %v3013 = vld [vmem:[#allocation5 + $0x10] sm:$0xff]
        %v3014 = vld [vmem:[#allocation5 + $0x18] sm:$0xff]
        %v3015 = vld [vmem:[#allocation5 + $0x20] sm:$0xff]
        %v3016 = vld [vmem:[#allocation5 + $0x28] sm:$0xff]
        %v3017 = vld [vmem:[#allocation5 + $0x30] sm:$0xff]
        %v3018 = vld [vmem:[#allocation5 + $0x38] sm:$0xff]
        %v3019 = vld [vmem:[#allocation5 + $0x40] sm:$0xff]
        %v3020 = vld [vmem:[#allocation5 + $0x48] sm:$0xff]
        %v3021 = vld [vmem:[#allocation5 + $0x50] sm:$0xff]
        %v3022 = vld [vmem:[#allocation5 + $0x58] sm:$0xff]
        %v3023 = vld [vmem:[#allocation5 + $0x60] sm:$0xff]
        %v3024 = vld [vmem:[#allocation5 + $0x68] sm:$0xff]
        %v3025 = vld [vmem:[#allocation5 + $0x70] sm:$0xff]
        %v3026 = vld [vmem:[#allocation5 + $0x78] sm:$0xff]
        %v3027 = vld [vmem:[#allocation5 + $0x80] sm:$0xff]
        %v3028 = vld [vmem:[#allocation5 + $0x88] sm:$0xff]
        %v3029 = vld [vmem:[#allocation5 + $0x90] sm:$0xff]
        %v3030 = vld [vmem:[#allocation5 + $0x98] sm:$0xff]
        %v3031 = vld [vmem:[#allocation5 + $0xa0] sm:$0xff]
        %v3032 = vld [vmem:[#allocation5 + $0xa8] sm:$0xff]
        %v3033 = vld [vmem:[#allocation5 + $0xb0] sm:$0xff]
        %v3034 = vld [vmem:[#allocation5 + $0xb8] sm:$0xff]
        %v3035 = vld [vmem:[#allocation5 + $0xc0] sm:$0xff]
        %v3036 = vld [vmem:[#allocation5 + $0xc8] sm:$0xff]
        %v3037 = vld [vmem:[#allocation5 + $0xd0] sm:$0xff]
        %v3038 = vld [vmem:[#allocation5 + $0xd8] sm:$0xff]
        %v3039 = vld [vmem:[#allocation5 + $0xe0] sm:$0xff]
        %v3040 = vld [vmem:[#allocation5 + $0xe8] sm:$0xff]
        %v3041 = vld [vmem:[#allocation5 + $0xf0] sm:$0xff]
        %v3042 = vld [vmem:[#allocation5 + $0xf8] sm:$0xff]
        %v3043 = vld [vmem:[#allocation5 + $0x100] sm:$0xff]
        %v3044 = vld [vmem:[#allocation5 + $0x108] sm:$0xff]
        %v3045 = vld [vmem:[#allocation5 + $0x110] sm:$0xff]
        %v3046 = vld [vmem:[#allocation5 + $0x118] sm:$0xff]
        %v3047 = vld [vmem:[#allocation5 + $0x120] sm:$0xff]
        %v3048 = vld [vmem:[#allocation5 + $0x128] sm:$0xff]
        %v3049 = vld [vmem:[#allocation5 + $0x130] sm:$0xff]
        %v3050 = vld [vmem:[#allocation5 + $0x138] sm:$0xff]
        %v3051 = vld [vmem:[#allocation5 + $0x140] sm:$0xff]
        %v3052 = vld [vmem:[#allocation5 + $0x148] sm:$0xff]
        %v3053 = vld [vmem:[#allocation5 + $0x150] sm:$0xff]
        %v3054 = vld [vmem:[#allocation5 + $0x158] sm:$0xff]
        %v3055 = vld [vmem:[#allocation5 + $0x160] sm:$0xff]
        %v3056 = vld [vmem:[#allocation5 + $0x168] sm:$0xff]
        %v3057 = vld [vmem:[#allocation5 + $0x170] sm:$0xff]
        %v3058 = vld [vmem:[#allocation5 + $0x178] sm:$0xff]
        %v3059 = vld [vmem:[#allocation5 + $0x180] sm:$0xff]
        %v3060 = vld [vmem:[#allocation5 + $0x188] sm:$0xff]
        %v3061 = vld [vmem:[#allocation5 + $0x190] sm:$0xff]
        %v3062 = vld [vmem:[#allocation5 + $0x198] sm:$0xff]
        %v3063 = vld [vmem:[#allocation5 + $0x1a0] sm:$0xff]
        %v3064 = vld [vmem:[#allocation5 + $0x1a8] sm:$0xff]
        %v3065 = vld [vmem:[#allocation5 + $0x1b0] sm:$0xff]
        %v3066 = vld [vmem:[#allocation5 + $0x1b8] sm:$0xff]
        %v3067 = vld [vmem:[#allocation5 + $0x1c0] sm:$0xff]
        %v3068 = vld [vmem:[#allocation5 + $0x1c8] sm:$0xff]
        %v3069 = vld [vmem:[#allocation5 + $0x1d0] sm:$0xff]
        %v3070 = vld [vmem:[#allocation5 + $0x1d8] sm:$0xff]
        %v3071 = vld [vmem:[#allocation5 + $0x1e0] sm:$0xff]
        %v3072 = vld [vmem:[#allocation5 + $0x1e8] sm:$0xff]
        %v3073 = vld [vmem:[#allocation5 + $0x1f0] sm:$0xff]
        %v3074 = vld [vmem:[#allocation5 + $0x1f8] sm:$0xff]
        %s3075 = scalar_lea.vmem %s9, 8
        %v3076 = vld [vmem:[%s3075] sm:$0xff]
        %v3078 = vsel %vm2786, %v3076, 0
        %3080 = vmatpush.msra.mxu0 0.0
        %3081 = vmatpush.msra.mxu0 0.0
        %3082 = vmatpush.msra.mxu0 0.0
        %3083 = vmatpush.msra.mxu0 0.0
        %3084 = vmatpush.msra.mxu0 0.0
        %3085 = vmatpush.msra.mxu0 0.0
        %3086 = vmatpush.msra.mxu0 0.0
        %3087 = vmatpush.msra.mxu0 0.0
        %3088 = vmatpush.msra.mxu0 0.0
        %3089 = vmatpush.msra.mxu0 0.0
        %3090 = vmatpush.msra.mxu0 0.0
        %3091 = vmatpush.msra.mxu0 0.0
        %3092 = vmatpush.msra.mxu0 0.0
        %3093 = vmatpush.msra.mxu0 0.0
        %3094 = vmatpush.msra.mxu0 %v2965
        %3095 = vmatpush.msra.mxu0 %v2963
        %3096 = vmatmul.f32.gmra.mxu0 %v3078
        %v3097 = vpop.f32.mrf.mxu0
        %v3098 = vadd.f32 0.0, %v3097
        %3099 = vdwg.mxu0
        %3100 = vmatpush.msra.mxu0 0.0
        %3101 = vmatpush.msra.mxu0 0.0
        %3102 = vmatpush.msra.mxu0 0.0
        %3103 = vmatpush.msra.mxu0 0.0
        %3104 = vmatpush.msra.mxu0 0.0
        %3105 = vmatpush.msra.mxu0 0.0
        %3106 = vmatpush.msra.mxu0 0.0
        %3107 = vmatpush.msra.mxu0 0.0
        %3108 = vmatpush.msra.mxu0 0.0
        %3109 = vmatpush.msra.mxu0 0.0
        %3110 = vmatpush.msra.mxu0 0.0
        %3111 = vmatpush.msra.mxu0 0.0
        %3112 = vmatpush.msra.mxu0 0.0
        %3113 = vmatpush.msra.mxu0 0.0
        %3114 = vmatpush.msra.mxu0 %v2966
        %3115 = vmatpush.msra.mxu0 %v2964
        %3116 = vmatmul.f32.gmra.mxu0 %v3078
        %v3117 = vpop.f32.mrf.mxu0
        %v3118 = vadd.f32 0.0, %v3117
        %3119 = vdwg.mxu0
        %s3120 = scalar_lea.vmem [#allocation5], 512
        %v3121 = vld [vmem:[%s3120] sm:$0xff]
        %v3122 = vld [vmem:[%s3120 + $0x8] sm:$0xff]
        %v3123 = vld [vmem:[%s3120 + $0x10] sm:$0xff]
        %v3124 = vld [vmem:[%s3120 + $0x18] sm:$0xff]
        %v3125 = vld [vmem:[%s3120 + $0x20] sm:$0xff]
        %v3126 = vld [vmem:[%s3120 + $0x28] sm:$0xff]
        %v3127 = vld [vmem:[%s3120 + $0x30] sm:$0xff]
        %v3128 = vld [vmem:[%s3120 + $0x38] sm:$0xff]
        %v3129 = vld [vmem:[%s3120 + $0x40] sm:$0xff]
        %v3130 = vld [vmem:[%s3120 + $0x48] sm:$0xff]
        %v3131 = vld [vmem:[%s3120 + $0x50] sm:$0xff]
        %v3132 = vld [vmem:[%s3120 + $0x58] sm:$0xff]
        %v3133 = vld [vmem:[%s3120 + $0x60] sm:$0xff]
        %v3134 = vld [vmem:[%s3120 + $0x68] sm:$0xff]
        %v3135 = vld [vmem:[%s3120 + $0x70] sm:$0xff]
        %v3136 = vld [vmem:[%s3120 + $0x78] sm:$0xff]
        %v3137 = vld [vmem:[%s3120 + $0x80] sm:$0xff]
        %v3138 = vld [vmem:[%s3120 + $0x88] sm:$0xff]
        %v3139 = vld [vmem:[%s3120 + $0x90] sm:$0xff]
        %v3140 = vld [vmem:[%s3120 + $0x98] sm:$0xff]
        %v3141 = vld [vmem:[%s3120 + $0xa0] sm:$0xff]
        %v3142 = vld [vmem:[%s3120 + $0xa8] sm:$0xff]
        %v3143 = vld [vmem:[%s3120 + $0xb0] sm:$0xff]
        %v3144 = vld [vmem:[%s3120 + $0xb8] sm:$0xff]
        %v3145 = vld [vmem:[%s3120 + $0xc0] sm:$0xff]
        %v3146 = vld [vmem:[%s3120 + $0xc8] sm:$0xff]
        %v3147 = vld [vmem:[%s3120 + $0xd0] sm:$0xff]
        %v3148 = vld [vmem:[%s3120 + $0xd8] sm:$0xff]
        %v3149 = vld [vmem:[%s3120 + $0xe0] sm:$0xff]
        %v3150 = vld [vmem:[%s3120 + $0xe8] sm:$0xff]
        %v3151 = vld [vmem:[%s3120 + $0xf0] sm:$0xff]
        %v3152 = vld [vmem:[%s3120 + $0xf8] sm:$0xff]
        %v3153 = vld [vmem:[%s3120 + $0x100] sm:$0xff]
        %v3154 = vld [vmem:[%s3120 + $0x108] sm:$0xff]
        %v3155 = vld [vmem:[%s3120 + $0x110] sm:$0xff]
        %v3156 = vld [vmem:[%s3120 + $0x118] sm:$0xff]
        %v3157 = vld [vmem:[%s3120 + $0x120] sm:$0xff]
        %v3158 = vld [vmem:[%s3120 + $0x128] sm:$0xff]
        %v3159 = vld [vmem:[%s3120 + $0x130] sm:$0xff]
        %v3160 = vld [vmem:[%s3120 + $0x138] sm:$0xff]
        %v3161 = vld [vmem:[%s3120 + $0x140] sm:$0xff]
        %v3162 = vld [vmem:[%s3120 + $0x148] sm:$0xff]
        %v3163 = vld [vmem:[%s3120 + $0x150] sm:$0xff]
        %v3164 = vld [vmem:[%s3120 + $0x158] sm:$0xff]
        %v3165 = vld [vmem:[%s3120 + $0x160] sm:$0xff]
        %v3166 = vld [vmem:[%s3120 + $0x168] sm:$0xff]
        %v3167 = vld [vmem:[%s3120 + $0x170] sm:$0xff]
        %v3168 = vld [vmem:[%s3120 + $0x178] sm:$0xff]
        %v3169 = vld [vmem:[%s3120 + $0x180] sm:$0xff]
        %v3170 = vld [vmem:[%s3120 + $0x188] sm:$0xff]
        %v3171 = vld [vmem:[%s3120 + $0x190] sm:$0xff]
        %v3172 = vld [vmem:[%s3120 + $0x198] sm:$0xff]
        %v3173 = vld [vmem:[%s3120 + $0x1a0] sm:$0xff]
        %v3174 = vld [vmem:[%s3120 + $0x1a8] sm:$0xff]
        %v3175 = vld [vmem:[%s3120 + $0x1b0] sm:$0xff]
        %v3176 = vld [vmem:[%s3120 + $0x1b8] sm:$0xff]
        %v3177 = vld [vmem:[%s3120 + $0x1c0] sm:$0xff]
        %v3178 = vld [vmem:[%s3120 + $0x1c8] sm:$0xff]
        %v3179 = vld [vmem:[%s3120 + $0x1d0] sm:$0xff]
        %v3180 = vld [vmem:[%s3120 + $0x1d8] sm:$0xff]
        %v3181 = vld [vmem:[%s3120 + $0x1e0] sm:$0xff]
        %v3182 = vld [vmem:[%s3120 + $0x1e8] sm:$0xff]
        %v3183 = vld [vmem:[%s3120 + $0x1f0] sm:$0xff]
        %v3184 = vld [vmem:[%s3120 + $0x1f8] sm:$0xff]
        %3185 = vmatpush.msra.mxu0 %v3151
        %3186 = vmatpush.msra.mxu0 %v3149
        %3187 = vmatpush.msra.mxu0 %v3147
        %3188 = vmatpush.msra.mxu0 %v3145
        %3189 = vmatpush.msra.mxu0 %v3143
        %3190 = vmatpush.msra.mxu0 %v3141
        %3191 = vmatpush.msra.mxu0 %v3139
        %3192 = vmatpush.msra.mxu0 %v3137
        %3193 = vmatpush.msra.mxu0 %v3135
        %3194 = vmatpush.msra.mxu0 %v3133
        %3195 = vmatpush.msra.mxu0 %v3131
        %3196 = vmatpush.msra.mxu0 %v3129
        %3197 = vmatpush.msra.mxu0 %v3127
        %3198 = vmatpush.msra.mxu0 %v3125
        %3199 = vmatpush.msra.mxu0 %v3123
        %3200 = vmatpush.msra.mxu0 %v3121
        %3201 = vmatmul.f32.gmra.mxu0 %v3098
        %v3202 = vpop.f32.mrf.mxu0
        %v3203 = vadd.f32 0.0, %v3202
        %3204 = vdwg.mxu0
        %3205 = vmatpush.msra.mxu0 %v3183
        %3206 = vmatpush.msra.mxu0 %v3181
        %3207 = vmatpush.msra.mxu0 %v3179
        %3208 = vmatpush.msra.mxu0 %v3177
        %3209 = vmatpush.msra.mxu0 %v3175
        %3210 = vmatpush.msra.mxu0 %v3173
        %3211 = vmatpush.msra.mxu0 %v3171
        %3212 = vmatpush.msra.mxu0 %v3169
        %3213 = vmatpush.msra.mxu0 %v3167
        %3214 = vmatpush.msra.mxu0 %v3165
        %3215 = vmatpush.msra.mxu0 %v3163
        %3216 = vmatpush.msra.mxu0 %v3161
        %3217 = vmatpush.msra.mxu0 %v3159
        %3218 = vmatpush.msra.mxu0 %v3157
        %3219 = vmatpush.msra.mxu0 %v3155
        %3220 = vmatpush.msra.mxu0 %v3153
        %3221 = vmatmul.f32.gmra.mxu0 %v3118
        %v3222 = vpop.f32.mrf.mxu0
        %v3223 = vadd.f32 %v3203, %v3222
        %3224 = vdwg.mxu0
        %3225 = vmatpush.msra.mxu0 %v3152
        %3226 = vmatpush.msra.mxu0 %v3150
        %3227 = vmatpush.msra.mxu0 %v3148
        %3228 = vmatpush.msra.mxu0 %v3146
        %3229 = vmatpush.msra.mxu0 %v3144
        %3230 = vmatpush.msra.mxu0 %v3142
        %3231 = vmatpush.msra.mxu0 %v3140
        %3232 = vmatpush.msra.mxu0 %v3138
        %3233 = vmatpush.msra.mxu0 %v3136
        %3234 = vmatpush.msra.mxu0 %v3134
        %3235 = vmatpush.msra.mxu0 %v3132
        %3236 = vmatpush.msra.mxu0 %v3130
        %3237 = vmatpush.msra.mxu0 %v3128
        %3238 = vmatpush.msra.mxu0 %v3126
        %3239 = vmatpush.msra.mxu0 %v3124
        %3240 = vmatpush.msra.mxu0 %v3122
        %3241 = vmatmul.f32.gmra.mxu0 %v3098
        %v3242 = vpop.f32.mrf.mxu0
        %v3243 = vadd.f32 0.0, %v3242
        %3244 = vdwg.mxu0
        %3245 = vmatpush.msra.mxu0 %v3184
        %3246 = vmatpush.msra.mxu0 %v3182
        %3247 = vmatpush.msra.mxu0 %v3180
        %3248 = vmatpush.msra.mxu0 %v3178
        %3249 = vmatpush.msra.mxu0 %v3176
        %3250 = vmatpush.msra.mxu0 %v3174
        %3251 = vmatpush.msra.mxu0 %v3172
        %3252 = vmatpush.msra.mxu0 %v3170
        %3253 = vmatpush.msra.mxu0 %v3168
        %3254 = vmatpush.msra.mxu0 %v3166
        %3255 = vmatpush.msra.mxu0 %v3164
        %3256 = vmatpush.msra.mxu0 %v3162
        %3257 = vmatpush.msra.mxu0 %v3160
        %3258 = vmatpush.msra.mxu0 %v3158
        %3259 = vmatpush.msra.mxu0 %v3156
        %3260 = vmatpush.msra.mxu0 %v3154
        %3261 = vmatmul.f32.gmra.mxu0 %v3118
        %v3262 = vpop.f32.mrf.mxu0
        %v3263 = vadd.f32 %v3243, %v3262
        %3264 = vdwg.mxu0
        %3265 = vmatpush.msra.mxu0 %v3041
        %3266 = vmatpush.msra.mxu0 %v3039
        %3267 = vmatpush.msra.mxu0 %v3037
        %3268 = vmatpush.msra.mxu0 %v3035
        %3269 = vmatpush.msra.mxu0 %v3033
        %3270 = vmatpush.msra.mxu0 %v3031
        %3271 = vmatpush.msra.mxu0 %v3029
        %3272 = vmatpush.msra.mxu0 %v3027
        %3273 = vmatpush.msra.mxu0 %v3025
        %3274 = vmatpush.msra.mxu0 %v3023
        %3275 = vmatpush.msra.mxu0 %v3021
        %3276 = vmatpush.msra.mxu0 %v3019
        %3277 = vmatpush.msra.mxu0 %v3017
        %3278 = vmatpush.msra.mxu0 %v3015
        %3279 = vmatpush.msra.mxu0 %v3013
        %3280 = vmatpush.msra.mxu0 %v3011
        %3281 = vmatmul.f32.gmra.mxu0 %v2989
        %v3282 = vpop.f32.mrf.mxu0
        %v3283 = vadd.f32 %v3223, %v3282
        %3284 = vdwg.mxu0
        %3285 = vmatpush.msra.mxu0 %v3073
        %3286 = vmatpush.msra.mxu0 %v3071
        %3287 = vmatpush.msra.mxu0 %v3069
        %3288 = vmatpush.msra.mxu0 %v3067
        %3289 = vmatpush.msra.mxu0 %v3065
        %3290 = vmatpush.msra.mxu0 %v3063
        %3291 = vmatpush.msra.mxu0 %v3061
        %3292 = vmatpush.msra.mxu0 %v3059
        %3293 = vmatpush.msra.mxu0 %v3057
        %3294 = vmatpush.msra.mxu0 %v3055
        %3295 = vmatpush.msra.mxu0 %v3053
        %3296 = vmatpush.msra.mxu0 %v3051
        %3297 = vmatpush.msra.mxu0 %v3049
        %3298 = vmatpush.msra.mxu0 %v3047
        %3299 = vmatpush.msra.mxu0 %v3045
        %3300 = vmatpush.msra.mxu0 %v3043
        %3301 = vmatmul.f32.gmra.mxu0 %v3009
        %v3302 = vpop.f32.mrf.mxu0
        %v3303 = vadd.f32 %v3283, %v3302
        %3304 = vdwg.mxu0
        %3305 = vmatpush.msra.mxu0 %v3042
        %3306 = vmatpush.msra.mxu0 %v3040
        %3307 = vmatpush.msra.mxu0 %v3038
        %3308 = vmatpush.msra.mxu0 %v3036
        %3309 = vmatpush.msra.mxu0 %v3034
        %3310 = vmatpush.msra.mxu0 %v3032
        %3311 = vmatpush.msra.mxu0 %v3030
        %3312 = vmatpush.msra.mxu0 %v3028
        %3313 = vmatpush.msra.mxu0 %v3026
        %3314 = vmatpush.msra.mxu0 %v3024
        %3315 = vmatpush.msra.mxu0 %v3022
        %3316 = vmatpush.msra.mxu0 %v3020
        %3317 = vmatpush.msra.mxu0 %v3018
        %3318 = vmatpush.msra.mxu0 %v3016
        %3319 = vmatpush.msra.mxu0 %v3014
        %3320 = vmatpush.msra.mxu0 %v3012
        %3321 = vmatmul.f32.gmra.mxu0 %v2989
        %v3322 = vpop.f32.mrf.mxu0
        %v3323 = vadd.f32 %v3263, %v3322
        %3324 = vdwg.mxu0
        %3325 = vmatpush.msra.mxu0 %v3074
        %3326 = vmatpush.msra.mxu0 %v3072
        %3327 = vmatpush.msra.mxu0 %v3070
        %3328 = vmatpush.msra.mxu0 %v3068
        %3329 = vmatpush.msra.mxu0 %v3066
        %3330 = vmatpush.msra.mxu0 %v3064
        %3331 = vmatpush.msra.mxu0 %v3062
        %3332 = vmatpush.msra.mxu0 %v3060
        %3333 = vmatpush.msra.mxu0 %v3058
        %3334 = vmatpush.msra.mxu0 %v3056
        %3335 = vmatpush.msra.mxu0 %v3054
        %3336 = vmatpush.msra.mxu0 %v3052
        %3337 = vmatpush.msra.mxu0 %v3050
        %3338 = vmatpush.msra.mxu0 %v3048
        %3339 = vmatpush.msra.mxu0 %v3046
        %3340 = vmatpush.msra.mxu0 %v3044
        %3341 = vmatmul.f32.gmra.mxu0 %v3009
        %v3342 = vpop.f32.mrf.mxu0
        %v3343 = vadd.f32 %v3323, %v3342
        %3344 = vdwg.mxu0
        %s3345 = scalar_lea.vmem %s9, 16
        %v3346 = vld [vmem:[%s3345] sm:$0xff]
        %v3348 = vsel %vm2786, %v3346, 0
        %3350 = vmatpush.msra.mxu0 0.0
        %3351 = vmatpush.msra.mxu0 0.0
        %3352 = vmatpush.msra.mxu0 0.0
        %3353 = vmatpush.msra.mxu0 0.0
        %3354 = vmatpush.msra.mxu0 0.0
        %3355 = vmatpush.msra.mxu0 0.0
        %3356 = vmatpush.msra.mxu0 0.0
        %3357 = vmatpush.msra.mxu0 0.0
        %3358 = vmatpush.msra.mxu0 0.0
        %3359 = vmatpush.msra.mxu0 0.0
        %3360 = vmatpush.msra.mxu0 0.0
        %3361 = vmatpush.msra.mxu0 0.0
        %3362 = vmatpush.msra.mxu0 0.0
        %3363 = vmatpush.msra.mxu0 0.0
        %3364 = vmatpush.msra.mxu0 %v2965
        %3365 = vmatpush.msra.mxu0 %v2963
        %3366 = vmatmul.f32.gmra.mxu0 %v3348
        %v3367 = vpop.f32.mrf.mxu0
        %v3368 = vadd.f32 0.0, %v3367
        %3369 = vdwg.mxu0
        %3370 = vmatpush.msra.mxu0 0.0
        %3371 = vmatpush.msra.mxu0 0.0
        %3372 = vmatpush.msra.mxu0 0.0
        %3373 = vmatpush.msra.mxu0 0.0
        %3374 = vmatpush.msra.mxu0 0.0
        %3375 = vmatpush.msra.mxu0 0.0
        %3376 = vmatpush.msra.mxu0 0.0
        %3377 = vmatpush.msra.mxu0 0.0
        %3378 = vmatpush.msra.mxu0 0.0
        %3379 = vmatpush.msra.mxu0 0.0
        %3380 = vmatpush.msra.mxu0 0.0
        %3381 = vmatpush.msra.mxu0 0.0
        %3382 = vmatpush.msra.mxu0 0.0
        %3383 = vmatpush.msra.mxu0 0.0
        %3384 = vmatpush.msra.mxu0 %v2966
        %3385 = vmatpush.msra.mxu0 %v2964
        %3386 = vmatmul.f32.gmra.mxu0 %v3348
        %v3387 = vpop.f32.mrf.mxu0
        %v3388 = vadd.f32 0.0, %v3387
        %3389 = vdwg.mxu0
        %s3390 = scalar_lea.vmem [#allocation5], 1024
        %v3391 = vld [vmem:[%s3390] sm:$0xff]
        %v3392 = vld [vmem:[%s3390 + $0x8] sm:$0xff]
        %v3393 = vld [vmem:[%s3390 + $0x10] sm:$0xff]
        %v3394 = vld [vmem:[%s3390 + $0x18] sm:$0xff]
        %v3395 = vld [vmem:[%s3390 + $0x20] sm:$0xff]
        %v3396 = vld [vmem:[%s3390 + $0x28] sm:$0xff]
        %v3397 = vld [vmem:[%s3390 + $0x30] sm:$0xff]
        %v3398 = vld [vmem:[%s3390 + $0x38] sm:$0xff]
        %v3399 = vld [vmem:[%s3390 + $0x40] sm:$0xff]
        %v3400 = vld [vmem:[%s3390 + $0x48] sm:$0xff]
        %v3401 = vld [vmem:[%s3390 + $0x50] sm:$0xff]
        %v3402 = vld [vmem:[%s3390 + $0x58] sm:$0xff]
        %v3403 = vld [vmem:[%s3390 + $0x60] sm:$0xff]
        %v3404 = vld [vmem:[%s3390 + $0x68] sm:$0xff]
        %v3405 = vld [vmem:[%s3390 + $0x70] sm:$0xff]
        %v3406 = vld [vmem:[%s3390 + $0x78] sm:$0xff]
        %v3407 = vld [vmem:[%s3390 + $0x80] sm:$0xff]
        %v3408 = vld [vmem:[%s3390 + $0x88] sm:$0xff]
        %v3409 = vld [vmem:[%s3390 + $0x90] sm:$0xff]
        %v3410 = vld [vmem:[%s3390 + $0x98] sm:$0xff]
        %v3411 = vld [vmem:[%s3390 + $0xa0] sm:$0xff]
        %v3412 = vld [vmem:[%s3390 + $0xa8] sm:$0xff]
        %v3413 = vld [vmem:[%s3390 + $0xb0] sm:$0xff]
        %v3414 = vld [vmem:[%s3390 + $0xb8] sm:$0xff]
        %v3415 = vld [vmem:[%s3390 + $0xc0] sm:$0xff]
        %v3416 = vld [vmem:[%s3390 + $0xc8] sm:$0xff]
        %v3417 = vld [vmem:[%s3390 + $0xd0] sm:$0xff]
        %v3418 = vld [vmem:[%s3390 + $0xd8] sm:$0xff]
        %v3419 = vld [vmem:[%s3390 + $0xe0] sm:$0xff]
        %v3420 = vld [vmem:[%s3390 + $0xe8] sm:$0xff]
        %v3421 = vld [vmem:[%s3390 + $0xf0] sm:$0xff]
        %v3422 = vld [vmem:[%s3390 + $0xf8] sm:$0xff]
        %v3423 = vld [vmem:[%s3390 + $0x100] sm:$0xff]
        %v3424 = vld [vmem:[%s3390 + $0x108] sm:$0xff]
        %v3425 = vld [vmem:[%s3390 + $0x110] sm:$0xff]
        %v3426 = vld [vmem:[%s3390 + $0x118] sm:$0xff]
        %v3427 = vld [vmem:[%s3390 + $0x120] sm:$0xff]
        %v3428 = vld [vmem:[%s3390 + $0x128] sm:$0xff]
        %v3429 = vld [vmem:[%s3390 + $0x130] sm:$0xff]
        %v3430 = vld [vmem:[%s3390 + $0x138] sm:$0xff]
        %v3431 = vld [vmem:[%s3390 + $0x140] sm:$0xff]
        %v3432 = vld [vmem:[%s3390 + $0x148] sm:$0xff]
        %v3433 = vld [vmem:[%s3390 + $0x150] sm:$0xff]
        %v3434 = vld [vmem:[%s3390 + $0x158] sm:$0xff]
        %v3435 = vld [vmem:[%s3390 + $0x160] sm:$0xff]
        %v3436 = vld [vmem:[%s3390 + $0x168] sm:$0xff]
        %v3437 = vld [vmem:[%s3390 + $0x170] sm:$0xff]
        %v3438 = vld [vmem:[%s3390 + $0x178] sm:$0xff]
        %v3439 = vld [vmem:[%s3390 + $0x180] sm:$0xff]
        %v3440 = vld [vmem:[%s3390 + $0x188] sm:$0xff]
        %v3441 = vld [vmem:[%s3390 + $0x190] sm:$0xff]
        %v3442 = vld [vmem:[%s3390 + $0x198] sm:$0xff]
        %v3443 = vld [vmem:[%s3390 + $0x1a0] sm:$0xff]
        %v3444 = vld [vmem:[%s3390 + $0x1a8] sm:$0xff]
        %v3445 = vld [vmem:[%s3390 + $0x1b0] sm:$0xff]
        %v3446 = vld [vmem:[%s3390 + $0x1b8] sm:$0xff]
        %v3447 = vld [vmem:[%s3390 + $0x1c0] sm:$0xff]
        %v3448 = vld [vmem:[%s3390 + $0x1c8] sm:$0xff]
        %v3449 = vld [vmem:[%s3390 + $0x1d0] sm:$0xff]
        %v3450 = vld [vmem:[%s3390 + $0x1d8] sm:$0xff]
        %v3451 = vld [vmem:[%s3390 + $0x1e0] sm:$0xff]
        %v3452 = vld [vmem:[%s3390 + $0x1e8] sm:$0xff]
        %v3453 = vld [vmem:[%s3390 + $0x1f0] sm:$0xff]
        %v3454 = vld [vmem:[%s3390 + $0x1f8] sm:$0xff]
        %3455 = vmatpush.msra.mxu0 %v3421
        %3456 = vmatpush.msra.mxu0 %v3419
        %3457 = vmatpush.msra.mxu0 %v3417
        %3458 = vmatpush.msra.mxu0 %v3415
        %3459 = vmatpush.msra.mxu0 %v3413
        %3460 = vmatpush.msra.mxu0 %v3411
        %3461 = vmatpush.msra.mxu0 %v3409
        %3462 = vmatpush.msra.mxu0 %v3407
        %3463 = vmatpush.msra.mxu0 %v3405
        %3464 = vmatpush.msra.mxu0 %v3403
        %3465 = vmatpush.msra.mxu0 %v3401
        %3466 = vmatpush.msra.mxu0 %v3399
        %3467 = vmatpush.msra.mxu0 %v3397
        %3468 = vmatpush.msra.mxu0 %v3395
        %3469 = vmatpush.msra.mxu0 %v3393
        %3470 = vmatpush.msra.mxu0 %v3391
        %3471 = vmatmul.f32.gmra.mxu0 %v3368
        %v3472 = vpop.f32.mrf.mxu0
        %v3473 = vadd.f32 0.0, %v3472
        %3474 = vdwg.mxu0
        %3475 = vmatpush.msra.mxu0 %v3453
        %3476 = vmatpush.msra.mxu0 %v3451
        %3477 = vmatpush.msra.mxu0 %v3449
        %3478 = vmatpush.msra.mxu0 %v3447
        %3479 = vmatpush.msra.mxu0 %v3445
        %3480 = vmatpush.msra.mxu0 %v3443
        %3481 = vmatpush.msra.mxu0 %v3441
        %3482 = vmatpush.msra.mxu0 %v3439
        %3483 = vmatpush.msra.mxu0 %v3437
        %3484 = vmatpush.msra.mxu0 %v3435
        %3485 = vmatpush.msra.mxu0 %v3433
        %3486 = vmatpush.msra.mxu0 %v3431
        %3487 = vmatpush.msra.mxu0 %v3429
        %3488 = vmatpush.msra.mxu0 %v3427
        %3489 = vmatpush.msra.mxu0 %v3425
        %3490 = vmatpush.msra.mxu0 %v3423
        %3491 = vmatmul.f32.gmra.mxu0 %v3388
        %v3492 = vpop.f32.mrf.mxu0
        %v3493 = vadd.f32 %v3473, %v3492
        %3494 = vdwg.mxu0
        %3495 = vmatpush.msra.mxu0 %v3422
        %3496 = vmatpush.msra.mxu0 %v3420
        %3497 = vmatpush.msra.mxu0 %v3418
        %3498 = vmatpush.msra.mxu0 %v3416
        %3499 = vmatpush.msra.mxu0 %v3414
        %3500 = vmatpush.msra.mxu0 %v3412
        %3501 = vmatpush.msra.mxu0 %v3410
        %3502 = vmatpush.msra.mxu0 %v3408
        %3503 = vmatpush.msra.mxu0 %v3406
        %3504 = vmatpush.msra.mxu0 %v3404
        %3505 = vmatpush.msra.mxu0 %v3402
        %3506 = vmatpush.msra.mxu0 %v3400
        %3507 = vmatpush.msra.mxu0 %v3398
        %3508 = vmatpush.msra.mxu0 %v3396
        %3509 = vmatpush.msra.mxu0 %v3394
        %3510 = vmatpush.msra.mxu0 %v3392
        %3511 = vmatmul.f32.gmra.mxu0 %v3368
        %v3512 = vpop.f32.mrf.mxu0
        %v3513 = vadd.f32 0.0, %v3512
        %3514 = vdwg.mxu0
        %3515 = vmatpush.msra.mxu0 %v3454
        %3516 = vmatpush.msra.mxu0 %v3452
        %3517 = vmatpush.msra.mxu0 %v3450
        %3518 = vmatpush.msra.mxu0 %v3448
        %3519 = vmatpush.msra.mxu0 %v3446
        %3520 = vmatpush.msra.mxu0 %v3444
        %3521 = vmatpush.msra.mxu0 %v3442
        %3522 = vmatpush.msra.mxu0 %v3440
        %3523 = vmatpush.msra.mxu0 %v3438
        %3524 = vmatpush.msra.mxu0 %v3436
        %3525 = vmatpush.msra.mxu0 %v3434
        %3526 = vmatpush.msra.mxu0 %v3432
        %3527 = vmatpush.msra.mxu0 %v3430
        %3528 = vmatpush.msra.mxu0 %v3428
        %3529 = vmatpush.msra.mxu0 %v3426
        %3530 = vmatpush.msra.mxu0 %v3424
        %3531 = vmatmul.f32.gmra.mxu0 %v3388
        %v3532 = vpop.f32.mrf.mxu0
        %v3533 = vadd.f32 %v3513, %v3532
        %3534 = vdwg.mxu0
        %v3535 = vadd.f32 %v3303, %v3493
        %v3536 = vadd.f32 %v3343, %v3533
        %s3537 = scalar_lea.vmem %s9, 24
        %v3538 = vld [vmem:[%s3537] sm:$0xff]
        %v3540 = vsel %vm2786, %v3538, 0
        %3542 = vmatpush.msra.mxu0 0.0
        %3543 = vmatpush.msra.mxu0 0.0
        %3544 = vmatpush.msra.mxu0 0.0
        %3545 = vmatpush.msra.mxu0 0.0
        %3546 = vmatpush.msra.mxu0 0.0
        %3547 = vmatpush.msra.mxu0 0.0
        %3548 = vmatpush.msra.mxu0 0.0
        %3549 = vmatpush.msra.mxu0 0.0
        %3550 = vmatpush.msra.mxu0 0.0
        %3551 = vmatpush.msra.mxu0 0.0
        %3552 = vmatpush.msra.mxu0 0.0
        %3553 = vmatpush.msra.mxu0 0.0
        %3554 = vmatpush.msra.mxu0 0.0
        %3555 = vmatpush.msra.mxu0 0.0
        %3556 = vmatpush.msra.mxu0 %v2965
        %3557 = vmatpush.msra.mxu0 %v2963
        %3558 = vmatmul.f32.gmra.mxu0 %v3540
        %v3559 = vpop.f32.mrf.mxu0
        %v3560 = vadd.f32 0.0, %v3559
        %3561 = vdwg.mxu0
        %3562 = vmatpush.msra.mxu0 0.0
        %3563 = vmatpush.msra.mxu0 0.0
        %3564 = vmatpush.msra.mxu0 0.0
        %3565 = vmatpush.msra.mxu0 0.0
        %3566 = vmatpush.msra.mxu0 0.0
        %3567 = vmatpush.msra.mxu0 0.0
        %3568 = vmatpush.msra.mxu0 0.0
        %3569 = vmatpush.msra.mxu0 0.0
        %3570 = vmatpush.msra.mxu0 0.0
        %3571 = vmatpush.msra.mxu0 0.0
        %3572 = vmatpush.msra.mxu0 0.0
        %3573 = vmatpush.msra.mxu0 0.0
        %3574 = vmatpush.msra.mxu0 0.0
        %3575 = vmatpush.msra.mxu0 0.0
        %3576 = vmatpush.msra.mxu0 %v2966
        %3577 = vmatpush.msra.mxu0 %v2964
        %3578 = vmatmul.f32.gmra.mxu0 %v3540
        %v3579 = vpop.f32.mrf.mxu0
        %v3580 = vadd.f32 0.0, %v3579
        %3581 = vdwg.mxu0
        %s3582 = scalar_lea.vmem [#allocation5], 1536
        %v3583 = vld [vmem:[%s3582] sm:$0xff]
        %v3584 = vld [vmem:[%s3582 + $0x8] sm:$0xff]
        %v3585 = vld [vmem:[%s3582 + $0x10] sm:$0xff]
        %v3586 = vld [vmem:[%s3582 + $0x18] sm:$0xff]
        %v3587 = vld [vmem:[%s3582 + $0x20] sm:$0xff]
        %v3588 = vld [vmem:[%s3582 + $0x28] sm:$0xff]
        %v3589 = vld [vmem:[%s3582 + $0x30] sm:$0xff]
        %v3590 = vld [vmem:[%s3582 + $0x38] sm:$0xff]
        %v3591 = vld [vmem:[%s3582 + $0x40] sm:$0xff]
        %v3592 = vld [vmem:[%s3582 + $0x48] sm:$0xff]
        %v3593 = vld [vmem:[%s3582 + $0x50] sm:$0xff]
        %v3594 = vld [vmem:[%s3582 + $0x58] sm:$0xff]
        %v3595 = vld [vmem:[%s3582 + $0x60] sm:$0xff]
        %v3596 = vld [vmem:[%s3582 + $0x68] sm:$0xff]
        %v3597 = vld [vmem:[%s3582 + $0x70] sm:$0xff]
        %v3598 = vld [vmem:[%s3582 + $0x78] sm:$0xff]
        %v3599 = vld [vmem:[%s3582 + $0x80] sm:$0xff]
        %v3600 = vld [vmem:[%s3582 + $0x88] sm:$0xff]
        %v3601 = vld [vmem:[%s3582 + $0x90] sm:$0xff]
        %v3602 = vld [vmem:[%s3582 + $0x98] sm:$0xff]
        %v3603 = vld [vmem:[%s3582 + $0xa0] sm:$0xff]
        %v3604 = vld [vmem:[%s3582 + $0xa8] sm:$0xff]
        %v3605 = vld [vmem:[%s3582 + $0xb0] sm:$0xff]
        %v3606 = vld [vmem:[%s3582 + $0xb8] sm:$0xff]
        %v3607 = vld [vmem:[%s3582 + $0xc0] sm:$0xff]
        %v3608 = vld [vmem:[%s3582 + $0xc8] sm:$0xff]
        %v3609 = vld [vmem:[%s3582 + $0xd0] sm:$0xff]
        %v3610 = vld [vmem:[%s3582 + $0xd8] sm:$0xff]
        %v3611 = vld [vmem:[%s3582 + $0xe0] sm:$0xff]
        %v3612 = vld [vmem:[%s3582 + $0xe8] sm:$0xff]
        %v3613 = vld [vmem:[%s3582 + $0xf0] sm:$0xff]
        %v3614 = vld [vmem:[%s3582 + $0xf8] sm:$0xff]
        %v3615 = vld [vmem:[%s3582 + $0x100] sm:$0xff]
        %v3616 = vld [vmem:[%s3582 + $0x108] sm:$0xff]
        %v3617 = vld [vmem:[%s3582 + $0x110] sm:$0xff]
        %v3618 = vld [vmem:[%s3582 + $0x118] sm:$0xff]
        %v3619 = vld [vmem:[%s3582 + $0x120] sm:$0xff]
        %v3620 = vld [vmem:[%s3582 + $0x128] sm:$0xff]
        %v3621 = vld [vmem:[%s3582 + $0x130] sm:$0xff]
        %v3622 = vld [vmem:[%s3582 + $0x138] sm:$0xff]
        %v3623 = vld [vmem:[%s3582 + $0x140] sm:$0xff]
        %v3624 = vld [vmem:[%s3582 + $0x148] sm:$0xff]
        %v3625 = vld [vmem:[%s3582 + $0x150] sm:$0xff]
        %v3626 = vld [vmem:[%s3582 + $0x158] sm:$0xff]
        %v3627 = vld [vmem:[%s3582 + $0x160] sm:$0xff]
        %v3628 = vld [vmem:[%s3582 + $0x168] sm:$0xff]
        %v3629 = vld [vmem:[%s3582 + $0x170] sm:$0xff]
        %v3630 = vld [vmem:[%s3582 + $0x178] sm:$0xff]
        %v3631 = vld [vmem:[%s3582 + $0x180] sm:$0xff]
        %v3632 = vld [vmem:[%s3582 + $0x188] sm:$0xff]
        %v3633 = vld [vmem:[%s3582 + $0x190] sm:$0xff]
        %v3634 = vld [vmem:[%s3582 + $0x198] sm:$0xff]
        %v3635 = vld [vmem:[%s3582 + $0x1a0] sm:$0xff]
        %v3636 = vld [vmem:[%s3582 + $0x1a8] sm:$0xff]
        %v3637 = vld [vmem:[%s3582 + $0x1b0] sm:$0xff]
        %v3638 = vld [vmem:[%s3582 + $0x1b8] sm:$0xff]
        %v3639 = vld [vmem:[%s3582 + $0x1c0] sm:$0xff]
        %v3640 = vld [vmem:[%s3582 + $0x1c8] sm:$0xff]
        %v3641 = vld [vmem:[%s3582 + $0x1d0] sm:$0xff]
        %v3642 = vld [vmem:[%s3582 + $0x1d8] sm:$0xff]
        %v3643 = vld [vmem:[%s3582 + $0x1e0] sm:$0xff]
        %v3644 = vld [vmem:[%s3582 + $0x1e8] sm:$0xff]
        %v3645 = vld [vmem:[%s3582 + $0x1f0] sm:$0xff]
        %v3646 = vld [vmem:[%s3582 + $0x1f8] sm:$0xff]
        %3647 = vmatpush.msra.mxu0 %v3613
        %3648 = vmatpush.msra.mxu0 %v3611
        %3649 = vmatpush.msra.mxu0 %v3609
        %3650 = vmatpush.msra.mxu0 %v3607
        %3651 = vmatpush.msra.mxu0 %v3605
        %3652 = vmatpush.msra.mxu0 %v3603
        %3653 = vmatpush.msra.mxu0 %v3601
        %3654 = vmatpush.msra.mxu0 %v3599
        %3655 = vmatpush.msra.mxu0 %v3597
        %3656 = vmatpush.msra.mxu0 %v3595
        %3657 = vmatpush.msra.mxu0 %v3593
        %3658 = vmatpush.msra.mxu0 %v3591
        %3659 = vmatpush.msra.mxu0 %v3589
        %3660 = vmatpush.msra.mxu0 %v3587
        %3661 = vmatpush.msra.mxu0 %v3585
        %3662 = vmatpush.msra.mxu0 %v3583
        %3663 = vmatmul.f32.gmra.mxu0 %v3560
        %v3664 = vpop.f32.mrf.mxu0
        %v3665 = vadd.f32 0.0, %v3664
        %3666 = vdwg.mxu0
        %3667 = vmatpush.msra.mxu0 %v3645
        %3668 = vmatpush.msra.mxu0 %v3643
        %3669 = vmatpush.msra.mxu0 %v3641
        %3670 = vmatpush.msra.mxu0 %v3639
        %3671 = vmatpush.msra.mxu0 %v3637
        %3672 = vmatpush.msra.mxu0 %v3635
        %3673 = vmatpush.msra.mxu0 %v3633
        %3674 = vmatpush.msra.mxu0 %v3631
        %3675 = vmatpush.msra.mxu0 %v3629
        %3676 = vmatpush.msra.mxu0 %v3627
        %3677 = vmatpush.msra.mxu0 %v3625
        %3678 = vmatpush.msra.mxu0 %v3623
        %3679 = vmatpush.msra.mxu0 %v3621
        %3680 = vmatpush.msra.mxu0 %v3619
        %3681 = vmatpush.msra.mxu0 %v3617
        %3682 = vmatpush.msra.mxu0 %v3615
        %3683 = vmatmul.f32.gmra.mxu0 %v3580
        %v3684 = vpop.f32.mrf.mxu0
        %v3685 = vadd.f32 %v3665, %v3684
        %3686 = vdwg.mxu0
        %3687 = vmatpush.msra.mxu0 %v3614
        %3688 = vmatpush.msra.mxu0 %v3612
        %3689 = vmatpush.msra.mxu0 %v3610
        %3690 = vmatpush.msra.mxu0 %v3608
        %3691 = vmatpush.msra.mxu0 %v3606
        %3692 = vmatpush.msra.mxu0 %v3604
        %3693 = vmatpush.msra.mxu0 %v3602
        %3694 = vmatpush.msra.mxu0 %v3600
        %3695 = vmatpush.msra.mxu0 %v3598
        %3696 = vmatpush.msra.mxu0 %v3596
        %3697 = vmatpush.msra.mxu0 %v3594
        %3698 = vmatpush.msra.mxu0 %v3592
        %3699 = vmatpush.msra.mxu0 %v3590
        %3700 = vmatpush.msra.mxu0 %v3588
        %3701 = vmatpush.msra.mxu0 %v3586
        %3702 = vmatpush.msra.mxu0 %v3584
        %3703 = vmatmul.f32.gmra.mxu0 %v3560
        %v3704 = vpop.f32.mrf.mxu0
        %v3705 = vadd.f32 0.0, %v3704
        %3706 = vdwg.mxu0
        %3707 = vmatpush.msra.mxu0 %v3646
        %3708 = vmatpush.msra.mxu0 %v3644
        %3709 = vmatpush.msra.mxu0 %v3642
        %3710 = vmatpush.msra.mxu0 %v3640
        %3711 = vmatpush.msra.mxu0 %v3638
        %3712 = vmatpush.msra.mxu0 %v3636
        %3713 = vmatpush.msra.mxu0 %v3634
        %3714 = vmatpush.msra.mxu0 %v3632
        %3715 = vmatpush.msra.mxu0 %v3630
        %3716 = vmatpush.msra.mxu0 %v3628
        %3717 = vmatpush.msra.mxu0 %v3626
        %3718 = vmatpush.msra.mxu0 %v3624
        %3719 = vmatpush.msra.mxu0 %v3622
        %3720 = vmatpush.msra.mxu0 %v3620
        %3721 = vmatpush.msra.mxu0 %v3618
        %3722 = vmatpush.msra.mxu0 %v3616
        %3723 = vmatmul.f32.gmra.mxu0 %v3580
        %v3724 = vpop.f32.mrf.mxu0
        %v3725 = vadd.f32 %v3705, %v3724
        %3726 = vdwg.mxu0
        %v3727 = vadd.f32 %v3535, %v3685
        %v3728 = vadd.f32 %v3536, %v3725
        %v3729 = vrot.slane %v3727, 4
        %v3730 = vadd.f32 %v3727, %v3729
        %v3731 = vrot.slane %v3730, 2
        %v3732 = vadd.f32 %v3730, %v3731
        %v3733 = vrot.slane %v3732, 1
        %v3734 = vadd.f32 %v3732, %v3733
        %v3735 = vrot.slane %v3728, 4
        %v3736 = vadd.f32 %v3728, %v3735
        %v3737 = vrot.slane %v3736, 2
        %v3738 = vadd.f32 %v3736, %v3737
        %v3739 = vrot.slane %v3738, 1
        %v3740 = vadd.f32 %v3738, %v3739
        %v3741 = vld [vmem:[%s11] sm:$0xff]
        %v3742 = vld [vmem:[%s11 + $0x8] sm:$0xff]
        %v3743 = vld [vmem:[%s11 + $0x10] sm:$0xff]
        %v3744 = vld [vmem:[%s11 + $0x18] sm:$0xff]
        %v3745 = vld [vmem:[%s11 + $0x20] sm:$0xff]
        %v3746 = vld [vmem:[%s11 + $0x28] sm:$0xff]
        %v3747 = vld [vmem:[%s11 + $0x30] sm:$0xff]
        %v3748 = vld [vmem:[%s11 + $0x38] sm:$0xff]
        %v3749 = vld [vmem:[%s11 + $0x40] sm:$0xff]
        %v3750 = vld [vmem:[%s11 + $0x48] sm:$0xff]
        %v3751 = vld [vmem:[%s11 + $0x50] sm:$0xff]
        %v3752 = vld [vmem:[%s11 + $0x58] sm:$0xff]
        %v3753 = vld [vmem:[%s11 + $0x60] sm:$0xff]
        %v3754 = vld [vmem:[%s11 + $0x68] sm:$0xff]
        %v3755 = vld [vmem:[%s11 + $0x70] sm:$0xff]
        %v3756 = vld [vmem:[%s11 + $0x78] sm:$0xff]
        %v3757 = vld [vmem:[%s11 + $0x80] sm:$0xff]
        %v3758 = vld [vmem:[%s11 + $0x88] sm:$0xff]
        %v3759 = vld [vmem:[%s11 + $0x90] sm:$0xff]
        %v3760 = vld [vmem:[%s11 + $0x98] sm:$0xff]
        %v3761 = vld [vmem:[%s11 + $0xa0] sm:$0xff]
        %v3762 = vld [vmem:[%s11 + $0xa8] sm:$0xff]
        %v3763 = vld [vmem:[%s11 + $0xb0] sm:$0xff]
        %v3764 = vld [vmem:[%s11 + $0xb8] sm:$0xff]
        %v3765 = vld [vmem:[%s11 + $0xc0] sm:$0xff]
        %v3766 = vld [vmem:[%s11 + $0xc8] sm:$0xff]
        %v3767 = vld [vmem:[%s11 + $0xd0] sm:$0xff]
        %v3768 = vld [vmem:[%s11 + $0xd8] sm:$0xff]
        %v3769 = vld [vmem:[%s11 + $0xe0] sm:$0xff]
        %v3770 = vld [vmem:[%s11 + $0xe8] sm:$0xff]
        %v3771 = vld [vmem:[%s11 + $0xf0] sm:$0xff]
        %v3772 = vld [vmem:[%s11 + $0xf8] sm:$0xff]
        %3773 = vmatpush.msra.mxu0 %v3756
        %3774 = vmatpush.msra.mxu0 %v3755
        %3775 = vmatpush.msra.mxu0 %v3754
        %3776 = vmatpush.msra.mxu0 %v3753
        %3777 = vmatpush.msra.mxu0 %v3752
        %3778 = vmatpush.msra.mxu0 %v3751
        %3779 = vmatpush.msra.mxu0 %v3750
        %3780 = vmatpush.msra.mxu0 %v3749
        %3781 = vmatpush.msra.mxu0 %v3748
        %3782 = vmatpush.msra.mxu0 %v3747
        %3783 = vmatpush.msra.mxu0 %v3746
        %3784 = vmatpush.msra.mxu0 %v3745
        %3785 = vmatpush.msra.mxu0 %v3744
        %3786 = vmatpush.msra.mxu0 %v3743
        %3787 = vmatpush.msra.mxu0 %v3742
        %3788 = vmatpush.msra.mxu0 %v3741
        %3789 = vmatmul.f32.gmra.mxu0 %v3734
        %v3790 = vpop.f32.mrf.mxu0
        %v3791 = vadd.f32 0.0, %v3790
        %3792 = vdwg.mxu0
        %3793 = vmatpush.msra.mxu0 %v3772
        %3794 = vmatpush.msra.mxu0 %v3771
        %3795 = vmatpush.msra.mxu0 %v3770
        %3796 = vmatpush.msra.mxu0 %v3769
        %3797 = vmatpush.msra.mxu0 %v3768
        %3798 = vmatpush.msra.mxu0 %v3767
        %3799 = vmatpush.msra.mxu0 %v3766
        %3800 = vmatpush.msra.mxu0 %v3765
        %3801 = vmatpush.msra.mxu0 %v3764
        %3802 = vmatpush.msra.mxu0 %v3763
        %3803 = vmatpush.msra.mxu0 %v3762
        %3804 = vmatpush.msra.mxu0 %v3761
        %3805 = vmatpush.msra.mxu0 %v3760
        %3806 = vmatpush.msra.mxu0 %v3759
        %3807 = vmatpush.msra.mxu0 %v3758
        %3808 = vmatpush.msra.mxu0 %v3757
        %3809 = vmatmul.f32.gmra.mxu0 %v3740
        %v3810 = vpop.f32.mrf.mxu0
        %v3811 = vadd.f32 %v3791, %v3810
        %3812 = vdwg.mxu0
        %v3813 = vmul.f32 %v3811, 0.015625
        %v3814 = vld [vmem:[%s12] sm:$0xff]
        %v3815 = vld [vmem:[%s12 + $0x8] sm:$0xff]
        %v3816 = vld [vmem:[%s12 + $0x10] sm:$0xff]
        %v3817 = vld [vmem:[%s12 + $0x18] sm:$0xff]
        %v3818 = vld [vmem:[%s12 + $0x20] sm:$0xff]
        %v3819 = vld [vmem:[%s12 + $0x28] sm:$0xff]
        %v3820 = vld [vmem:[%s12 + $0x30] sm:$0xff]
        %v3821 = vld [vmem:[%s12 + $0x38] sm:$0xff]
        %v3823 = vsel %vm1842, %v3813, 0
        %3825 = vmatpush.msra.mxu0 0.0
        %3826 = vmatpush.msra.mxu0 0.0
        %3827 = vmatpush.msra.mxu0 0.0
        %3828 = vmatpush.msra.mxu0 0.0
        %3829 = vmatpush.msra.mxu0 0.0
        %3830 = vmatpush.msra.mxu0 0.0
        %3831 = vmatpush.msra.mxu0 0.0
        %3832 = vmatpush.msra.mxu0 0.0
        %3833 = vmatpush.msra.mxu0 0.0
        %3834 = vmatpush.msra.mxu0 0.0
        %3835 = vmatpush.msra.mxu0 0.0
        %3836 = vmatpush.msra.mxu0 0.0
        %3837 = vmatpush.msra.mxu0 %v3820
        %3838 = vmatpush.msra.mxu0 %v3818
        %3839 = vmatpush.msra.mxu0 %v3816
        %3840 = vmatpush.msra.mxu0 %v3814
        %3841 = vmatmul.f32.gmra.mxu0 %v3823
        %v3842 = vpop.f32.mrf.mxu0
        %v3843 = vadd.f32 0.0, %v3842
        %3844 = vdwg.mxu0
        %3845 = vmatpush.msra.mxu0 0.0
        %3846 = vmatpush.msra.mxu0 0.0
        %3847 = vmatpush.msra.mxu0 0.0
        %3848 = vmatpush.msra.mxu0 0.0
        %3849 = vmatpush.msra.mxu0 0.0
        %3850 = vmatpush.msra.mxu0 0.0
        %3851 = vmatpush.msra.mxu0 0.0
        %3852 = vmatpush.msra.mxu0 0.0
        %3853 = vmatpush.msra.mxu0 0.0
        %3854 = vmatpush.msra.mxu0 0.0
        %3855 = vmatpush.msra.mxu0 0.0
        %3856 = vmatpush.msra.mxu0 0.0
        %3857 = vmatpush.msra.mxu0 %v3821
        %3858 = vmatpush.msra.mxu0 %v3819
        %3859 = vmatpush.msra.mxu0 %v3817
        %3860 = vmatpush.msra.mxu0 %v3815
        %3861 = vmatmul.f32.gmra.mxu0 %v3823
        %v3862 = vpop.f32.mrf.mxu0
        %v3863 = vadd.f32 0.0, %v3862
        %3864 = vdwg.mxu0
        %v3865 = vperm.slane %v3843, 0
        %v3866 = vperm.slane %v3863, 0
        %v3867 = vsub.f32 %v3727, %v3865
        %v3868 = vsub.f32 %v3728, %v3866
        %v3869 = vmul.f32 %v3867, %v3867
        %v3870 = vmul.f32 %v3868, %v3868
        %v3871 = vrot.slane %v3869, 4
        %v3872 = vadd.f32 %v3869, %v3871
        %v3873 = vrot.slane %v3872, 2
        %v3874 = vadd.f32 %v3872, %v3873
        %v3875 = vrot.slane %v3874, 1
        %v3876 = vadd.f32 %v3874, %v3875
        %v3877 = vrot.slane %v3870, 4
        %v3878 = vadd.f32 %v3870, %v3877
        %v3879 = vrot.slane %v3878, 2
        %v3880 = vadd.f32 %v3878, %v3879
        %v3881 = vrot.slane %v3880, 1
        %v3882 = vadd.f32 %v3880, %v3881
        %3883 = vmatpush.msra.mxu0 %v3756
        %3884 = vmatpush.msra.mxu0 %v3755
        %3885 = vmatpush.msra.mxu0 %v3754
        %3886 = vmatpush.msra.mxu0 %v3753
        %3887 = vmatpush.msra.mxu0 %v3752
        %3888 = vmatpush.msra.mxu0 %v3751
        %3889 = vmatpush.msra.mxu0 %v3750
        %3890 = vmatpush.msra.mxu0 %v3749
        %3891 = vmatpush.msra.mxu0 %v3748
        %3892 = vmatpush.msra.mxu0 %v3747
        %3893 = vmatpush.msra.mxu0 %v3746
        %3894 = vmatpush.msra.mxu0 %v3745
        %3895 = vmatpush.msra.mxu0 %v3744
        %3896 = vmatpush.msra.mxu0 %v3743
        %3897 = vmatpush.msra.mxu0 %v3742
        %3898 = vmatpush.msra.mxu0 %v3741
        %3899 = vmatmul.f32.gmra.mxu0 %v3876
        %v3900 = vpop.f32.mrf.mxu0
        %v3901 = vadd.f32 0.0, %v3900
        %3902 = vdwg.mxu0
        %3903 = vmatpush.msra.mxu0 %v3772
        %3904 = vmatpush.msra.mxu0 %v3771
        %3905 = vmatpush.msra.mxu0 %v3770
        %3906 = vmatpush.msra.mxu0 %v3769
        %3907 = vmatpush.msra.mxu0 %v3768
        %3908 = vmatpush.msra.mxu0 %v3767
        %3909 = vmatpush.msra.mxu0 %v3766
        %3910 = vmatpush.msra.mxu0 %v3765
        %3911 = vmatpush.msra.mxu0 %v3764
        %3912 = vmatpush.msra.mxu0 %v3763
        %3913 = vmatpush.msra.mxu0 %v3762
        %3914 = vmatpush.msra.mxu0 %v3761
        %3915 = vmatpush.msra.mxu0 %v3760
        %3916 = vmatpush.msra.mxu0 %v3759
        %3917 = vmatpush.msra.mxu0 %v3758
        %3918 = vmatpush.msra.mxu0 %v3757
        %3919 = vmatmul.f32.gmra.mxu0 %v3882
        %v3920 = vpop.f32.mrf.mxu0
        %v3921 = vadd.f32 %v3901, %v3920
        %3922 = vdwg.mxu0
        %v3923 = vmul.f32 %v3921, 0.015625
        %v3924 = vadd.f32 %v3923, 1e-05
        %v3925 = vrsqrt.pop %v3924
        %v3926 = vmul.f32 %v3925, %v3924
        %v3927 = vmul.f32 %v3926, %v3925
        %v3928 = vmul.f32 0.5, %v3927
        %v3929 = vsub.f32 1.5, %v3928
        %v3930 = vmul.f32 %v3925, %v3929
        %vm3931 = vweird.f32 %v3924
        %vm3932 = vweird.f32 %v3925
        %vm3933 = vmor %vm3931, %vm3932
        %v3934 = vsel %vm3933, %v3925, %v3930
        %v3936 = vsel %vm1842, %v3934, 0
        %3938 = vmatpush.msra.mxu0 0.0
        %3939 = vmatpush.msra.mxu0 0.0
        %3940 = vmatpush.msra.mxu0 0.0
        %3941 = vmatpush.msra.mxu0 0.0
        %3942 = vmatpush.msra.mxu0 0.0
        %3943 = vmatpush.msra.mxu0 0.0
        %3944 = vmatpush.msra.mxu0 0.0
        %3945 = vmatpush.msra.mxu0 0.0
        %3946 = vmatpush.msra.mxu0 0.0
        %3947 = vmatpush.msra.mxu0 0.0
        %3948 = vmatpush.msra.mxu0 0.0
        %3949 = vmatpush.msra.mxu0 0.0
        %3950 = vmatpush.msra.mxu0 %v3820
        %3951 = vmatpush.msra.mxu0 %v3818
        %3952 = vmatpush.msra.mxu0 %v3816
        %3953 = vmatpush.msra.mxu0 %v3814
        %3954 = vmatmul.f32.gmra.mxu0 %v3936
        %v3955 = vpop.f32.mrf.mxu0
        %v3956 = vadd.f32 0.0, %v3955
        %3957 = vdwg.mxu0
        %3958 = vmatpush.msra.mxu0 0.0
        %3959 = vmatpush.msra.mxu0 0.0
        %3960 = vmatpush.msra.mxu0 0.0
        %3961 = vmatpush.msra.mxu0 0.0
        %3962 = vmatpush.msra.mxu0 0.0
        %3963 = vmatpush.msra.mxu0 0.0
        %3964 = vmatpush.msra.mxu0 0.0
        %3965 = vmatpush.msra.mxu0 0.0
        %3966 = vmatpush.msra.mxu0 0.0
        %3967 = vmatpush.msra.mxu0 0.0
        %3968 = vmatpush.msra.mxu0 0.0
        %3969 = vmatpush.msra.mxu0 0.0
        %3970 = vmatpush.msra.mxu0 %v3821
        %3971 = vmatpush.msra.mxu0 %v3819
        %3972 = vmatpush.msra.mxu0 %v3817
        %3973 = vmatpush.msra.mxu0 %v3815
        %3974 = vmatmul.f32.gmra.mxu0 %v3936
        %v3975 = vpop.f32.mrf.mxu0
        %v3976 = vadd.f32 0.0, %v3975
        %3977 = vdwg.mxu0
        %v3978 = vperm.slane %v3956, 0
        %v3979 = vperm.slane %v3976, 0
        %v3980 = vmul.f32 %v3867, %v3978
        %v3981 = vmul.f32 %v3868, %v3979
        %vm3982 = vcmp.ge.f32.partialorder %v3980, 0.0
        %vm3983 = vcmp.ge.f32.partialorder %v3981, 0.0
        %v3984 = vmul.f32 %v3980, 0.2
        %v3985 = vmul.f32 %v3981, 0.2
        %v3986 = vsel %vm3982, %v3980, %v3984
        %v3987 = vsel %vm3983, %v3981, %v3985
        %v3988 = vld [vmem:[%s13] sm:$0xff]
        %v3989 = vld [vmem:[%s13 + $0x8] sm:$0xff]
        %v3990 = vld [vmem:[%s13 + $0x10] sm:$0xff]
        %v3991 = vld [vmem:[%s13 + $0x18] sm:$0xff]
        %v3992 = vld [vmem:[%s13 + $0x20] sm:$0xff]
        %v3993 = vld [vmem:[%s13 + $0x28] sm:$0xff]
        %v3994 = vld [vmem:[%s13 + $0x30] sm:$0xff]
        %v3995 = vld [vmem:[%s13 + $0x38] sm:$0xff]
        %v3996 = vld [vmem:[%s13 + $0x40] sm:$0xff]
        %v3997 = vld [vmem:[%s13 + $0x48] sm:$0xff]
        %v3998 = vld [vmem:[%s13 + $0x50] sm:$0xff]
        %v3999 = vld [vmem:[%s13 + $0x58] sm:$0xff]
        %v4000 = vld [vmem:[%s13 + $0x60] sm:$0xff]
        %v4001 = vld [vmem:[%s13 + $0x68] sm:$0xff]
        %v4002 = vld [vmem:[%s13 + $0x70] sm:$0xff]
        %v4003 = vld [vmem:[%s13 + $0x78] sm:$0xff]
        %v4004 = vld [vmem:[%s13 + $0x80] sm:$0xff]
        %v4005 = vld [vmem:[%s13 + $0x88] sm:$0xff]
        %v4006 = vld [vmem:[%s13 + $0x90] sm:$0xff]
        %v4007 = vld [vmem:[%s13 + $0x98] sm:$0xff]
        %v4008 = vld [vmem:[%s13 + $0xa0] sm:$0xff]
        %v4009 = vld [vmem:[%s13 + $0xa8] sm:$0xff]
        %v4010 = vld [vmem:[%s13 + $0xb0] sm:$0xff]
        %v4011 = vld [vmem:[%s13 + $0xb8] sm:$0xff]
        %v4012 = vld [vmem:[%s13 + $0xc0] sm:$0xff]
        %v4013 = vld [vmem:[%s13 + $0xc8] sm:$0xff]
        %v4014 = vld [vmem:[%s13 + $0xd0] sm:$0xff]
        %v4015 = vld [vmem:[%s13 + $0xd8] sm:$0xff]
        %v4016 = vld [vmem:[%s13 + $0xe0] sm:$0xff]
        %v4017 = vld [vmem:[%s13 + $0xe8] sm:$0xff]
        %v4018 = vld [vmem:[%s13 + $0xf0] sm:$0xff]
        %v4019 = vld [vmem:[%s13 + $0xf8] sm:$0xff]
        %s4020 = scalar_lea.vmem %s13, 256
        %v4021 = vld [vmem:[%s4020] sm:$0xff]
        %v4022 = vld [vmem:[%s4020 + $0x8] sm:$0xff]
        %v4023 = vld [vmem:[%s4020 + $0x10] sm:$0xff]
        %v4024 = vld [vmem:[%s4020 + $0x18] sm:$0xff]
        %v4025 = vld [vmem:[%s4020 + $0x20] sm:$0xff]
        %v4026 = vld [vmem:[%s4020 + $0x28] sm:$0xff]
        %v4027 = vld [vmem:[%s4020 + $0x30] sm:$0xff]
        %v4028 = vld [vmem:[%s4020 + $0x38] sm:$0xff]
        %v4029 = vld [vmem:[%s4020 + $0x40] sm:$0xff]
        %v4030 = vld [vmem:[%s4020 + $0x48] sm:$0xff]
        %v4031 = vld [vmem:[%s4020 + $0x50] sm:$0xff]
        %v4032 = vld [vmem:[%s4020 + $0x58] sm:$0xff]
        %v4033 = vld [vmem:[%s4020 + $0x60] sm:$0xff]
        %v4034 = vld [vmem:[%s4020 + $0x68] sm:$0xff]
        %v4035 = vld [vmem:[%s4020 + $0x70] sm:$0xff]
        %v4036 = vld [vmem:[%s4020 + $0x78] sm:$0xff]
        %v4037 = vld [vmem:[%s4020 + $0x80] sm:$0xff]
        %v4038 = vld [vmem:[%s4020 + $0x88] sm:$0xff]
        %v4039 = vld [vmem:[%s4020 + $0x90] sm:$0xff]
        %v4040 = vld [vmem:[%s4020 + $0x98] sm:$0xff]
        %v4041 = vld [vmem:[%s4020 + $0xa0] sm:$0xff]
        %v4042 = vld [vmem:[%s4020 + $0xa8] sm:$0xff]
        %v4043 = vld [vmem:[%s4020 + $0xb0] sm:$0xff]
        %v4044 = vld [vmem:[%s4020 + $0xb8] sm:$0xff]
        %v4045 = vld [vmem:[%s4020 + $0xc0] sm:$0xff]
        %v4046 = vld [vmem:[%s4020 + $0xc8] sm:$0xff]
        %v4047 = vld [vmem:[%s4020 + $0xd0] sm:$0xff]
        %v4048 = vld [vmem:[%s4020 + $0xd8] sm:$0xff]
        %v4049 = vld [vmem:[%s4020 + $0xe0] sm:$0xff]
        %v4050 = vld [vmem:[%s4020 + $0xe8] sm:$0xff]
        %v4051 = vld [vmem:[%s4020 + $0xf0] sm:$0xff]
        %v4052 = vld [vmem:[%s4020 + $0xf8] sm:$0xff]
        %v4055 = vrot.slane %v3986, 1
        %v4056 = vrot.slane %v3987, 1
        %4059 = vmatpush.msra.mxu0 %v4036
        %4060 = vmatpush.msra.mxu0 %v4035
        %4061 = vmatpush.msra.mxu0 %v4034
        %4062 = vmatpush.msra.mxu0 %v4033
        %4063 = vmatpush.msra.mxu0 %v4032
        %4064 = vmatpush.msra.mxu0 %v4031
        %4065 = vmatpush.msra.mxu0 %v4030
        %4066 = vmatpush.msra.mxu0 %v4029
        %4067 = vmatpush.msra.mxu0 %v4028
        %4068 = vmatpush.msra.mxu0 %v4027
        %4069 = vmatpush.msra.mxu0 %v4026
        %4070 = vmatpush.msra.mxu0 %v4025
        %4071 = vmatpush.msra.mxu0 %v4024
        %4072 = vmatpush.msra.mxu0 %v4023
        %4073 = vmatpush.msra.mxu0 %v4022
        %4074 = vmatpush.msra.mxu0 %v4021
        %4075 = vmatmul.f32.gmra.mxu0 %v4055
        %v4076 = vpop.f32.mrf.mxu0
        %v4077 = vadd.f32 0.0, %v4076
        %4078 = vdwg.mxu0
        %4079 = vmatpush.msra.mxu0 %v4052
        %4080 = vmatpush.msra.mxu0 %v4051
        %4081 = vmatpush.msra.mxu0 %v4050
        %4082 = vmatpush.msra.mxu0 %v4049
        %4083 = vmatpush.msra.mxu0 %v4048
        %4084 = vmatpush.msra.mxu0 %v4047
        %4085 = vmatpush.msra.mxu0 %v4046
        %4086 = vmatpush.msra.mxu0 %v4045
        %4087 = vmatpush.msra.mxu0 %v4044
        %4088 = vmatpush.msra.mxu0 %v4043
        %4089 = vmatpush.msra.mxu0 %v4042
        %4090 = vmatpush.msra.mxu0 %v4041
        %4091 = vmatpush.msra.mxu0 %v4040
        %4092 = vmatpush.msra.mxu0 %v4039
        %4093 = vmatpush.msra.mxu0 %v4038
        %4094 = vmatpush.msra.mxu0 %v4037
        %4095 = vmatmul.f32.gmra.mxu0 %v4056
        %v4096 = vpop.f32.mrf.mxu0
        %v4097 = vadd.f32 %v4077, %v4096
        %4098 = vdwg.mxu0
        %4099 = vmatpush.msra.mxu0 %v4003
        %4100 = vmatpush.msra.mxu0 %v4002
        %4101 = vmatpush.msra.mxu0 %v4001
        %4102 = vmatpush.msra.mxu0 %v4000
        %4103 = vmatpush.msra.mxu0 %v3999
        %4104 = vmatpush.msra.mxu0 %v3998
        %4105 = vmatpush.msra.mxu0 %v3997
        %4106 = vmatpush.msra.mxu0 %v3996
        %4107 = vmatpush.msra.mxu0 %v3995
        %4108 = vmatpush.msra.mxu0 %v3994
        %4109 = vmatpush.msra.mxu0 %v3993
        %4110 = vmatpush.msra.mxu0 %v3992
        %4111 = vmatpush.msra.mxu0 %v3991
        %4112 = vmatpush.msra.mxu0 %v3990
        %4113 = vmatpush.msra.mxu0 %v3989
        %4114 = vmatpush.msra.mxu0 %v3988
        %4115 = vmatmul.f32.gmra.mxu0 %v3986
        %v4116 = vpop.f32.mrf.mxu0
        %v4117 = vadd.f32 %v4097, %v4116
        %4118 = vdwg.mxu0
        %4119 = vmatpush.msra.mxu0 %v4019
        %4120 = vmatpush.msra.mxu0 %v4018
        %4121 = vmatpush.msra.mxu0 %v4017
        %4122 = vmatpush.msra.mxu0 %v4016
        %4123 = vmatpush.msra.mxu0 %v4015
        %4124 = vmatpush.msra.mxu0 %v4014
        %4125 = vmatpush.msra.mxu0 %v4013
        %4126 = vmatpush.msra.mxu0 %v4012
        %4127 = vmatpush.msra.mxu0 %v4011
        %4128 = vmatpush.msra.mxu0 %v4010
        %4129 = vmatpush.msra.mxu0 %v4009
        %4130 = vmatpush.msra.mxu0 %v4008
        %4131 = vmatpush.msra.mxu0 %v4007
        %4132 = vmatpush.msra.mxu0 %v4006
        %4133 = vmatpush.msra.mxu0 %v4005
        %4134 = vmatpush.msra.mxu0 %v4004
        %4135 = vmatmul.f32.gmra.mxu0 %v3987
        %v4136 = vpop.f32.mrf.mxu0
        %v4137 = vadd.f32 %v4117, %v4136
        %4138 = vdwg.mxu0
        %s4139 = scalar_lea.vmem %s13, 512
        %v4140 = vld [vmem:[%s4139] sm:$0xff]
        %v4141 = vld [vmem:[%s4139 + $0x8] sm:$0xff]
        %v4142 = vld [vmem:[%s4139 + $0x10] sm:$0xff]
        %v4143 = vld [vmem:[%s4139 + $0x18] sm:$0xff]
        %v4144 = vld [vmem:[%s4139 + $0x20] sm:$0xff]
        %v4145 = vld [vmem:[%s4139 + $0x28] sm:$0xff]
        %v4146 = vld [vmem:[%s4139 + $0x30] sm:$0xff]
        %v4147 = vld [vmem:[%s4139 + $0x38] sm:$0xff]
        %v4148 = vld [vmem:[%s4139 + $0x40] sm:$0xff]
        %v4149 = vld [vmem:[%s4139 + $0x48] sm:$0xff]
        %v4150 = vld [vmem:[%s4139 + $0x50] sm:$0xff]
        %v4151 = vld [vmem:[%s4139 + $0x58] sm:$0xff]
        %v4152 = vld [vmem:[%s4139 + $0x60] sm:$0xff]
        %v4153 = vld [vmem:[%s4139 + $0x68] sm:$0xff]
        %v4154 = vld [vmem:[%s4139 + $0x70] sm:$0xff]
        %v4155 = vld [vmem:[%s4139 + $0x78] sm:$0xff]
        %v4156 = vld [vmem:[%s4139 + $0x80] sm:$0xff]
        %v4157 = vld [vmem:[%s4139 + $0x88] sm:$0xff]
        %v4158 = vld [vmem:[%s4139 + $0x90] sm:$0xff]
        %v4159 = vld [vmem:[%s4139 + $0x98] sm:$0xff]
        %v4160 = vld [vmem:[%s4139 + $0xa0] sm:$0xff]
        %v4161 = vld [vmem:[%s4139 + $0xa8] sm:$0xff]
        %v4162 = vld [vmem:[%s4139 + $0xb0] sm:$0xff]
        %v4163 = vld [vmem:[%s4139 + $0xb8] sm:$0xff]
        %v4164 = vld [vmem:[%s4139 + $0xc0] sm:$0xff]
        %v4165 = vld [vmem:[%s4139 + $0xc8] sm:$0xff]
        %v4166 = vld [vmem:[%s4139 + $0xd0] sm:$0xff]
        %v4167 = vld [vmem:[%s4139 + $0xd8] sm:$0xff]
        %v4168 = vld [vmem:[%s4139 + $0xe0] sm:$0xff]
        %v4169 = vld [vmem:[%s4139 + $0xe8] sm:$0xff]
        %v4170 = vld [vmem:[%s4139 + $0xf0] sm:$0xff]
        %v4171 = vld [vmem:[%s4139 + $0xf8] sm:$0xff]
        %v4172 = vrot.slane %v3986, 2
        %v4173 = vrot.slane %v3987, 2
        %4176 = vmatpush.msra.mxu0 %v4155
        %4177 = vmatpush.msra.mxu0 %v4154
        %4178 = vmatpush.msra.mxu0 %v4153
        %4179 = vmatpush.msra.mxu0 %v4152
        %4180 = vmatpush.msra.mxu0 %v4151
        %4181 = vmatpush.msra.mxu0 %v4150
        %4182 = vmatpush.msra.mxu0 %v4149
        %4183 = vmatpush.msra.mxu0 %v4148
        %4184 = vmatpush.msra.mxu0 %v4147
        %4185 = vmatpush.msra.mxu0 %v4146
        %4186 = vmatpush.msra.mxu0 %v4145
        %4187 = vmatpush.msra.mxu0 %v4144
        %4188 = vmatpush.msra.mxu0 %v4143
        %4189 = vmatpush.msra.mxu0 %v4142
        %4190 = vmatpush.msra.mxu0 %v4141
        %4191 = vmatpush.msra.mxu0 %v4140
        %4192 = vmatmul.f32.gmra.mxu0 %v4172
        %v4193 = vpop.f32.mrf.mxu0
        %v4194 = vadd.f32 0.0, %v4193
        %4195 = vdwg.mxu0
        %4196 = vmatpush.msra.mxu0 %v4171
        %4197 = vmatpush.msra.mxu0 %v4170
        %4198 = vmatpush.msra.mxu0 %v4169
        %4199 = vmatpush.msra.mxu0 %v4168
        %4200 = vmatpush.msra.mxu0 %v4167
        %4201 = vmatpush.msra.mxu0 %v4166
        %4202 = vmatpush.msra.mxu0 %v4165
        %4203 = vmatpush.msra.mxu0 %v4164
        %4204 = vmatpush.msra.mxu0 %v4163
        %4205 = vmatpush.msra.mxu0 %v4162
        %4206 = vmatpush.msra.mxu0 %v4161
        %4207 = vmatpush.msra.mxu0 %v4160
        %4208 = vmatpush.msra.mxu0 %v4159
        %4209 = vmatpush.msra.mxu0 %v4158
        %4210 = vmatpush.msra.mxu0 %v4157
        %4211 = vmatpush.msra.mxu0 %v4156
        %4212 = vmatmul.f32.gmra.mxu0 %v4173
        %v4213 = vpop.f32.mrf.mxu0
        %v4214 = vadd.f32 %v4194, %v4213
        %4215 = vdwg.mxu0
        %v4216 = vadd.f32 %v4137, %v4214
        %s4217 = scalar_lea.vmem %s13, 768
        %v4218 = vld [vmem:[%s4217] sm:$0xff]
        %v4219 = vld [vmem:[%s4217 + $0x8] sm:$0xff]
        %v4220 = vld [vmem:[%s4217 + $0x10] sm:$0xff]
        %v4221 = vld [vmem:[%s4217 + $0x18] sm:$0xff]
        %v4222 = vld [vmem:[%s4217 + $0x20] sm:$0xff]
        %v4223 = vld [vmem:[%s4217 + $0x28] sm:$0xff]
        %v4224 = vld [vmem:[%s4217 + $0x30] sm:$0xff]
        %v4225 = vld [vmem:[%s4217 + $0x38] sm:$0xff]
        %v4226 = vld [vmem:[%s4217 + $0x40] sm:$0xff]
        %v4227 = vld [vmem:[%s4217 + $0x48] sm:$0xff]
        %v4228 = vld [vmem:[%s4217 + $0x50] sm:$0xff]
        %v4229 = vld [vmem:[%s4217 + $0x58] sm:$0xff]
        %v4230 = vld [vmem:[%s4217 + $0x60] sm:$0xff]
        %v4231 = vld [vmem:[%s4217 + $0x68] sm:$0xff]
        %v4232 = vld [vmem:[%s4217 + $0x70] sm:$0xff]
        %v4233 = vld [vmem:[%s4217 + $0x78] sm:$0xff]
        %v4234 = vld [vmem:[%s4217 + $0x80] sm:$0xff]
        %v4235 = vld [vmem:[%s4217 + $0x88] sm:$0xff]
        %v4236 = vld [vmem:[%s4217 + $0x90] sm:$0xff]
        %v4237 = vld [vmem:[%s4217 + $0x98] sm:$0xff]
        %v4238 = vld [vmem:[%s4217 + $0xa0] sm:$0xff]
        %v4239 = vld [vmem:[%s4217 + $0xa8] sm:$0xff]
        %v4240 = vld [vmem:[%s4217 + $0xb0] sm:$0xff]
        %v4241 = vld [vmem:[%s4217 + $0xb8] sm:$0xff]
        %v4242 = vld [vmem:[%s4217 + $0xc0] sm:$0xff]
        %v4243 = vld [vmem:[%s4217 + $0xc8] sm:$0xff]
        %v4244 = vld [vmem:[%s4217 + $0xd0] sm:$0xff]
        %v4245 = vld [vmem:[%s4217 + $0xd8] sm:$0xff]
        %v4246 = vld [vmem:[%s4217 + $0xe0] sm:$0xff]
        %v4247 = vld [vmem:[%s4217 + $0xe8] sm:$0xff]
        %v4248 = vld [vmem:[%s4217 + $0xf0] sm:$0xff]
        %v4249 = vld [vmem:[%s4217 + $0xf8] sm:$0xff]
        %v4250 = vrot.slane %v3986, 3
        %v4251 = vrot.slane %v3987, 3
        %4254 = vmatpush.msra.mxu0 %v4233
        %4255 = vmatpush.msra.mxu0 %v4232
        %4256 = vmatpush.msra.mxu0 %v4231
        %4257 = vmatpush.msra.mxu0 %v4230
        %4258 = vmatpush.msra.mxu0 %v4229
        %4259 = vmatpush.msra.mxu0 %v4228
        %4260 = vmatpush.msra.mxu0 %v4227
        %4261 = vmatpush.msra.mxu0 %v4226
        %4262 = vmatpush.msra.mxu0 %v4225
        %4263 = vmatpush.msra.mxu0 %v4224
        %4264 = vmatpush.msra.mxu0 %v4223
        %4265 = vmatpush.msra.mxu0 %v4222
        %4266 = vmatpush.msra.mxu0 %v4221
        %4267 = vmatpush.msra.mxu0 %v4220
        %4268 = vmatpush.msra.mxu0 %v4219
        %4269 = vmatpush.msra.mxu0 %v4218
        %4270 = vmatmul.f32.gmra.mxu0 %v4250
        %v4271 = vpop.f32.mrf.mxu0
        %v4272 = vadd.f32 0.0, %v4271
        %4273 = vdwg.mxu0
        %4274 = vmatpush.msra.mxu0 %v4249
        %4275 = vmatpush.msra.mxu0 %v4248
        %4276 = vmatpush.msra.mxu0 %v4247
        %4277 = vmatpush.msra.mxu0 %v4246
        %4278 = vmatpush.msra.mxu0 %v4245
        %4279 = vmatpush.msra.mxu0 %v4244
        %4280 = vmatpush.msra.mxu0 %v4243
        %4281 = vmatpush.msra.mxu0 %v4242
        %4282 = vmatpush.msra.mxu0 %v4241
        %4283 = vmatpush.msra.mxu0 %v4240
        %4284 = vmatpush.msra.mxu0 %v4239
        %4285 = vmatpush.msra.mxu0 %v4238
        %4286 = vmatpush.msra.mxu0 %v4237
        %4287 = vmatpush.msra.mxu0 %v4236
        %4288 = vmatpush.msra.mxu0 %v4235
        %4289 = vmatpush.msra.mxu0 %v4234
        %4290 = vmatmul.f32.gmra.mxu0 %v4251
        %v4291 = vpop.f32.mrf.mxu0
        %v4292 = vadd.f32 %v4272, %v4291
        %4293 = vdwg.mxu0
        %v4294 = vadd.f32 %v4216, %v4292
        %s4295 = scalar_lea.vmem %s13, 1024
        %v4296 = vld [vmem:[%s4295] sm:$0xff]
        %v4297 = vld [vmem:[%s4295 + $0x8] sm:$0xff]
        %v4298 = vld [vmem:[%s4295 + $0x10] sm:$0xff]
        %v4299 = vld [vmem:[%s4295 + $0x18] sm:$0xff]
        %v4300 = vld [vmem:[%s4295 + $0x20] sm:$0xff]
        %v4301 = vld [vmem:[%s4295 + $0x28] sm:$0xff]
        %v4302 = vld [vmem:[%s4295 + $0x30] sm:$0xff]
        %v4303 = vld [vmem:[%s4295 + $0x38] sm:$0xff]
        %v4304 = vld [vmem:[%s4295 + $0x40] sm:$0xff]
        %v4305 = vld [vmem:[%s4295 + $0x48] sm:$0xff]
        %v4306 = vld [vmem:[%s4295 + $0x50] sm:$0xff]
        %v4307 = vld [vmem:[%s4295 + $0x58] sm:$0xff]
        %v4308 = vld [vmem:[%s4295 + $0x60] sm:$0xff]
        %v4309 = vld [vmem:[%s4295 + $0x68] sm:$0xff]
        %v4310 = vld [vmem:[%s4295 + $0x70] sm:$0xff]
        %v4311 = vld [vmem:[%s4295 + $0x78] sm:$0xff]
        %v4312 = vld [vmem:[%s4295 + $0x80] sm:$0xff]
        %v4313 = vld [vmem:[%s4295 + $0x88] sm:$0xff]
        %v4314 = vld [vmem:[%s4295 + $0x90] sm:$0xff]
        %v4315 = vld [vmem:[%s4295 + $0x98] sm:$0xff]
        %v4316 = vld [vmem:[%s4295 + $0xa0] sm:$0xff]
        %v4317 = vld [vmem:[%s4295 + $0xa8] sm:$0xff]
        %v4318 = vld [vmem:[%s4295 + $0xb0] sm:$0xff]
        %v4319 = vld [vmem:[%s4295 + $0xb8] sm:$0xff]
        %v4320 = vld [vmem:[%s4295 + $0xc0] sm:$0xff]
        %v4321 = vld [vmem:[%s4295 + $0xc8] sm:$0xff]
        %v4322 = vld [vmem:[%s4295 + $0xd0] sm:$0xff]
        %v4323 = vld [vmem:[%s4295 + $0xd8] sm:$0xff]
        %v4324 = vld [vmem:[%s4295 + $0xe0] sm:$0xff]
        %v4325 = vld [vmem:[%s4295 + $0xe8] sm:$0xff]
        %v4326 = vld [vmem:[%s4295 + $0xf0] sm:$0xff]
        %v4327 = vld [vmem:[%s4295 + $0xf8] sm:$0xff]
        %v4328 = vrot.slane %v3986, 4
        %v4329 = vrot.slane %v3987, 4
        %4332 = vmatpush.msra.mxu0 %v4311
        %4333 = vmatpush.msra.mxu0 %v4310
        %4334 = vmatpush.msra.mxu0 %v4309
        %4335 = vmatpush.msra.mxu0 %v4308
        %4336 = vmatpush.msra.mxu0 %v4307
        %4337 = vmatpush.msra.mxu0 %v4306
        %4338 = vmatpush.msra.mxu0 %v4305
        %4339 = vmatpush.msra.mxu0 %v4304
        %4340 = vmatpush.msra.mxu0 %v4303
        %4341 = vmatpush.msra.mxu0 %v4302
        %4342 = vmatpush.msra.mxu0 %v4301
        %4343 = vmatpush.msra.mxu0 %v4300
        %4344 = vmatpush.msra.mxu0 %v4299
        %4345 = vmatpush.msra.mxu0 %v4298
        %4346 = vmatpush.msra.mxu0 %v4297
        %4347 = vmatpush.msra.mxu0 %v4296
        %4348 = vmatmul.f32.gmra.mxu0 %v4328
        %v4349 = vpop.f32.mrf.mxu0
        %v4350 = vadd.f32 0.0, %v4349
        %4351 = vdwg.mxu0
        %4352 = vmatpush.msra.mxu0 %v4327
        %4353 = vmatpush.msra.mxu0 %v4326
        %4354 = vmatpush.msra.mxu0 %v4325
        %4355 = vmatpush.msra.mxu0 %v4324
        %4356 = vmatpush.msra.mxu0 %v4323
        %4357 = vmatpush.msra.mxu0 %v4322
        %4358 = vmatpush.msra.mxu0 %v4321
        %4359 = vmatpush.msra.mxu0 %v4320
        %4360 = vmatpush.msra.mxu0 %v4319
        %4361 = vmatpush.msra.mxu0 %v4318
        %4362 = vmatpush.msra.mxu0 %v4317
        %4363 = vmatpush.msra.mxu0 %v4316
        %4364 = vmatpush.msra.mxu0 %v4315
        %4365 = vmatpush.msra.mxu0 %v4314
        %4366 = vmatpush.msra.mxu0 %v4313
        %4367 = vmatpush.msra.mxu0 %v4312
        %4368 = vmatmul.f32.gmra.mxu0 %v4329
        %v4369 = vpop.f32.mrf.mxu0
        %v4370 = vadd.f32 %v4350, %v4369
        %4371 = vdwg.mxu0
        %v4372 = vadd.f32 %v4294, %v4370
        %s4373 = scalar_lea.vmem %s13, 1280
        %v4374 = vld [vmem:[%s4373] sm:$0xff]
        %v4375 = vld [vmem:[%s4373 + $0x8] sm:$0xff]
        %v4376 = vld [vmem:[%s4373 + $0x10] sm:$0xff]
        %v4377 = vld [vmem:[%s4373 + $0x18] sm:$0xff]
        %v4378 = vld [vmem:[%s4373 + $0x20] sm:$0xff]
        %v4379 = vld [vmem:[%s4373 + $0x28] sm:$0xff]
        %v4380 = vld [vmem:[%s4373 + $0x30] sm:$0xff]
        %v4381 = vld [vmem:[%s4373 + $0x38] sm:$0xff]
        %v4382 = vld [vmem:[%s4373 + $0x40] sm:$0xff]
        %v4383 = vld [vmem:[%s4373 + $0x48] sm:$0xff]
        %v4384 = vld [vmem:[%s4373 + $0x50] sm:$0xff]
        %v4385 = vld [vmem:[%s4373 + $0x58] sm:$0xff]
        %v4386 = vld [vmem:[%s4373 + $0x60] sm:$0xff]
        %v4387 = vld [vmem:[%s4373 + $0x68] sm:$0xff]
        %v4388 = vld [vmem:[%s4373 + $0x70] sm:$0xff]
        %v4389 = vld [vmem:[%s4373 + $0x78] sm:$0xff]
        %v4390 = vld [vmem:[%s4373 + $0x80] sm:$0xff]
        %v4391 = vld [vmem:[%s4373 + $0x88] sm:$0xff]
        %v4392 = vld [vmem:[%s4373 + $0x90] sm:$0xff]
        %v4393 = vld [vmem:[%s4373 + $0x98] sm:$0xff]
        %v4394 = vld [vmem:[%s4373 + $0xa0] sm:$0xff]
        %v4395 = vld [vmem:[%s4373 + $0xa8] sm:$0xff]
        %v4396 = vld [vmem:[%s4373 + $0xb0] sm:$0xff]
        %v4397 = vld [vmem:[%s4373 + $0xb8] sm:$0xff]
        %v4398 = vld [vmem:[%s4373 + $0xc0] sm:$0xff]
        %v4399 = vld [vmem:[%s4373 + $0xc8] sm:$0xff]
        %v4400 = vld [vmem:[%s4373 + $0xd0] sm:$0xff]
        %v4401 = vld [vmem:[%s4373 + $0xd8] sm:$0xff]
        %v4402 = vld [vmem:[%s4373 + $0xe0] sm:$0xff]
        %v4403 = vld [vmem:[%s4373 + $0xe8] sm:$0xff]
        %v4404 = vld [vmem:[%s4373 + $0xf0] sm:$0xff]
        %v4405 = vld [vmem:[%s4373 + $0xf8] sm:$0xff]
        %v4406 = vrot.slane %v3986, 5
        %v4407 = vrot.slane %v3987, 5
        %4410 = vmatpush.msra.mxu0 %v4389
        %4411 = vmatpush.msra.mxu0 %v4388
        %4412 = vmatpush.msra.mxu0 %v4387
        %4413 = vmatpush.msra.mxu0 %v4386
        %4414 = vmatpush.msra.mxu0 %v4385
        %4415 = vmatpush.msra.mxu0 %v4384
        %4416 = vmatpush.msra.mxu0 %v4383
        %4417 = vmatpush.msra.mxu0 %v4382
        %4418 = vmatpush.msra.mxu0 %v4381
        %4419 = vmatpush.msra.mxu0 %v4380
        %4420 = vmatpush.msra.mxu0 %v4379
        %4421 = vmatpush.msra.mxu0 %v4378
        %4422 = vmatpush.msra.mxu0 %v4377
        %4423 = vmatpush.msra.mxu0 %v4376
        %4424 = vmatpush.msra.mxu0 %v4375
        %4425 = vmatpush.msra.mxu0 %v4374
        %4426 = vmatmul.f32.gmra.mxu0 %v4406
        %v4427 = vpop.f32.mrf.mxu0
        %v4428 = vadd.f32 0.0, %v4427
        %4429 = vdwg.mxu0
        %4430 = vmatpush.msra.mxu0 %v4405
        %4431 = vmatpush.msra.mxu0 %v4404
        %4432 = vmatpush.msra.mxu0 %v4403
        %4433 = vmatpush.msra.mxu0 %v4402
        %4434 = vmatpush.msra.mxu0 %v4401
        %4435 = vmatpush.msra.mxu0 %v4400
        %4436 = vmatpush.msra.mxu0 %v4399
        %4437 = vmatpush.msra.mxu0 %v4398
        %4438 = vmatpush.msra.mxu0 %v4397
        %4439 = vmatpush.msra.mxu0 %v4396
        %4440 = vmatpush.msra.mxu0 %v4395
        %4441 = vmatpush.msra.mxu0 %v4394
        %4442 = vmatpush.msra.mxu0 %v4393
        %4443 = vmatpush.msra.mxu0 %v4392
        %4444 = vmatpush.msra.mxu0 %v4391
        %4445 = vmatpush.msra.mxu0 %v4390
        %4446 = vmatmul.f32.gmra.mxu0 %v4407
        %v4447 = vpop.f32.mrf.mxu0
        %v4448 = vadd.f32 %v4428, %v4447
        %4449 = vdwg.mxu0
        %v4450 = vadd.f32 %v4372, %v4448
        %s4451 = scalar_lea.vmem %s13, 1536
        %v4452 = vld [vmem:[%s4451] sm:$0xff]
        %v4453 = vld [vmem:[%s4451 + $0x8] sm:$0xff]
        %v4454 = vld [vmem:[%s4451 + $0x10] sm:$0xff]
        %v4455 = vld [vmem:[%s4451 + $0x18] sm:$0xff]
        %v4456 = vld [vmem:[%s4451 + $0x20] sm:$0xff]
        %v4457 = vld [vmem:[%s4451 + $0x28] sm:$0xff]
        %v4458 = vld [vmem:[%s4451 + $0x30] sm:$0xff]
        %v4459 = vld [vmem:[%s4451 + $0x38] sm:$0xff]
        %v4460 = vld [vmem:[%s4451 + $0x40] sm:$0xff]
        %v4461 = vld [vmem:[%s4451 + $0x48] sm:$0xff]
        %v4462 = vld [vmem:[%s4451 + $0x50] sm:$0xff]
        %v4463 = vld [vmem:[%s4451 + $0x58] sm:$0xff]
        %v4464 = vld [vmem:[%s4451 + $0x60] sm:$0xff]
        %v4465 = vld [vmem:[%s4451 + $0x68] sm:$0xff]
        %v4466 = vld [vmem:[%s4451 + $0x70] sm:$0xff]
        %v4467 = vld [vmem:[%s4451 + $0x78] sm:$0xff]
        %v4468 = vld [vmem:[%s4451 + $0x80] sm:$0xff]
        %v4469 = vld [vmem:[%s4451 + $0x88] sm:$0xff]
        %v4470 = vld [vmem:[%s4451 + $0x90] sm:$0xff]
        %v4471 = vld [vmem:[%s4451 + $0x98] sm:$0xff]
        %v4472 = vld [vmem:[%s4451 + $0xa0] sm:$0xff]
        %v4473 = vld [vmem:[%s4451 + $0xa8] sm:$0xff]
        %v4474 = vld [vmem:[%s4451 + $0xb0] sm:$0xff]
        %v4475 = vld [vmem:[%s4451 + $0xb8] sm:$0xff]
        %v4476 = vld [vmem:[%s4451 + $0xc0] sm:$0xff]
        %v4477 = vld [vmem:[%s4451 + $0xc8] sm:$0xff]
        %v4478 = vld [vmem:[%s4451 + $0xd0] sm:$0xff]
        %v4479 = vld [vmem:[%s4451 + $0xd8] sm:$0xff]
        %v4480 = vld [vmem:[%s4451 + $0xe0] sm:$0xff]
        %v4481 = vld [vmem:[%s4451 + $0xe8] sm:$0xff]
        %v4482 = vld [vmem:[%s4451 + $0xf0] sm:$0xff]
        %v4483 = vld [vmem:[%s4451 + $0xf8] sm:$0xff]
        %v4484 = vrot.slane %v3986, 6
        %v4485 = vrot.slane %v3987, 6
        %4488 = vmatpush.msra.mxu0 %v4467
        %4489 = vmatpush.msra.mxu0 %v4466
        %4490 = vmatpush.msra.mxu0 %v4465
        %4491 = vmatpush.msra.mxu0 %v4464
        %4492 = vmatpush.msra.mxu0 %v4463
        %4493 = vmatpush.msra.mxu0 %v4462
        %4494 = vmatpush.msra.mxu0 %v4461
        %4495 = vmatpush.msra.mxu0 %v4460
        %4496 = vmatpush.msra.mxu0 %v4459
        %4497 = vmatpush.msra.mxu0 %v4458
        %4498 = vmatpush.msra.mxu0 %v4457
        %4499 = vmatpush.msra.mxu0 %v4456
        %4500 = vmatpush.msra.mxu0 %v4455
        %4501 = vmatpush.msra.mxu0 %v4454
        %4502 = vmatpush.msra.mxu0 %v4453
        %4503 = vmatpush.msra.mxu0 %v4452
        %4504 = vmatmul.f32.gmra.mxu0 %v4484
        %v4505 = vpop.f32.mrf.mxu0
        %v4506 = vadd.f32 0.0, %v4505
        %4507 = vdwg.mxu0
        %4508 = vmatpush.msra.mxu0 %v4483
        %4509 = vmatpush.msra.mxu0 %v4482
        %4510 = vmatpush.msra.mxu0 %v4481
        %4511 = vmatpush.msra.mxu0 %v4480
        %4512 = vmatpush.msra.mxu0 %v4479
        %4513 = vmatpush.msra.mxu0 %v4478
        %4514 = vmatpush.msra.mxu0 %v4477
        %4515 = vmatpush.msra.mxu0 %v4476
        %4516 = vmatpush.msra.mxu0 %v4475
        %4517 = vmatpush.msra.mxu0 %v4474
        %4518 = vmatpush.msra.mxu0 %v4473
        %4519 = vmatpush.msra.mxu0 %v4472
        %4520 = vmatpush.msra.mxu0 %v4471
        %4521 = vmatpush.msra.mxu0 %v4470
        %4522 = vmatpush.msra.mxu0 %v4469
        %4523 = vmatpush.msra.mxu0 %v4468
        %4524 = vmatmul.f32.gmra.mxu0 %v4485
        %v4525 = vpop.f32.mrf.mxu0
        %v4526 = vadd.f32 %v4506, %v4525
        %4527 = vdwg.mxu0
        %v4528 = vadd.f32 %v4450, %v4526
        %s4529 = scalar_lea.vmem %s13, 1792
        %v4530 = vld [vmem:[%s4529] sm:$0xff]
        %v4531 = vld [vmem:[%s4529 + $0x8] sm:$0xff]
        %v4532 = vld [vmem:[%s4529 + $0x10] sm:$0xff]
        %v4533 = vld [vmem:[%s4529 + $0x18] sm:$0xff]
        %v4534 = vld [vmem:[%s4529 + $0x20] sm:$0xff]
        %v4535 = vld [vmem:[%s4529 + $0x28] sm:$0xff]
        %v4536 = vld [vmem:[%s4529 + $0x30] sm:$0xff]
        %v4537 = vld [vmem:[%s4529 + $0x38] sm:$0xff]
        %v4538 = vld [vmem:[%s4529 + $0x40] sm:$0xff]
        %v4539 = vld [vmem:[%s4529 + $0x48] sm:$0xff]
        %v4540 = vld [vmem:[%s4529 + $0x50] sm:$0xff]
        %v4541 = vld [vmem:[%s4529 + $0x58] sm:$0xff]
        %v4542 = vld [vmem:[%s4529 + $0x60] sm:$0xff]
        %v4543 = vld [vmem:[%s4529 + $0x68] sm:$0xff]
        %v4544 = vld [vmem:[%s4529 + $0x70] sm:$0xff]
        %v4545 = vld [vmem:[%s4529 + $0x78] sm:$0xff]
        %v4546 = vld [vmem:[%s4529 + $0x80] sm:$0xff]
        %v4547 = vld [vmem:[%s4529 + $0x88] sm:$0xff]
        %v4548 = vld [vmem:[%s4529 + $0x90] sm:$0xff]
        %v4549 = vld [vmem:[%s4529 + $0x98] sm:$0xff]
        %v4550 = vld [vmem:[%s4529 + $0xa0] sm:$0xff]
        %v4551 = vld [vmem:[%s4529 + $0xa8] sm:$0xff]
        %v4552 = vld [vmem:[%s4529 + $0xb0] sm:$0xff]
        %v4553 = vld [vmem:[%s4529 + $0xb8] sm:$0xff]
        %v4554 = vld [vmem:[%s4529 + $0xc0] sm:$0xff]
        %v4555 = vld [vmem:[%s4529 + $0xc8] sm:$0xff]
        %v4556 = vld [vmem:[%s4529 + $0xd0] sm:$0xff]
        %v4557 = vld [vmem:[%s4529 + $0xd8] sm:$0xff]
        %v4558 = vld [vmem:[%s4529 + $0xe0] sm:$0xff]
        %v4559 = vld [vmem:[%s4529 + $0xe8] sm:$0xff]
        %v4560 = vld [vmem:[%s4529 + $0xf0] sm:$0xff]
        %v4561 = vld [vmem:[%s4529 + $0xf8] sm:$0xff]
        %v4562 = vrot.slane %v3986, 7
        %v4563 = vrot.slane %v3987, 7
        %4566 = vmatpush.msra.mxu0 %v4545
        %4567 = vmatpush.msra.mxu0 %v4544
        %4568 = vmatpush.msra.mxu0 %v4543
        %4569 = vmatpush.msra.mxu0 %v4542
        %4570 = vmatpush.msra.mxu0 %v4541
        %4571 = vmatpush.msra.mxu0 %v4540
        %4572 = vmatpush.msra.mxu0 %v4539
        %4573 = vmatpush.msra.mxu0 %v4538
        %4574 = vmatpush.msra.mxu0 %v4537
        %4575 = vmatpush.msra.mxu0 %v4536
        %4576 = vmatpush.msra.mxu0 %v4535
        %4577 = vmatpush.msra.mxu0 %v4534
        %4578 = vmatpush.msra.mxu0 %v4533
        %4579 = vmatpush.msra.mxu0 %v4532
        %4580 = vmatpush.msra.mxu0 %v4531
        %4581 = vmatpush.msra.mxu0 %v4530
        %4582 = vmatmul.f32.gmra.mxu0 %v4562
        %v4583 = vpop.f32.mrf.mxu0
        %v4584 = vadd.f32 0.0, %v4583
        %4585 = vdwg.mxu0
        %4586 = vmatpush.msra.mxu0 %v4561
        %4587 = vmatpush.msra.mxu0 %v4560
        %4588 = vmatpush.msra.mxu0 %v4559
        %4589 = vmatpush.msra.mxu0 %v4558
        %4590 = vmatpush.msra.mxu0 %v4557
        %4591 = vmatpush.msra.mxu0 %v4556
        %4592 = vmatpush.msra.mxu0 %v4555
        %4593 = vmatpush.msra.mxu0 %v4554
        %4594 = vmatpush.msra.mxu0 %v4553
        %4595 = vmatpush.msra.mxu0 %v4552
        %4596 = vmatpush.msra.mxu0 %v4551
        %4597 = vmatpush.msra.mxu0 %v4550
        %4598 = vmatpush.msra.mxu0 %v4549
        %4599 = vmatpush.msra.mxu0 %v4548
        %4600 = vmatpush.msra.mxu0 %v4547
        %4601 = vmatpush.msra.mxu0 %v4546
        %4602 = vmatmul.f32.gmra.mxu0 %v4563
        %v4603 = vpop.f32.mrf.mxu0
        %v4604 = vadd.f32 %v4584, %v4603
        %4605 = vdwg.mxu0
        %v4606 = vadd.f32 %v4528, %v4604
        %vm4607 = vcmask 57344
        %4608 = vst.msk [vmem:[%s493] sm:$0x1] %vm4607, %v4606
        %s4609 = sand.u32 %s337, 1
        %s4610 = scalar_lea.sflag [#allocation4], %s4609
        %s4611 = sand.u32 %s337, 1
        %s4612 = scalar_lea.vmem [#allocation7], %s4611
        // Predicated region
        $region85: #{tpu_custom_call.1} parent=75 // pred_check
          %p4613 = pneg %p347
        $region86: #{tpu_custom_call.1} parent=75 // pred_check_branch
          %4615 = sbr.rel (%p4613) target = $region88
        $region87: #{tpu_custom_call.1} parent=75 // pred_region
          %4617 = vsyncadd %s4610, 0
          %s4618 = scalar_lea.hbm %s14, %s30
          %s4620 = sshll.u32 %s4612, 4
          %s4621 = int_to_ptr.vmem [resolvable:$true] %s4620
          %s4622 = sshll.u32 %s4618, 4
          %s4623 = int_to_ptr.hbm [resolvable:$true] %s4622
          %4625 = dma.vmem_to_hbm [thread:$0]  %s4621, 16, %s4623, %s4610
        $region88: #{tpu_custom_call.1} parent=75 // pred_fallthru
          _
      $region76: #{tpu_custom_call.1} parent=5 // pred_fallthru
        _
      %p4626 = scmp.le.s32.totalorder 2, %s25
      // Predicated region
      $region89: #{tpu_custom_call.1} parent=5 // pred_check
        %p4627 = pneg %p4626
      $region90: #{tpu_custom_call.1} parent=5 // pred_check_branch
        %4629 = sbr.rel (%p4627) target = $region92
      $region91: #{tpu_custom_call.1} parent=5 // pred_region
        %s4630 = ssub.s32 %s25, 2
        // Predicated region
        $region93: #{tpu_custom_call.1} parent=91 // pred_check
          %p4631 = pneg %p353
        $region94: #{tpu_custom_call.1} parent=91 // pred_check_branch
          %4633 = sbr.rel (%p4631) target = $region96
        $region95: #{tpu_custom_call.1} parent=91 // pred_region
          %s4634 = sand.u32 %s338, 1
          %s4635 = scalar_lea.sflag [#allocation4], %s4634
          %s4636 = sand.u32 %s338, 1
          %s4637 = scalar_lea.vmem [#allocation7], %s4636
          %4639 = dma.done %s4635, 16
        $region96: #{tpu_custom_call.1} parent=91 // pred_fallthru
          _
      $region92: #{tpu_custom_call.1} parent=5 // pred_fallthru
        _
    $region6: #{tpu_custom_call.1} parent=1 // loop_footer
      %s29 = sadd.s32 1, %s25
    $region7: #{tpu_custom_call.1} parent=1 // loop_footer_branch
      %24 = sbr.rel target = $region3
    $region8: #{tpu_custom_call.1} parent=1 // loop_exit
      _
    %4640 = vsyncpa [#allocation3], 1
    %s4641 = scalar_lea.sflag [#allocation3], 1
    %4642 = vsyncpa %s4641, 1
    %4643 = vsyncpa [#allocation6], 1
    %4644 = vsyncpa [#allocation4], 1
    %s4645 = scalar_lea.sflag [#allocation4], 1
    %4646 = vsyncpa %s4645, 1

</llo_original>
